<compile_context>
chip_gen: v6e
topology: v6e:2x2x1
jax: 0.10.0
libtpu: 0.0.40
codegen_flags: <defaults>
</compile_context>

<pallas_src>
import functools
import numpy as np

import jax
import jax.numpy as jnp
from jax.experimental import pallas as pl
from jax.experimental.pallas import tpu as pltpu


# ----------------------------------------------------------------------------
# Fused Bottleneck1D kernel: one grid step = TB flattened (T*N) batch elements
# ----------------------------------------------------------------------------
def _bottleneck1d_kernel(x_ref, w1_ref, b1_ref, w2_ref, b2_ref, w3_ref, b3_ref,
                         *rest,
                         K, stride, L, Lout, TB, width, Cout,
                         connect, has_down, pack_taps):
    if has_down:
        wd_ref, bd_ref, o_ref, s1_scr = rest
    else:
        o_ref, s1_scr = rest

    f32, bf16 = jnp.float32, jnp.bfloat16
    S = stride
    Q = Lout + (K - 1) // S            # scratch rows (position-groups of size S)
    Ptot = Q * S                       # padded positions held by the scratch
    Cin = x_ref.shape[-1]

    # ---- conv1 (1x1) + folded BN + IFNode spike -------------------------------
    # (L, TB, Cin) -> (L*TB, Cin): TB % 8 == 0 keeps this merge layout-free.
    x_val = x_ref[...]
    x2d = x_val.reshape(L * TB, Cin).astype(bf16)
    h1 = jnp.dot(x2d, w1_ref[...], preferred_element_type=f32) + b1_ref[...]
    s1 = jnp.where(h1 >= 1.0, 1.0, 0.0).astype(bf16)          # exact 0/1 -> lossless bf16
    s1 = s1.reshape(L, TB, width)

    # ---- stage zero-padded spikes for conv2 ------------------------------------
    # Scratch layout (Q, S, TB, width): padded position p lives at (p // S, p % S), so the
    # tap for kernel offset k is the CONTIGUOUS slice [k//S : k//S+Lout, k%S] (no strided ld,
    # no per-step iota masking; pad rows are written as zero slabs).
    n_int = min(L, Ptot - 1)                                   # interior rows actually used
    parts = [jnp.zeros((1, TB, width), bf16), s1[:n_int]]
    n_tail = Ptot - 1 - n_int
    if n_tail > 0:
        parts.append(jnp.zeros((n_tail, TB, width), bf16))
    s1_scr[...] = jnp.concatenate(parts, axis=0).reshape(Q, S, TB, width)

    def tap(k):                                                # (Lout, TB, width) bf16
        t = s1_scr[pl.ds(k // S, Lout), pl.ds(k % S, 1), :, :]
        return t.reshape(Lout, TB, width)

    # ---- conv2 (k=3, stride, pad=1) + folded BN + IFNode spike ------------------
    if pack_taps:
        # taps concatenated on the lane/contraction axis -> ONE MXU matmul
        x2 = jnp.concatenate([tap(k) for k in range(K)], axis=-1)
        h2 = jnp.dot(x2.reshape(Lout * TB, K * width), w2_ref[...],
                     preferred_element_type=f32)
    else:
        # width not lane-aligned: per-tap accumulating matmuls, same math
        h2 = jnp.zeros((Lout * TB, width), f32)
        for k in range(K):
            wk = w2_ref[pl.ds(k * width, width), :]
            h2 = h2 + jnp.dot(tap(k).reshape(Lout * TB, width), wk,
                              preferred_element_type=f32)
    h2 = h2 + b2_ref[...]
    s2 = jnp.where(h2 >= 1.0, 1.0, 0.0).astype(bf16)

    # ---- conv3 (1x1) + folded BN + IFNode spike ---------------------------------
    h3 = jnp.dot(s2, w3_ref[...], preferred_element_type=f32) + b3_ref[...]
    s3 = jnp.where(h3 >= 1.0, 1.0, 0.0)                        # f32

    # ---- identity / downsample (conv1x1(stride) + folded BN, no spike) ----------
    if has_down:
        if S == 1:
            xs = x2d                                           # Lout == L
        else:
            Lpad = Lout * S                                    # == ceil(L/S)*S >= L
            xr = x_val
            if Lpad > L:
                xr = jnp.concatenate(
                    [xr, jnp.zeros((Lpad - L, TB, Cin), xr.dtype)], axis=0)
            xs = xr.reshape(Lout, S, TB, Cin)[:, 0, :, :]       # rows 0, S, 2S, ...
            xs = xs.reshape(Lout * TB, Cin).astype(bf16)
        ident = jnp.dot(xs, wd_ref[...], preferred_element_type=f32) + bd_ref[...]
    else:
        ident = x_val.reshape(L * TB, Cout).astype(f32)         # stride == 1, Cin == Cout

    # ---- SEW element-wise connect -----------------------------------------------
    if connect == "ADD":
        out = s3 + ident
    elif connect == "AND":
        out = s3 * ident
    elif connect == "IAND":
        out = ident * (1.0 - s3)
    else:
        raise NotImplementedError(connect)
    o_ref[...] = out.reshape(Lout, TB, Cout).astype(o_ref.dtype)


# ----------------------------------------------------------------------------
# Wrapper working on the chained activation layout (L, B=T*N, C)
# ----------------------------------------------------------------------------
def bottleneck1d_apply(params, x_lbc, *, connect_f="ADD", block_batch=8):
    """One Bottleneck1D block on time-major channel-last activations (L, B, Cin) -> (Lout, B, Cout)."""
    L, B, Cin = x_lbc.shape
    stride = int(params["stride"])
    K, pad = 3, 1
    Lout = (L + 2 * pad - K) // stride + 1
    width = params["w1"].shape[1]
    Cout = params["w3"].shape[1]
    has_down = "wd" in params
    if not has_down:
        assert stride == 1 and Cin == Cout, "identity path needs matching shapes"
    pack_taps = (width % 128 == 0)     # lane-aligned tap concat -> single packed matmul

    # Batch tile: multiple of 8 so every (x, TB, C)->(x*TB, C) merge is layout-free and the
    # (.., Cout) stores are full sublane tiles. Sweep block_batch upward on 128 MiB v5e/v6e
    # (raising vmem_limit_bytes); keep the grid length even so both v7x TCs stay busy.
    TB = max(8, (block_batch // 8) * 8)
    Bp = ((B + TB - 1) // TB) * TB
    # bf16 input for downsample blocks (x only feeds bf16 matmuls there) halves input DMA;
    # keep f32 if bit-parity of near-threshold spikes vs an f32 reference matters.
    x = x_lbc.astype(jnp.bfloat16 if has_down else jnp.float32)
    if Bp != B:
        x = jnp.pad(x, ((0, 0), (0, Bp - B), (0, 0)))

    Q = Lout + (K - 1) // stride

    args = [x, params["w1"], params["b1"], params["w2"], params["b2"],
            params["w3"], params["b3"]]
    in_specs = [
        pl.BlockSpec((L, TB, Cin), lambda i: (0, i, 0)),
        # Constant index maps: weights/biases stay VMEM-resident across the batch grid
        # (Pallas elides the revisit DMA when the block index is unchanged).
        pl.BlockSpec((Cin, width), lambda i: (0, 0)),
        pl.BlockSpec((1, width), lambda i: (0, 0)),
        pl.BlockSpec((K * width, width), lambda i: (0, 0)),
        pl.BlockSpec((1, width), lambda i: (0, 0)),
        pl.BlockSpec((width, Cout), lambda i: (0, 0)),
        pl.BlockSpec((1, Cout), lambda i: (0, 0)),
    ]
    if has_down:
        args += [params["wd"], params["bd"]]
        in_specs += [pl.BlockSpec((Cin, Cout), lambda i: (0, 0)),
                     pl.BlockSpec((1, Cout), lambda i: (0, 0))]

    kern = functools.partial(
        _bottleneck1d_kernel, K=K, stride=stride, L=L, Lout=Lout, TB=TB,
        width=width, Cout=Cout, connect=connect_f, has_down=has_down,
        pack_taps=pack_taps)

    y = pl.pallas_call(
        kern,
        out_shape=jax.ShapeDtypeStruct((Lout, Bp, Cout), jnp.float32),
        grid=(Bp // TB,),
        in_specs=in_specs,
        out_specs=pl.BlockSpec((Lout, TB, Cout), lambda i: (0, i, 0)),
        scratch_shapes=[pltpu.VMEM((Q, stride, TB, width), jnp.bfloat16)],
        compiler_params=pltpu.CompilerParams(
            dimension_semantics=("parallel",),
            # <= 48 MiB leaves headroom on v7x's 64 MiB/TC; raise toward 64-100 MiB on the
            # 128 MiB v5e/v6e parts when growing block_batch / the L tile.
            vmem_limit_bytes=48 * 1024 * 1024),
    )(*args)
    # TODO(synk): for long sequences add an Lout-tile grid axis (multiple-of-128 tiles with a
    # 2-row halo on the spike scratch) instead of keeping the whole L resident per step.
    return y[:, :B, :] if Bp != B else y


# ----------------------------------------------------------------------------
# (T, N, C, L) <-> (L, T*N, C) layout helpers (do these ONCE at the network boundary)
# ----------------------------------------------------------------------------
def to_lbc(x_tncl):
    T, N, C, L = x_tncl.shape
    return jnp.transpose(x_tncl.reshape(T * N, C, L), (2, 0, 1))      # (L, B, C)


def from_lbc(y_lbc, T, N):
    L, B, C = y_lbc.shape
    return jnp.transpose(y_lbc, (1, 2, 0)).reshape(T, N, C, L)        # (T, N, C, L)


def bottleneck1d_forward(params, x_tncl, *, connect_f="ADD", block_batch=8):
    """Single-block convenience wrapper matching the PyTorch (T, N, C, L) layout.
    When chaining blocks, convert once with to_lbc/from_lbc instead (no per-block relayout)."""
    T, N, _, _ = x_tncl.shape
    y = bottleneck1d_apply(params, to_lbc(x_tncl), connect_f=connect_f,
                           block_batch=block_batch)
    return from_lbc(y, T, N)


# ----------------------------------------------------------------------------
# Deterministic parameter construction (shapes from Bottleneck1D.__init__),
# with eval-mode BatchNorm folded into the conv weights.
# ----------------------------------------------------------------------------
def build_bottleneck_params(key, inplanes, planes, *, stride=1, base_width=64,
                            groups=1, eps=1e-5):
    assert groups == 1, "groups > 1 not used in this configuration"
    # TODO(synk): dilation != 1 (conv3x3_1d padding=dilation) not implemented.
    width = int(planes * (base_width / 64.0)) * groups
    out_ch = planes * 4
    k1, k2, k3, kd = jax.random.split(key, 4)

    def conv_w(k, ksize, cin, cout):
        # kaiming-normal style (fan_out); stored as (K*Cin, Cout), tap-major rows,
        # so row index k*Cin + c corresponds to torch weight[o, c, k].
        std = float(np.sqrt(2.0 / (cout * ksize)))
        w = std * jax.random.normal(k, (ksize, cin, cout), jnp.float32)
        return w.reshape(ksize * cin, cout)

    def bn_fold(c):
        # eval-mode BatchNorm1d with default init / running stats
        gamma = jnp.ones((c,), jnp.float32)
        beta = jnp.zeros((c,), jnp.float32)
        mean = jnp.zeros((c,), jnp.float32)
        var = jnp.ones((c,), jnp.float32)
        scale = gamma * jax.lax.rsqrt(var + eps)
        bias = beta - mean * scale
        return scale, bias

    def fold(w_f32, c):
        scale, bias = bn_fold(c)
        return (w_f32 * scale[None, :]).astype(jnp.bfloat16), bias.reshape(1, c)

    w1, b1 = fold(conv_w(k1, 1, inplanes, width), width)
    w2, b2 = fold(conv_w(k2, 3, width, width), width)
    w3, b3 = fold(conv_w(k3, 1, width, out_ch), out_ch)
    p = {"stride": stride,
         "w1": w1, "b1": b1, "w2": w2, "b2": b2, "w3": w3, "b3": b3}
    if stride != 1 or inplanes != out_ch:
        wd, bd = fold(conv_w(kd, 1, inplanes, out_ch), out_ch)
        p["wd"] = wd
        p["bd"] = bd
    return p


# ----------------------------------------------------------------------------
if __name__ == "__main__":
    key = jax.random.PRNGKey(0)
    kp1, kp2, kx = jax.random.split(key, 3)

    T, N, L = 2, 8, 32                    # B = T*N = 16 -> grid of 2 steps with TB = 8
    inplanes, planes = 256, 128           # width = 128, output channels = 512

    # block 1: stride-2 block with downsample; block 2: identity block (like a ResNet layer)
    blk1 = build_bottleneck_params(kp1, inplanes, planes, stride=2)
    blk2 = build_bottleneck_params(kp2, planes * 4, planes, stride=1)

    x = jax.random.normal(kx, (T, N, inplanes, L), jnp.float32)

    # convert to the chained (L, B, C) layout ONCE, run both blocks, convert back once
    x_lbc = to_lbc(x)
    y_lbc = bottleneck1d_apply(blk1, x_lbc, connect_f="ADD")
    y_lbc = bottleneck1d_apply(blk2, y_lbc, connect_f="ADD")
    y = from_lbc(y_lbc, T, N)
    y = jax.block_until_ready(y)

    L1 = (L - 1) // 2 + 1
    assert y.shape == (T, N, planes * 4, L1), y.shape
    assert bool(jnp.all(jnp.isfinite(y)))
    print("KERNEL_OK")
</pallas_src>

<mosaic_0001>
module attributes {stable_mosaic.version = 11 : i64} {
  func.func @_bottleneck1d_kernel(%arg0: i32, %arg1: memref<32x8x256xbf16, #tpu.memory_space<vmem>>, %arg2: memref<256x128xbf16, #tpu.memory_space<vmem>>, %arg3: memref<1x128xf32, #tpu.memory_space<vmem>>, %arg4: memref<384x128xbf16, #tpu.memory_space<vmem>>, %arg5: memref<1x128xf32, #tpu.memory_space<vmem>>, %arg6: memref<128x512xbf16, #tpu.memory_space<vmem>>, %arg7: memref<1x512xf32, #tpu.memory_space<vmem>>, %arg8: memref<256x512xbf16, #tpu.memory_space<vmem>>, %arg9: memref<1x512xf32, #tpu.memory_space<vmem>>, %arg10: memref<16x8x512xf32, #tpu.memory_space<vmem>>, %arg11: memref<17x2x8x128xbf16, #tpu.memory_space<vmem>>) attributes {dimension_semantics = [#tpu.dimension_semantics<parallel>], iteration_bounds = array<i64: 2>, scalar_prefetch = 0 : i64, scratch_operands = 1 : i64, tpu.core_type = #tpu.core_type<tc>, window_params = [{transform_indices = @transform_0, window_bounds = array<i64: 32, 8, 256>}, {pipeline_mode = #tpu.pipeline_mode<synchronous>, transform_indices = @transform_1, window_bounds = array<i64: 256, 128>}, {pipeline_mode = #tpu.pipeline_mode<synchronous>, transform_indices = @transform_2, window_bounds = array<i64: 1, 128>}, {pipeline_mode = #tpu.pipeline_mode<synchronous>, transform_indices = @transform_3, window_bounds = array<i64: 384, 128>}, {pipeline_mode = #tpu.pipeline_mode<synchronous>, transform_indices = @transform_4, window_bounds = array<i64: 1, 128>}, {pipeline_mode = #tpu.pipeline_mode<synchronous>, transform_indices = @transform_5, window_bounds = array<i64: 128, 512>}, {pipeline_mode = #tpu.pipeline_mode<synchronous>, transform_indices = @transform_6, window_bounds = array<i64: 1, 512>}, {pipeline_mode = #tpu.pipeline_mode<synchronous>, transform_indices = @transform_7, window_bounds = array<i64: 256, 512>}, {pipeline_mode = #tpu.pipeline_mode<synchronous>, transform_indices = @transform_8, window_bounds = array<i64: 1, 512>}, {transform_indices = @transform_9, window_bounds = array<i64: 16, 8, 512>}]} {
    %c0 = arith.constant 0 : index
    %c0_0 = arith.constant 0 : index
    %c0_1 = arith.constant 0 : index
    %0 = vector.load %arg1[%c0, %c0_0, %c0_1] : memref<32x8x256xbf16, #tpu.memory_space<vmem>>, vector<32x8x256xbf16>
    %1 = vector.shape_cast %0 : vector<32x8x256xbf16> to vector<256x256xbf16>
    %c0_2 = arith.constant 0 : index
    %c0_3 = arith.constant 0 : index
    %2 = vector.load %arg2[%c0_2, %c0_3] : memref<256x128xbf16, #tpu.memory_space<vmem>>, vector<256x128xbf16>
    %cst = arith.constant dense<0.000000e+00> : vector<256x128xf32>
    %3 = tpu.matmul %1, %2, %cst {dimension_numbers = #tpu.dot_dimension_numbers<[1], [0], [0], [1], [0, 0, 1, 1], [], []>} : vector<256x256xbf16>, vector<256x128xbf16>, vector<256x128xf32> -> vector<256x128xf32>
    %c0_4 = arith.constant 0 : index
    %c0_5 = arith.constant 0 : index
    %4 = vector.load %arg3[%c0_4, %c0_5] : memref<1x128xf32, #tpu.memory_space<vmem>>, vector<1x128xf32>
    %5 = vector.broadcast %4 : vector<1x128xf32> to vector<256x128xf32>
    %6 = arith.addf %3, %5 : vector<256x128xf32>
    %cst_6 = arith.constant 1.000000e+00 : f32
    %7 = vector.broadcast %cst_6 : f32 to vector<256x128xf32>
    %8 = arith.cmpf oge, %6, %7 : vector<256x128xf32>
    %cst_7 = arith.constant 1.000000e+00 : f32
    %cst_8 = arith.constant 0.000000e+00 : f32
    %9 = vector.broadcast %cst_7 : f32 to vector<256x128xf32>
    %10 = vector.broadcast %cst_8 : f32 to vector<256x128xf32>
    %11 = arith.select %8, %9, %10 : vector<256x128xi1>, vector<256x128xf32>
    %12 = arith.truncf %11 : vector<256x128xf32> to vector<256x128xbf16>
    %13 = vector.shape_cast %12 : vector<256x128xbf16> to vector<32x8x128xbf16>
    %cst_9 = arith.constant 0.000000e+00 : bf16
    %14 = vector.broadcast %cst_9 : bf16 to vector<1x8x128xbf16>
    %cst_10 = arith.constant 0.000000e+00 : bf16
    %15 = vector.broadcast %cst_10 : bf16 to vector<1x8x128xbf16>
    %16 = tpu.concatenate %14, %13, %15 in 0 : vector<1x8x128xbf16>, vector<32x8x128xbf16>, vector<1x8x128xbf16> -> vector<34x8x128xbf16>
    %17 = vector.shape_cast %16 : vector<34x8x128xbf16> to vector<17x2x8x128xbf16>
    %c0_11 = arith.constant 0 : index
    %c0_12 = arith.constant 0 : index
    %c0_13 = arith.constant 0 : index
    %c0_14 = arith.constant 0 : index
    %18 = vector.load %arg11[%c0_11, %c0_12, %c0_13, %c0_14] : memref<17x2x8x128xbf16, #tpu.memory_space<vmem>>, vector<17x2x8x128xbf16>
    tpu.vector_store %arg11[%c0_11, %c0_12, %c0_13, %c0_14], %17 {strides = array<i32>} : memref<17x2x8x128xbf16, #tpu.memory_space<vmem>>, vector<17x2x8x128xbf16>,
    %c0_15 = arith.constant 0 : index
    %c0_16 = arith.constant 0 : index
    %c0_17 = arith.constant 0 : index
    %c0_18 = arith.constant 0 : index
    %19 = vector.load %arg11[%c0_15, %c0_16, %c0_17, %c0_18] : memref<17x2x8x128xbf16, #tpu.memory_space<vmem>>, vector<16x1x8x128xbf16>
    %20 = vector.shape_cast %19 : vector<16x1x8x128xbf16> to vector<16x8x128xbf16>
    %c0_19 = arith.constant 0 : index
    %c1 = arith.constant 1 : index
    %c0_20 = arith.constant 0 : index
    %c0_21 = arith.constant 0 : index
    %21 = vector.load %arg11[%c0_19, %c1, %c0_20, %c0_21] : memref<17x2x8x128xbf16, #tpu.memory_space<vmem>>, vector<16x1x8x128xbf16>
    %22 = vector.shape_cast %21 : vector<16x1x8x128xbf16> to vector<16x8x128xbf16>
    %c1_22 = arith.constant 1 : index
    %c0_23 = arith.constant 0 : index
    %c0_24 = arith.constant 0 : index
    %c0_25 = arith.constant 0 : index
    %23 = vector.load %arg11[%c1_22, %c0_23, %c0_24, %c0_25] : memref<17x2x8x128xbf16, #tpu.memory_space<vmem>>, vector<16x1x8x128xbf16>
    %24 = vector.shape_cast %23 : vector<16x1x8x128xbf16> to vector<16x8x128xbf16>
    %25 = tpu.concatenate %20, %22, %24 in 2 : vector<16x8x128xbf16>, vector<16x8x128xbf16>, vector<16x8x128xbf16> -> vector<16x8x384xbf16>
    %26 = vector.shape_cast %25 : vector<16x8x384xbf16> to vector<128x384xbf16>
    %c0_26 = arith.constant 0 : index
    %c0_27 = arith.constant 0 : index
    %27 = vector.load %arg4[%c0_26, %c0_27] : memref<384x128xbf16, #tpu.memory_space<vmem>>, vector<384x128xbf16>
    %cst_28 = arith.constant dense<0.000000e+00> : vector<128x128xf32>
    %28 = tpu.matmul %26, %27, %cst_28 {dimension_numbers = #tpu.dot_dimension_numbers<[1], [0], [0], [1], [0, 0, 1, 1], [], []>} : vector<128x384xbf16>, vector<384x128xbf16>, vector<128x128xf32> -> vector<128x128xf32>
    %c0_29 = arith.constant 0 : index
    %c0_30 = arith.constant 0 : index
    %29 = vector.load %arg5[%c0_29, %c0_30] : memref<1x128xf32, #tpu.memory_space<vmem>>, vector<1x128xf32>
    %30 = vector.broadcast %29 : vector<1x128xf32> to vector<128x128xf32>
    %31 = arith.addf %28, %30 : vector<128x128xf32>
    %cst_31 = arith.constant 1.000000e+00 : f32
    %32 = vector.broadcast %cst_31 : f32 to vector<128x128xf32>
    %33 = arith.cmpf oge, %31, %32 : vector<128x128xf32>
    %cst_32 = arith.constant 1.000000e+00 : f32
    %cst_33 = arith.constant 0.000000e+00 : f32
    %34 = vector.broadcast %cst_32 : f32 to vector<128x128xf32>
    %35 = vector.broadcast %cst_33 : f32 to vector<128x128xf32>
    %36 = arith.select %33, %34, %35 : vector<128x128xi1>, vector<128x128xf32>
    %37 = arith.truncf %36 : vector<128x128xf32> to vector<128x128xbf16>
    %c0_34 = arith.constant 0 : index
    %c0_35 = arith.constant 0 : index
    %38 = vector.load %arg6[%c0_34, %c0_35] : memref<128x512xbf16, #tpu.memory_space<vmem>>, vector<128x512xbf16>
    %cst_36 = arith.constant dense<0.000000e+00> : vector<128x512xf32>
    %39 = tpu.matmul %37, %38, %cst_36 {dimension_numbers = #tpu.dot_dimension_numbers<[1], [0], [0], [1], [0, 0, 1, 1], [], []>} : vector<128x128xbf16>, vector<128x512xbf16>, vector<128x512xf32> -> vector<128x512xf32>
    %c0_37 = arith.constant 0 : index
    %c0_38 = arith.constant 0 : index
    %40 = vector.load %arg7[%c0_37, %c0_38] : memref<1x512xf32, #tpu.memory_space<vmem>>, vector<1x512xf32>
    %41 = vector.broadcast %40 : vector<1x512xf32> to vector<128x512xf32>
    %42 = arith.addf %39, %41 : vector<128x512xf32>
    %cst_39 = arith.constant 1.000000e+00 : f32
    %43 = vector.broadcast %cst_39 : f32 to vector<128x512xf32>
    %44 = arith.cmpf oge, %42, %43 : vector<128x512xf32>
    %cst_40 = arith.constant 1.000000e+00 : f32
    %cst_41 = arith.constant 0.000000e+00 : f32
    %45 = vector.broadcast %cst_40 : f32 to vector<128x512xf32>
    %46 = vector.broadcast %cst_41 : f32 to vector<128x512xf32>
    %47 = arith.select %44, %45, %46 : vector<128x512xi1>, vector<128x512xf32>
    %48 = vector.shape_cast %0 : vector<32x8x256xbf16> to vector<16x2x8x256xbf16>
    %49 = vector.extract_strided_slice %48 {offsets = [0, 0, 0, 0], sizes = [16, 1, 8, 256], strides = [1, 1, 1, 1]} : vector<16x2x8x256xbf16> to vector<16x1x8x256xbf16>
    %50 = vector.shape_cast %49 : vector<16x1x8x256xbf16> to vector<16x8x256xbf16>
    %51 = vector.shape_cast %50 : vector<16x8x256xbf16> to vector<128x256xbf16>
    %c0_42 = arith.constant 0 : index
    %c0_43 = arith.constant 0 : index
    %52 = vector.load %arg8[%c0_42, %c0_43] : memref<256x512xbf16, #tpu.memory_space<vmem>>, vector<256x512xbf16>
    %cst_44 = arith.constant dense<0.000000e+00> : vector<128x512xf32>
    %53 = tpu.matmul %51, %52, %cst_44 {dimension_numbers = #tpu.dot_dimension_numbers<[1], [0], [0], [1], [0, 0, 1, 1], [], []>} : vector<128x256xbf16>, vector<256x512xbf16>, vector<128x512xf32> -> vector<128x512xf32>
    %c0_45 = arith.constant 0 : index
    %c0_46 = arith.constant 0 : index
    %54 = vector.load %arg9[%c0_45, %c0_46] : memref<1x512xf32, #tpu.memory_space<vmem>>, vector<1x512xf32>
    %55 = vector.broadcast %54 : vector<1x512xf32> to vector<128x512xf32>
    %56 = arith.addf %53, %55 : vector<128x512xf32>
    %57 = arith.addf %47, %56 : vector<128x512xf32>
    %58 = vector.shape_cast %57 : vector<128x512xf32> to vector<16x8x512xf32>
    %c0_47 = arith.constant 0 : index
    %c0_48 = arith.constant 0 : index
    %c0_49 = arith.constant 0 : index
    %59 = vector.load %arg10[%c0_47, %c0_48, %c0_49] : memref<16x8x512xf32, #tpu.memory_space<vmem>>, vector<16x8x512xf32>
    tpu.vector_store %arg10[%c0_47, %c0_48, %c0_49], %58 {strides = array<i32>} : memref<16x8x512xf32, #tpu.memory_space<vmem>>, vector<16x8x512xf32>,
    return
  }
  func.func @transform_0(%arg0: i32) -> (i32, i32, i32) {
    %c0_i32 = arith.constant 0 : i32
    %c0_i32_0 = arith.constant 0 : i32
    %c0_i32_1 = arith.constant 0 : i32
    return %c0_i32, %arg0, %c0_i32_0 : i32, i32, i32
  }
  func.func @transform_1(%arg0: i32) -> (i32, i32) {
    %c0_i32 = arith.constant 0 : i32
    %c0_i32_0 = arith.constant 0 : i32
    %c0_i32_1 = arith.constant 0 : i32
    return %c0_i32, %c0_i32_0 : i32, i32
  }
  func.func @transform_2(%arg0: i32) -> (i32, i32) {
    %c0_i32 = arith.constant 0 : i32
    %c0_i32_0 = arith.constant 0 : i32
    %c0_i32_1 = arith.constant 0 : i32
    return %c0_i32, %c0_i32_0 : i32, i32
  }
  func.func @transform_3(%arg0: i32) -> (i32, i32) {
    %c0_i32 = arith.constant 0 : i32
    %c0_i32_0 = arith.constant 0 : i32
    %c0_i32_1 = arith.constant 0 : i32
    return %c0_i32, %c0_i32_0 : i32, i32
  }
  func.func @transform_4(%arg0: i32) -> (i32, i32) {
    %c0_i32 = arith.constant 0 : i32
    %c0_i32_0 = arith.constant 0 : i32
    %c0_i32_1 = arith.constant 0 : i32
    return %c0_i32, %c0_i32_0 : i32, i32
  }
  func.func @transform_5(%arg0: i32) -> (i32, i32) {
    %c0_i32 = arith.constant 0 : i32
    %c0_i32_0 = arith.constant 0 : i32
    %c0_i32_1 = arith.constant 0 : i32
    return %c0_i32, %c0_i32_0 : i32, i32
  }
  func.func @transform_6(%arg0: i32) -> (i32, i32) {
    %c0_i32 = arith.constant 0 : i32
    %c0_i32_0 = arith.constant 0 : i32
    %c0_i32_1 = arith.constant 0 : i32
    return %c0_i32, %c0_i32_0 : i32, i32
  }
  func.func @transform_7(%arg0: i32) -> (i32, i32) {
    %c0_i32 = arith.constant 0 : i32
    %c0_i32_0 = arith.constant 0 : i32
    %c0_i32_1 = arith.constant 0 : i32
    return %c0_i32, %c0_i32_0 : i32, i32
  }
  func.func @transform_8(%arg0: i32) -> (i32, i32) {
    %c0_i32 = arith.constant 0 : i32
    %c0_i32_0 = arith.constant 0 : i32
    %c0_i32_1 = arith.constant 0 : i32
    return %c0_i32, %c0_i32_0 : i32, i32
  }
  func.func @transform_9(%arg0: i32) -> (i32, i32, i32) {
    %c0_i32 = arith.constant 0 : i32
    %c0_i32_0 = arith.constant 0 : i32
    %c0_i32_1 = arith.constant 0 : i32
    return %c0_i32, %arg0, %c0_i32_0 : i32, i32, i32
  }
}

</mosaic_0001>

<llo_original>
// kernel: tpu_custom_call.1
$region0: #{tpu_custom_call.1}
  #allocation0 [shape = 'u32[]', space=smem, size = 0x4, offset = 0x4, fixed_abs, tag = 'smem constant byte address 0x4 - core index']
  #allocation1 [shape = 'u32[144,128]{1,0:T(1,128)}', space=vmem, size = 0x12000, scoped, tag = 'internal scratch']
  #allocation2 [shape = 'bf16[17,2,8,128]{3,2,1,0:T(8,128)(2,1)}', space=vmem, size = 0x11000, scoped, tag = 'scratch operand']
  %s0 = inlined_call_operand.hbm [shape: bf16[32,16,256], index: 0, kind: input, shape index: {}]
  %s1 = inlined_call_operand.hbm [shape: bf16[256,128], index: 1, kind: input, shape index: {}]
  %s2 = inlined_call_operand.vmem [shape: f32[1,128], index: 2, kind: input, shape index: {}]
  %s3 = inlined_call_operand.hbm [shape: bf16[384,128], index: 3, kind: input, shape index: {}]
  %s4 = inlined_call_operand.hbm [shape: f32[1,128], index: 4, kind: input, shape index: {}]
  %s5 = inlined_call_operand.hbm [shape: bf16[128,512], index: 5, kind: input, shape index: {}]
  %s6 = inlined_call_operand.vmem [shape: f32[1,512], index: 6, kind: input, shape index: {}]
  %s7 = inlined_call_operand.hbm [shape: bf16[256,512], index: 7, kind: input, shape index: {}]
  %s8 = inlined_call_operand.vmem [shape: f32[1,512], index: 8, kind: input, shape index: {}]
  %s9 = inlined_call_operand.hbm [shape: f32[16,16,512], index: 9, kind: output, shape index: {}]
  %s10 = sld [smem:[#allocation0]]
  $region93: #{tpu_custom_call.1} parent=0
    _
  %s12 = ssub.s32 1, %s10
  %s13 = scalar_select 0, %s12, %s10
  $region1: #{tpu_custom_call.1} parent=0
    #allocation3 [shape = 'u8[262144]{0}', space=vmem, size = 0x40000, scoped, tag = 'input window, operand 0']
    #allocation4 [shape = 's32[2]{0}', space=sflag, size = 0x8, scoped, tag = 'scoped memory for tpu_custom_call.1']
    #allocation5 [shape = 's32[2]{0}', space=sflag, size = 0x8, scoped, tag = 'scoped memory for tpu_custom_call.1']
    #allocation6 [shape = 'u8[65536]{0}', space=vmem, size = 0x10000, scoped, tag = 'input window, operand 1, single buffered']
    #allocation7 [shape = 's32[1]{0}', space=sflag, size = 0x4, scoped, tag = 'scoped memory for tpu_custom_call.1']
    #allocation8 [shape = 'u8[98304]{0}', space=vmem, size = 0x18000, scoped, tag = 'input window, operand 3, single buffered']
    #allocation9 [shape = 'u8[512]{0}', space=vmem, size = 0x400, scoped, tag = 'input window, operand 4, single buffered']
    #allocation10 [shape = 's32[1]{0}', space=sflag, size = 0x4, scoped, tag = 'scoped memory for tpu_custom_call.1']
    #allocation11 [shape = 'u8[131072]{0}', space=vmem, size = 0x20000, scoped, tag = 'input window, operand 5, single buffered']
    #allocation12 [shape = 'u8[262144]{0}', space=vmem, size = 0x40000, scoped, tag = 'input window, operand 7, single buffered']
    #allocation13 [shape = 's32[1]{0}', space=sflag, size = 0x4, scoped, tag = 'scoped memory for tpu_custom_call.1']
    #allocation14 [shape = 'u8[524288]{0}', space=vmem, size = 0x80000, scoped, tag = 'output window, operand 0']
    %14 = vsyncpa [#allocation4], 0
    %s15 = scalar_lea.sflag [#allocation4], 1
    %16 = vsyncpa %s15, 0
    %17 = vsyncpa [#allocation7], 0
    %18 = vsyncpa [#allocation10], 0
    %19 = vsyncpa [#allocation13], 0
    %20 = vsyncpa [#allocation5], 0
    %s21 = scalar_lea.sflag [#allocation5], 1
    %22 = vsyncpa %s21, 0
    loop: start=0, step=1, limit=4
    $region2: #{tpu_custom_call.1} parent=1 // loop_pre_header
      _
    $region3: #{tpu_custom_call.1} parent=1 // loop_header
      %s24 = sphi 0, %s28
      %p25 = scmp.ge.s32.totalorder %s24, 4
      %s34 = sphi 0, %s36
      %s37 = sphi 0, %s34
      %s38 = sphi 0, %s37
      %s54 = sphi 0, %s38
      %s58 = sphi 0, %s58
      %s60 = sphi 0, %s58
      %s61 = sphi 0, %s60
      %s75 = sphi 0, %s61
      %s79 = sphi 0, %s79
      %s81 = sphi 0, %s79
      %s82 = sphi 0, %s81
      %s96 = sphi 0, %s82
      %s100 = sphi 0, %s100
      %s102 = sphi 0, %s100
      %s103 = sphi 0, %s102
      %s117 = sphi 0, %s103
      %s121 = sphi 0, %s121
      %s123 = sphi 0, %s121
      %s124 = sphi 0, %s123
      %s138 = sphi 0, %s124
      %s142 = sphi 0, %s142
      %s144 = sphi 0, %s142
      %s145 = sphi 0, %s144
      %s159 = sphi 0, %s145
      %s163 = sphi 0, %s163
      %s165 = sphi 0, %s163
      %s166 = sphi 0, %s165
      %s180 = sphi 0, %s166
      %s184 = sphi 0, %s184
      %s186 = sphi 0, %s184
      %s187 = sphi 0, %s186
      %s201 = sphi 0, %s187
      %s205 = sphi 0, %s205
      %s207 = sphi 0, %s205
      %s208 = sphi 0, %s207
      %s222 = sphi 0, %s208
      %s228 = sphi 0, %s230
      %s231 = sphi 0, %s228
      %s232 = sphi 0, %s231
      %s248 = sphi 0, %s232
    $region4: #{tpu_custom_call.1} parent=1 // loop_header_branch
      %27 = sbr.rel (%p25) target = $region8
    $region5: #{tpu_custom_call.1} parent=1 // loop_body
      %s29 = ssub.s32 %s24, 1
      %s30 = ssub.s32 %s24, 2
      %s31 = sadd.s32 %s24, 1
      %s32 = ssub.s32 %s24, %s31
      %p33 = scmp.eq.s32.totalorder %s32, 0
      %s35 = sadd.s32 %s34, 1
      %s36 = scalar_select %p33, %s34, %s35
      %p39 = pneg %p33
      %p40 = scmp.eq.s32.totalorder %s24, 1
      %p41 = por %p39, %p40
      %p42 = scmp.ne.s32.totalorder %s34, %s37
      %p43 = scmp.eq.s32.totalorder %s24, 0
      %p44 = por %p42, %p43
      %p45 = scmp.ne.s32.totalorder %s34, %s37
      %p46 = scmp.eq.s32.totalorder %s29, 1
      %p47 = por %p45, %p46
      %p48 = scmp.ne.s32.totalorder %s37, %s38
      %p49 = scmp.eq.s32.totalorder %s29, 0
      %p50 = por %p48, %p49
      %p51 = scmp.ne.s32.totalorder %s37, %s38
      %p52 = scmp.eq.s32.totalorder %s30, 1
      %p53 = por %p51, %p52
      %p55 = scmp.ne.s32.totalorder %s38, %s54
      %p56 = scmp.eq.s32.totalorder %s30, 0
      %p57 = por %p55, %p56
      %s59 = sadd.s32 %s58, 1
      %p62 = scmp.eq.s32.totalorder %s24, 1
      %p63 = scmp.ne.s32.totalorder %s58, %s60
      %p64 = scmp.eq.s32.totalorder %s24, 0
      %p65 = por %p63, %p64
      %p66 = scmp.ne.s32.totalorder %s58, %s60
      %p67 = scmp.eq.s32.totalorder %s29, 1
      %p68 = por %p66, %p67
      %p69 = scmp.ne.s32.totalorder %s60, %s61
      %p70 = scmp.eq.s32.totalorder %s29, 0
      %p71 = por %p69, %p70
      %p72 = scmp.ne.s32.totalorder %s60, %s61
      %p73 = scmp.eq.s32.totalorder %s30, 1
      %p74 = por %p72, %p73
      %p76 = scmp.ne.s32.totalorder %s61, %s75
      %p77 = scmp.eq.s32.totalorder %s30, 0
      %p78 = por %p76, %p77
      %s80 = sadd.s32 %s79, 1
      %p83 = scmp.eq.s32.totalorder %s24, 1
      %p84 = scmp.ne.s32.totalorder %s79, %s81
      %p85 = scmp.eq.s32.totalorder %s24, 0
      %p86 = por %p84, %p85
      %p87 = scmp.ne.s32.totalorder %s79, %s81
      %p88 = scmp.eq.s32.totalorder %s29, 1
      %p89 = por %p87, %p88
      %p90 = scmp.ne.s32.totalorder %s81, %s82
      %p91 = scmp.eq.s32.totalorder %s29, 0
      %p92 = por %p90, %p91
      %p93 = scmp.ne.s32.totalorder %s81, %s82
      %p94 = scmp.eq.s32.totalorder %s30, 1
      %p95 = por %p93, %p94
      %p97 = scmp.ne.s32.totalorder %s82, %s96
      %p98 = scmp.eq.s32.totalorder %s30, 0
      %p99 = por %p97, %p98
      %s101 = sadd.s32 %s100, 1
      %p104 = scmp.eq.s32.totalorder %s24, 1
      %p105 = scmp.ne.s32.totalorder %s100, %s102
      %p106 = scmp.eq.s32.totalorder %s24, 0
      %p107 = por %p105, %p106
      %p108 = scmp.ne.s32.totalorder %s100, %s102
      %p109 = scmp.eq.s32.totalorder %s29, 1
      %p110 = por %p108, %p109
      %p111 = scmp.ne.s32.totalorder %s102, %s103
      %p112 = scmp.eq.s32.totalorder %s29, 0
      %p113 = por %p111, %p112
      %p114 = scmp.ne.s32.totalorder %s102, %s103
      %p115 = scmp.eq.s32.totalorder %s30, 1
      %p116 = por %p114, %p115
      %p118 = scmp.ne.s32.totalorder %s103, %s117
      %p119 = scmp.eq.s32.totalorder %s30, 0
      %p120 = por %p118, %p119
      %s122 = sadd.s32 %s121, 1
      %p125 = scmp.eq.s32.totalorder %s24, 1
      %p126 = scmp.ne.s32.totalorder %s121, %s123
      %p127 = scmp.eq.s32.totalorder %s24, 0
      %p128 = por %p126, %p127
      %p129 = scmp.ne.s32.totalorder %s121, %s123
      %p130 = scmp.eq.s32.totalorder %s29, 1
      %p131 = por %p129, %p130
      %p132 = scmp.ne.s32.totalorder %s123, %s124
      %p133 = scmp.eq.s32.totalorder %s29, 0
      %p134 = por %p132, %p133
      %p135 = scmp.ne.s32.totalorder %s123, %s124
      %p136 = scmp.eq.s32.totalorder %s30, 1
      %p137 = por %p135, %p136
      %p139 = scmp.ne.s32.totalorder %s124, %s138
      %p140 = scmp.eq.s32.totalorder %s30, 0
      %p141 = por %p139, %p140
      %s143 = sadd.s32 %s142, 1
      %p146 = scmp.eq.s32.totalorder %s24, 1
      %p147 = scmp.ne.s32.totalorder %s142, %s144
      %p148 = scmp.eq.s32.totalorder %s24, 0
      %p149 = por %p147, %p148
      %p150 = scmp.ne.s32.totalorder %s142, %s144
      %p151 = scmp.eq.s32.totalorder %s29, 1
      %p152 = por %p150, %p151
      %p153 = scmp.ne.s32.totalorder %s144, %s145
      %p154 = scmp.eq.s32.totalorder %s29, 0
      %p155 = por %p153, %p154
      %p156 = scmp.ne.s32.totalorder %s144, %s145
      %p157 = scmp.eq.s32.totalorder %s30, 1
      %p158 = por %p156, %p157
      %p160 = scmp.ne.s32.totalorder %s145, %s159
      %p161 = scmp.eq.s32.totalorder %s30, 0
      %p162 = por %p160, %p161
      %s164 = sadd.s32 %s163, 1
      %p167 = scmp.eq.s32.totalorder %s24, 1
      %p168 = scmp.ne.s32.totalorder %s163, %s165
      %p169 = scmp.eq.s32.totalorder %s24, 0
      %p170 = por %p168, %p169
      %p171 = scmp.ne.s32.totalorder %s163, %s165
      %p172 = scmp.eq.s32.totalorder %s29, 1
      %p173 = por %p171, %p172
      %p174 = scmp.ne.s32.totalorder %s165, %s166
      %p175 = scmp.eq.s32.totalorder %s29, 0
      %p176 = por %p174, %p175
      %p177 = scmp.ne.s32.totalorder %s165, %s166
      %p178 = scmp.eq.s32.totalorder %s30, 1
      %p179 = por %p177, %p178
      %p181 = scmp.ne.s32.totalorder %s166, %s180
      %p182 = scmp.eq.s32.totalorder %s30, 0
      %p183 = por %p181, %p182
      %s185 = sadd.s32 %s184, 1
      %p188 = scmp.eq.s32.totalorder %s24, 1
      %p189 = scmp.ne.s32.totalorder %s184, %s186
      %p190 = scmp.eq.s32.totalorder %s24, 0
      %p191 = por %p189, %p190
      %p192 = scmp.ne.s32.totalorder %s184, %s186
      %p193 = scmp.eq.s32.totalorder %s29, 1
      %p194 = por %p192, %p193
      %p195 = scmp.ne.s32.totalorder %s186, %s187
      %p196 = scmp.eq.s32.totalorder %s29, 0
      %p197 = por %p195, %p196
      %p198 = scmp.ne.s32.totalorder %s186, %s187
      %p199 = scmp.eq.s32.totalorder %s30, 1
      %p200 = por %p198, %p199
      %p202 = scmp.ne.s32.totalorder %s187, %s201
      %p203 = scmp.eq.s32.totalorder %s30, 0
      %p204 = por %p202, %p203
      %s206 = sadd.s32 %s205, 1
      %p209 = scmp.eq.s32.totalorder %s24, 1
      %p210 = scmp.ne.s32.totalorder %s205, %s207
      %p211 = scmp.eq.s32.totalorder %s24, 0
      %p212 = por %p210, %p211
      %p213 = scmp.ne.s32.totalorder %s205, %s207
      %p214 = scmp.eq.s32.totalorder %s29, 1
      %p215 = por %p213, %p214
      %p216 = scmp.ne.s32.totalorder %s207, %s208
      %p217 = scmp.eq.s32.totalorder %s29, 0
      %p218 = por %p216, %p217
      %p219 = scmp.ne.s32.totalorder %s207, %s208
      %p220 = scmp.eq.s32.totalorder %s30, 1
      %p221 = por %p219, %p220
      %p223 = scmp.ne.s32.totalorder %s208, %s222
      %p224 = scmp.eq.s32.totalorder %s30, 0
      %p225 = por %p223, %p224
      %s226 = ssub.s32 %s24, %s31
      %p227 = scmp.eq.s32.totalorder %s226, 0
      %s229 = sadd.s32 %s228, 1
      %s230 = scalar_select %p227, %s228, %s229
      %p233 = pneg %p227
      %p234 = scmp.eq.s32.totalorder %s24, 1
      %p235 = por %p233, %p234
      %p236 = scmp.ne.s32.totalorder %s228, %s231
      %p237 = scmp.eq.s32.totalorder %s24, 0
      %p238 = por %p236, %p237
      %p239 = scmp.ne.s32.totalorder %s228, %s231
      %p240 = scmp.eq.s32.totalorder %s29, 1
      %p241 = por %p239, %p240
      %p242 = scmp.ne.s32.totalorder %s231, %s232
      %p243 = scmp.eq.s32.totalorder %s29, 0
      %p244 = por %p242, %p243
      %p245 = scmp.ne.s32.totalorder %s231, %s232
      %p246 = scmp.eq.s32.totalorder %s30, 1
      %p247 = por %p245, %p246
      %p249 = scmp.ne.s32.totalorder %s232, %s248
      %p250 = scmp.eq.s32.totalorder %s30, 0
      %p251 = por %p249, %p250
      %p252 = scmp.le.s32.totalorder 1, %s24
      %p253 = scmp.lt.s32.totalorder %s24, 3
      %p254 = pnand %p252, %p253
      %p255 = pneg %p254
      // Predicated region
      $region9: #{tpu_custom_call.1} parent=5 // pred_check
        _
      $region10: #{tpu_custom_call.1} parent=5 // pred_check_branch
        %257 = sbr.rel (%p254) target = $region12
      $region11: #{tpu_custom_call.1} parent=5 // pred_region
        %s258 = ssub.s32 %s24, 1
        // Predicated region
        $region13: #{tpu_custom_call.1} parent=11 // pred_check
          %p259 = pneg %p71
        $region14: #{tpu_custom_call.1} parent=11 // pred_check_branch
          %261 = sbr.rel (%p259) target = $region16
        $region15: #{tpu_custom_call.1} parent=11 // pred_region
          %s263 = ssub.s32 2048, 2048
          %264 = vsyncadd [#allocation7], %s263
          %s265 = sshll.u32 [#allocation6], 4
          %s266 = int_to_ptr.vmem [resolvable:$true] %s265
          %271 = dma.hbm_to_vmem [thread:$0]  %s1, 2048, %s266, [#allocation7], 64, 64, 4
        $region16: #{tpu_custom_call.1} parent=11 // pred_fallthru
          _
        // Predicated region
        $region17: #{tpu_custom_call.1} parent=11 // pred_check
          %p272 = pneg %p92
        $region18: #{tpu_custom_call.1} parent=11 // pred_check_branch
          %274 = sbr.rel (%p272) target = $region20
        $region19: #{tpu_custom_call.1} parent=11 // pred_region
          _
        $region20: #{tpu_custom_call.1} parent=11 // pred_fallthru
          _
        // Predicated region
        $region21: #{tpu_custom_call.1} parent=11 // pred_check
          %p275 = pneg %p113
        $region22: #{tpu_custom_call.1} parent=11 // pred_check_branch
          %277 = sbr.rel (%p275) target = $region24
        $region23: #{tpu_custom_call.1} parent=11 // pred_region
          %s279 = ssub.s32 3072, 3072
          %280 = vsyncadd [#allocation7], %s279
          %s281 = sshll.u32 [#allocation8], 4
          %s282 = int_to_ptr.vmem [resolvable:$true] %s281
          %287 = dma.hbm_to_vmem [thread:$0]  %s3, 3072, %s282, [#allocation7], 64, 64, 4
        $region24: #{tpu_custom_call.1} parent=11 // pred_fallthru
          _
        // Predicated region
        $region25: #{tpu_custom_call.1} parent=11 // pred_check
          %p288 = pneg %p134
        $region26: #{tpu_custom_call.1} parent=11 // pred_check_branch
          %290 = sbr.rel (%p288) target = $region28
        $region27: #{tpu_custom_call.1} parent=11 // pred_region
          %s292 = ssub.s32 16, 16
          %293 = vsyncadd [#allocation10], %s292
          %s295 = sshll.u32 [#allocation9], 4
          %s296 = int_to_ptr.vmem [resolvable:$true] %s295
          %298 = dma.hbm_to_vmem [thread:$0]  %s4, 16, %s296, [#allocation10]
        $region28: #{tpu_custom_call.1} parent=11 // pred_fallthru
          _
        // Predicated region
        $region29: #{tpu_custom_call.1} parent=11 // pred_check
          %p299 = pneg %p155
        $region30: #{tpu_custom_call.1} parent=11 // pred_check_branch
          %301 = sbr.rel (%p299) target = $region32
        $region31: #{tpu_custom_call.1} parent=11 // pred_region
          %s303 = ssub.s32 4096, 4096
          %304 = vsyncadd [#allocation10], %s303
          %s305 = sshll.u32 [#allocation11], 4
          %s306 = int_to_ptr.vmem [resolvable:$true] %s305
          %311 = dma.hbm_to_vmem [thread:$0]  %s5, 4096, %s306, [#allocation10], 256, 256, 16
        $region32: #{tpu_custom_call.1} parent=11 // pred_fallthru
          _
        // Predicated region
        $region33: #{tpu_custom_call.1} parent=11 // pred_check
          %p312 = pneg %p176
        $region34: #{tpu_custom_call.1} parent=11 // pred_check_branch
          %314 = sbr.rel (%p312) target = $region36
        $region35: #{tpu_custom_call.1} parent=11 // pred_region
          _
        $region36: #{tpu_custom_call.1} parent=11 // pred_fallthru
          _
        // Predicated region
        $region37: #{tpu_custom_call.1} parent=11 // pred_check
          %p315 = pneg %p197
        $region38: #{tpu_custom_call.1} parent=11 // pred_check_branch
          %317 = sbr.rel (%p315) target = $region40
        $region39: #{tpu_custom_call.1} parent=11 // pred_region
          %s319 = ssub.s32 8192, 8192
          %320 = vsyncadd [#allocation13], %s319
          %s321 = sshll.u32 [#allocation12], 4
          %s322 = int_to_ptr.vmem [resolvable:$true] %s321
          %327 = dma.hbm_to_vmem [thread:$0]  %s7, 8192, %s322, [#allocation13], 256, 256, 16
        $region40: #{tpu_custom_call.1} parent=11 // pred_fallthru
          _
        // Predicated region
        $region41: #{tpu_custom_call.1} parent=11 // pred_check
          %p328 = pneg %p218
        $region42: #{tpu_custom_call.1} parent=11 // pred_check_branch
          %330 = sbr.rel (%p328) target = $region44
        $region43: #{tpu_custom_call.1} parent=11 // pred_region
          _
        $region44: #{tpu_custom_call.1} parent=11 // pred_fallthru
          _
      $region12: #{tpu_custom_call.1} parent=5 // pred_fallthru
        _
      %p331 = scmp.lt.s32.totalorder %s24, 2
      // Predicated region
      $region45: #{tpu_custom_call.1} parent=5 // pred_check
        %p332 = pneg %p331
      $region46: #{tpu_custom_call.1} parent=5 // pred_check_branch
        %334 = sbr.rel (%p332) target = $region48
      $region47: #{tpu_custom_call.1} parent=5 // pred_region
        // Predicated region
        $region49: #{tpu_custom_call.1} parent=47 // pred_check
          %p335 = pneg %p44
        $region50: #{tpu_custom_call.1} parent=47 // pred_check_branch
          %337 = sbr.rel (%p335) target = $region52
        $region51: #{tpu_custom_call.1} parent=47 // pred_region
          %s338 = sand.u32 %s34, 1
          %s339 = scalar_lea.sflag [#allocation4], %s338
          %s340 = sand.u32 %s34, 1
          %s341 = smul.addr %s340, 256
          %s342 = scalar_lea.vmem [#allocation3], %s341
          %s344 = ssub.s32 4096, 4096
          %345 = vsyncadd %s339, %s344
          %s346 = smul.addr %s24, 2
          %s347 = smul.addr %s346, 64
          %s348 = scalar_lea.hbm %s0, %s347
          %s349 = sshll.u32 %s342, 4
          %s350 = int_to_ptr.vmem [resolvable:$true] %s349
          %355 = dma.hbm_to_vmem [thread:$0]  %s348, 4096, %s350, %s339, 256, 128, 8
        $region52: #{tpu_custom_call.1} parent=47 // pred_fallthru
          _
      $region48: #{tpu_custom_call.1} parent=5 // pred_fallthru
        _
      %p356 = scmp.le.s32.totalorder 1, %s24
      %p357 = scmp.lt.s32.totalorder %s24, 3
      %p358 = pnand %p356, %p357
      %p359 = pneg %p358
      // Predicated region
      $region53: #{tpu_custom_call.1} parent=5 // pred_check
        _
      $region54: #{tpu_custom_call.1} parent=5 // pred_check_branch
        %361 = sbr.rel (%p358) target = $region56
      $region55: #{tpu_custom_call.1} parent=5 // pred_region
        %s362 = ssub.s32 %s24, 1
        %s363 = sand.u32 %s37, 1
        %s364 = scalar_lea.sflag [#allocation4], %s363
        %s365 = sand.u32 %s37, 1
        %s366 = smul.addr %s365, 256
        %s367 = scalar_lea.vmem [#allocation3], %s366
        // Predicated region
        $region57: #{tpu_custom_call.1} parent=55 // pred_check
          %p368 = pneg %p50
        $region58: #{tpu_custom_call.1} parent=55 // pred_check_branch
          %370 = sbr.rel (%p368) target = $region60
        $region59: #{tpu_custom_call.1} parent=55 // pred_region
          %371 = dma.done %s364, 4096
        $region60: #{tpu_custom_call.1} parent=55 // pred_fallthru
          _
        // Predicated region
        $region61: #{tpu_custom_call.1} parent=55 // pred_check
          %p372 = pneg %p71
        $region62: #{tpu_custom_call.1} parent=55 // pred_check_branch
          %374 = sbr.rel (%p372) target = $region64
        $region63: #{tpu_custom_call.1} parent=55 // pred_region
          %375 = dma.done [#allocation7], 2048
        $region64: #{tpu_custom_call.1} parent=55 // pred_fallthru
          _
        // Predicated region
        $region65: #{tpu_custom_call.1} parent=55 // pred_check
          %p376 = pneg %p113
        $region66: #{tpu_custom_call.1} parent=55 // pred_check_branch
          %378 = sbr.rel (%p376) target = $region68
        $region67: #{tpu_custom_call.1} parent=55 // pred_region
          %379 = dma.done [#allocation7], 3072
        $region68: #{tpu_custom_call.1} parent=55 // pred_fallthru
          _
        // Predicated region
        $region69: #{tpu_custom_call.1} parent=55 // pred_check
          %p380 = pneg %p134
        $region70: #{tpu_custom_call.1} parent=55 // pred_check_branch
          %382 = sbr.rel (%p380) target = $region72
        $region71: #{tpu_custom_call.1} parent=55 // pred_region
          %383 = dma.done [#allocation10], 16
        $region72: #{tpu_custom_call.1} parent=55 // pred_fallthru
          _
        // Predicated region
        $region73: #{tpu_custom_call.1} parent=55 // pred_check
          %p384 = pneg %p155
        $region74: #{tpu_custom_call.1} parent=55 // pred_check_branch
          %386 = sbr.rel (%p384) target = $region76
        $region75: #{tpu_custom_call.1} parent=55 // pred_region
          %387 = dma.done [#allocation10], 4096
        $region76: #{tpu_custom_call.1} parent=55 // pred_fallthru
          _
        // Predicated region
        $region77: #{tpu_custom_call.1} parent=55 // pred_check
          %p388 = pneg %p197
        $region78: #{tpu_custom_call.1} parent=55 // pred_check_branch
          %390 = sbr.rel (%p388) target = $region80
        $region79: #{tpu_custom_call.1} parent=55 // pred_region
          %391 = dma.done [#allocation13], 8192
        $region80: #{tpu_custom_call.1} parent=55 // pred_fallthru
          _
        %s392 = sand.u32 %s37, 1
        %s393 = scalar_lea.sflag [#allocation4], %s392
        %s394 = sand.u32 %s37, 1
        %s395 = smul.addr %s394, 256
        %s396 = scalar_lea.vmem [#allocation3], %s395
        %p397 = pneg %p50
        %p398 = pneg %p47
        %p399 = pneg %p71
        %p400 = pneg %p68
        %p401 = pneg %p92
        %p402 = pneg %p89
        %p403 = pneg %p113
        %p404 = pneg %p110
        %p405 = pneg %p134
        %p406 = pneg %p131
        %p407 = pneg %p155
        %p408 = pneg %p152
        %p409 = pneg %p176
        %p410 = pneg %p173
        %p411 = pneg %p197
        %p412 = pneg %p194
        %p413 = pneg %p218
        %p414 = pneg %p215
        %p415 = pneg %p244
        %p416 = pneg %p241
        %s417 = sand.u32 %s231, 1
        %s418 = scalar_lea.sflag [#allocation5], %s417
        %s419 = sand.u32 %s231, 1
        %s420 = smul.addr %s419, 512
        %s421 = scalar_lea.vmem [#allocation14], %s420
        %v423 = vld [vmem:[%s367] sm:$0xff]
        %v424 = vld [vmem:[%s367 + $0x8] sm:$0xff]
        %v425 = vld [vmem:[%s367 + $0x10] sm:$0xff]
        %v426 = vld [vmem:[%s367 + $0x18] sm:$0xff]
        %v427 = vld [vmem:[%s367 + $0x20] sm:$0xff]
        %v428 = vld [vmem:[%s367 + $0x28] sm:$0xff]
        %v429 = vld [vmem:[%s367 + $0x30] sm:$0xff]
        %v430 = vld [vmem:[%s367 + $0x38] sm:$0xff]
        %v431 = vld [vmem:[%s367 + $0x40] sm:$0xff]
        %v432 = vld [vmem:[%s367 + $0x48] sm:$0xff]
        %v433 = vld [vmem:[%s367 + $0x50] sm:$0xff]
        %v434 = vld [vmem:[%s367 + $0x58] sm:$0xff]
        %v435 = vld [vmem:[%s367 + $0x60] sm:$0xff]
        %v436 = vld [vmem:[%s367 + $0x68] sm:$0xff]
        %v437 = vld [vmem:[%s367 + $0x70] sm:$0xff]
        %v438 = vld [vmem:[%s367 + $0x78] sm:$0xff]
        %v439 = vld [vmem:[%s367 + $0x80] sm:$0xff]
        %v440 = vld [vmem:[%s367 + $0x88] sm:$0xff]
        %v441 = vld [vmem:[%s367 + $0x90] sm:$0xff]
        %v442 = vld [vmem:[%s367 + $0x98] sm:$0xff]
        %v443 = vld [vmem:[%s367 + $0xa0] sm:$0xff]
        %v444 = vld [vmem:[%s367 + $0xa8] sm:$0xff]
        %v445 = vld [vmem:[%s367 + $0xb0] sm:$0xff]
        %v446 = vld [vmem:[%s367 + $0xb8] sm:$0xff]
        %v447 = vld [vmem:[%s367 + $0xc0] sm:$0xff]
        %v448 = vld [vmem:[%s367 + $0xc8] sm:$0xff]
        %v449 = vld [vmem:[%s367 + $0xd0] sm:$0xff]
        %v450 = vld [vmem:[%s367 + $0xd8] sm:$0xff]
        %v451 = vld [vmem:[%s367 + $0xe0] sm:$0xff]
        %v452 = vld [vmem:[%s367 + $0xe8] sm:$0xff]
        %v453 = vld [vmem:[%s367 + $0xf0] sm:$0xff]
        %v454 = vld [vmem:[%s367 + $0xf8] sm:$0xff]
        %v455 = vld [vmem:[#allocation6] sm:$0xf]
        %v456 = vld [vmem:[#allocation6 + $0x4] sm:$0xf]
        %v457 = vld [vmem:[#allocation6 + $0x8] sm:$0xf]
        %v458 = vld [vmem:[#allocation6 + $0xc] sm:$0xf]
        %v459 = vld [vmem:[#allocation6 + $0x10] sm:$0xf]
        %v460 = vld [vmem:[#allocation6 + $0x14] sm:$0xf]
        %v461 = vld [vmem:[#allocation6 + $0x18] sm:$0xf]
        %v462 = vld [vmem:[#allocation6 + $0x1c] sm:$0xf]
        %v463 = vld [vmem:[#allocation6 + $0x20] sm:$0xf]
        %v464 = vld [vmem:[#allocation6 + $0x24] sm:$0xf]
        %v465 = vld [vmem:[#allocation6 + $0x28] sm:$0xf]
        %v466 = vld [vmem:[#allocation6 + $0x2c] sm:$0xf]
        %v467 = vld [vmem:[#allocation6 + $0x30] sm:$0xf]
        %v468 = vld [vmem:[#allocation6 + $0x34] sm:$0xf]
        %v469 = vld [vmem:[#allocation6 + $0x38] sm:$0xf]
        %v470 = vld [vmem:[#allocation6 + $0x3c] sm:$0xf]
        %v471 = vld [vmem:[#allocation6 + $0x40] sm:$0xf]
        %v472 = vld [vmem:[#allocation6 + $0x44] sm:$0xf]
        %v473 = vld [vmem:[#allocation6 + $0x48] sm:$0xf]
        %v474 = vld [vmem:[#allocation6 + $0x4c] sm:$0xf]
        %v475 = vld [vmem:[#allocation6 + $0x50] sm:$0xf]
        %v476 = vld [vmem:[#allocation6 + $0x54] sm:$0xf]
        %v477 = vld [vmem:[#allocation6 + $0x58] sm:$0xf]
        %v478 = vld [vmem:[#allocation6 + $0x5c] sm:$0xf]
        %v479 = vld [vmem:[#allocation6 + $0x60] sm:$0xf]
        %v480 = vld [vmem:[#allocation6 + $0x64] sm:$0xf]
        %v481 = vld [vmem:[#allocation6 + $0x68] sm:$0xf]
        %v482 = vld [vmem:[#allocation6 + $0x6c] sm:$0xf]
        %v483 = vld [vmem:[#allocation6 + $0x70] sm:$0xf]
        %v484 = vld [vmem:[#allocation6 + $0x74] sm:$0xf]
        %v485 = vld [vmem:[#allocation6 + $0x78] sm:$0xf]
        %v486 = vld [vmem:[#allocation6 + $0x7c] sm:$0xf]
        %v487 = vld [vmem:[%s2] sm:$0x1]
        %v489 = vlaneseq
        %v490 = vshrl.u32 %v489, 7
        %v491 = vsub.s32 0, %v490
        %v492 = vrot.slane %v487, %v491
        %v526 = vunpack.c.l.b16 %v423
        %v527 = vunpack.c.h.b16 %v423
        %v528 = vunpack.c.l.b16 %v424
        %v529 = vunpack.c.h.b16 %v424
        %v530 = vunpack.c.l.b16 %v425
        %v531 = vunpack.c.h.b16 %v425
        %v532 = vunpack.c.l.b16 %v426
        %v533 = vunpack.c.h.b16 %v426
        %v534 = vunpack.c.l.b16 %v427
        %v535 = vunpack.c.h.b16 %v427
        %v536 = vunpack.c.l.b16 %v428
        %v537 = vunpack.c.h.b16 %v428
        %v538 = vunpack.c.l.b16 %v429
        %v539 = vunpack.c.h.b16 %v429
        %v540 = vunpack.c.l.b16 %v430
        %v541 = vunpack.c.h.b16 %v430
        %v542 = vunpack.c.l.b16 %v431
        %v543 = vunpack.c.h.b16 %v431
        %v544 = vunpack.c.l.b16 %v432
        %v545 = vunpack.c.h.b16 %v432
        %v546 = vunpack.c.l.b16 %v433
        %v547 = vunpack.c.h.b16 %v433
        %v548 = vunpack.c.l.b16 %v434
        %v549 = vunpack.c.h.b16 %v434
        %v550 = vunpack.c.l.b16 %v435
        %v551 = vunpack.c.h.b16 %v435
        %v552 = vunpack.c.l.b16 %v436
        %v553 = vunpack.c.h.b16 %v436
        %v554 = vunpack.c.l.b16 %v437
        %v555 = vunpack.c.h.b16 %v437
        %v556 = vunpack.c.l.b16 %v438
        %v557 = vunpack.c.h.b16 %v438
        %v558 = vunpack.c.l.b16 %v439
        %v559 = vunpack.c.h.b16 %v439
        %v560 = vunpack.c.l.b16 %v440
        %v561 = vunpack.c.h.b16 %v440
        %v562 = vunpack.c.l.b16 %v441
        %v563 = vunpack.c.h.b16 %v441
        %v564 = vunpack.c.l.b16 %v442
        %v565 = vunpack.c.h.b16 %v442
        %v566 = vunpack.c.l.b16 %v443
        %v567 = vunpack.c.h.b16 %v443
        %v568 = vunpack.c.l.b16 %v444
        %v569 = vunpack.c.h.b16 %v444
        %v570 = vunpack.c.l.b16 %v445
        %v571 = vunpack.c.h.b16 %v445
        %v572 = vunpack.c.l.b16 %v446
        %v573 = vunpack.c.h.b16 %v446
        %v574 = vunpack.c.l.b16 %v447
        %v575 = vunpack.c.h.b16 %v447
        %v576 = vunpack.c.l.b16 %v448
        %v577 = vunpack.c.h.b16 %v448
        %v578 = vunpack.c.l.b16 %v449
        %v579 = vunpack.c.h.b16 %v449
        %v580 = vunpack.c.l.b16 %v450
        %v581 = vunpack.c.h.b16 %v450
        %v582 = vunpack.c.l.b16 %v451
        %v583 = vunpack.c.h.b16 %v451
        %v584 = vunpack.c.l.b16 %v452
        %v585 = vunpack.c.h.b16 %v452
        %v586 = vunpack.c.l.b16 %v453
        %v587 = vunpack.c.h.b16 %v453
        %v588 = vunpack.c.l.b16 %v454
        %v589 = vunpack.c.h.b16 %v454
        %v590 = vpack.c.b16 %v528, %v526
        %v591 = vpack.c.b16 %v529, %v527
        %v592 = vpack.c.b16 %v532, %v530
        %v593 = vpack.c.b16 %v533, %v531
        %v594 = vpack.c.b16 %v536, %v534
        %v595 = vpack.c.b16 %v537, %v535
        %v596 = vpack.c.b16 %v540, %v538
        %v597 = vpack.c.b16 %v541, %v539
        %v598 = vpack.c.b16 %v544, %v542
        %v599 = vpack.c.b16 %v545, %v543
        %v600 = vpack.c.b16 %v548, %v546
        %v601 = vpack.c.b16 %v549, %v547
        %v602 = vpack.c.b16 %v552, %v550
        %v603 = vpack.c.b16 %v553, %v551
        %v604 = vpack.c.b16 %v556, %v554
        %v605 = vpack.c.b16 %v557, %v555
        %v606 = vpack.c.b16 %v560, %v558
        %v607 = vpack.c.b16 %v561, %v559
        %v608 = vpack.c.b16 %v564, %v562
        %v609 = vpack.c.b16 %v565, %v563
        %v610 = vpack.c.b16 %v568, %v566
        %v611 = vpack.c.b16 %v569, %v567
        %v612 = vpack.c.b16 %v572, %v570
        %v613 = vpack.c.b16 %v573, %v571
        %v614 = vpack.c.b16 %v576, %v574
        %v615 = vpack.c.b16 %v577, %v575
        %v616 = vpack.c.b16 %v580, %v578
        %v617 = vpack.c.b16 %v581, %v579
        %v618 = vpack.c.b16 %v584, %v582
        %v619 = vpack.c.b16 %v585, %v583
        %v620 = vpack.c.b16 %v588, %v586
        %v621 = vpack.c.b16 %v589, %v587
        %v686 = vunpack.c.l.b16 %v455
        %v687 = vunpack.c.l.b16 %v456
        %v688 = vunpack.c.l.b16 %v457
        %v689 = vunpack.c.l.b16 %v458
        %v690 = vunpack.c.l.b16 %v459
        %v691 = vunpack.c.l.b16 %v460
        %v692 = vunpack.c.l.b16 %v461
        %v693 = vunpack.c.l.b16 %v462
        %v694 = vunpack.c.l.b16 %v463
        %v695 = vunpack.c.l.b16 %v464
        %v696 = vunpack.c.l.b16 %v465
        %v697 = vunpack.c.l.b16 %v466
        %v698 = vunpack.c.l.b16 %v467
        %v699 = vunpack.c.l.b16 %v468
        %v700 = vunpack.c.l.b16 %v469
        %v701 = vunpack.c.l.b16 %v470
        %v702 = vunpack.c.l.b16 %v471
        %v703 = vunpack.c.l.b16 %v472
        %v704 = vunpack.c.l.b16 %v473
        %v705 = vunpack.c.l.b16 %v474
        %v706 = vunpack.c.l.b16 %v475
        %v707 = vunpack.c.l.b16 %v476
        %v708 = vunpack.c.l.b16 %v477
        %v709 = vunpack.c.l.b16 %v478
        %v710 = vunpack.c.l.b16 %v479
        %v711 = vunpack.c.l.b16 %v480
        %v712 = vunpack.c.l.b16 %v481
        %v713 = vunpack.c.l.b16 %v482
        %v714 = vunpack.c.l.b16 %v483
        %v715 = vunpack.c.l.b16 %v484
        %v716 = vunpack.c.l.b16 %v485
        %v717 = vunpack.c.l.b16 %v486
        %v718 = vpack.c.b16 %v687, %v686
        %v719 = vpack.c.b16 %v689, %v688
        %v720 = vpack.c.b16 %v691, %v690
        %v721 = vpack.c.b16 %v693, %v692
        %v722 = vpack.c.b16 %v695, %v694
        %v723 = vpack.c.b16 %v697, %v696
        %v724 = vpack.c.b16 %v699, %v698
        %v725 = vpack.c.b16 %v701, %v700
        %v726 = vpack.c.b16 %v703, %v702
        %v727 = vpack.c.b16 %v705, %v704
        %v728 = vpack.c.b16 %v707, %v706
        %v729 = vpack.c.b16 %v709, %v708
        %v730 = vpack.c.b16 %v711, %v710
        %v731 = vpack.c.b16 %v713, %v712
        %v732 = vpack.c.b16 %v715, %v714
        %v733 = vpack.c.b16 %v717, %v716
        %750 = vmatprep.subr.bf16.mxu0 0
        %751 = vmatpush1.bf16.msra.mxu0 %v725
        %752 = vmatprep.subr.bf16.mxu0 0
        %753 = vmatpush1.bf16.msra.mxu0 %v724
        %754 = vmatprep.subr.bf16.mxu0 0
        %755 = vmatpush1.bf16.msra.mxu0 %v723
        %756 = vmatprep.subr.bf16.mxu0 0
        %757 = vmatpush1.bf16.msra.mxu0 %v722
        %758 = vmatprep.subr.bf16.mxu0 0
        %759 = vmatpush1.bf16.msra.mxu0 %v721
        %760 = vmatprep.subr.bf16.mxu0 0
        %761 = vmatpush1.bf16.msra.mxu0 %v720
        %762 = vmatprep.subr.bf16.mxu0 0
        %763 = vmatpush1.bf16.msra.mxu0 %v719
        %764 = vmatprep.subr.bf16.mxu0 0
        %765 = vmatpush1.bf16.msra.mxu0 %v718
        %766 = vmatprep.subr.bf16.mxu0 0
        %767 = vmatpush2.bf16.msra.mxu0 %v733
        %768 = vmatprep.subr.bf16.mxu0 0
        %769 = vmatpush2.bf16.msra.mxu0 %v732
        %770 = vmatprep.subr.bf16.mxu0 0
        %771 = vmatpush2.bf16.msra.mxu0 %v731
        %772 = vmatprep.subr.bf16.mxu0 0
        %773 = vmatpush2.bf16.msra.mxu0 %v730
        %774 = vmatprep.subr.bf16.mxu0 0
        %775 = vmatpush2.bf16.msra.mxu0 %v729
        %776 = vmatprep.subr.bf16.mxu0 0
        %777 = vmatpush2.bf16.msra.mxu0 %v728
        %778 = vmatprep.subr.bf16.mxu0 0
        %779 = vmatpush2.bf16.msra.mxu0 %v727
        %780 = vmatprep.subr.bf16.mxu0 0
        %781 = vmatpush2.bf16.msra.mxu0 %v726
        %782 = vmatprep.mubr.bf16.mxu0 %v591
        %783 = vmatmul.mubr.bf16.gmra.mxu0 %v590
        %v784 = vpop.f32.mrf.mxu0
        %v785 = vadd.f32 %v492, %v784
        %v786 = vpop.f32.mrf.mxu0
        %v787 = vpop.f32.mrf.mxu0
        %v788 = vadd.f32 %v492, %v787
        %v789 = vpop.f32.mrf.mxu0
        %790 = vmatprep.mubr.bf16.mxu0 %v593
        %791 = vmatmul.mubr.bf16.gmra.mxu0 %v592
        %v792 = vpop.f32.mrf.mxu0
        %v793 = vadd.f32 %v492, %v792
        %v794 = vpop.f32.mrf.mxu0
        %v795 = vpop.f32.mrf.mxu0
        %v796 = vadd.f32 %v492, %v795
        %v797 = vpop.f32.mrf.mxu0
        %798 = vmatprep.mubr.bf16.mxu0 %v595
        %799 = vmatmul.mubr.bf16.gmra.mxu0 %v594
        %v800 = vpop.f32.mrf.mxu0
        %v801 = vadd.f32 %v492, %v800
        %v802 = vpop.f32.mrf.mxu0
        %v803 = vpop.f32.mrf.mxu0
        %v804 = vadd.f32 %v492, %v803
        %v805 = vpop.f32.mrf.mxu0
        %806 = vmatprep.mubr.bf16.mxu0 %v597
        %807 = vmatmul.mubr.bf16.gmra.mxu0 %v596
        %v808 = vpop.f32.mrf.mxu0
        %v809 = vadd.f32 %v492, %v808
        %v810 = vpop.f32.mrf.mxu0
        %v811 = vpop.f32.mrf.mxu0
        %v812 = vadd.f32 %v492, %v811
        %v813 = vpop.f32.mrf.mxu0
        %814 = vmatprep.mubr.bf16.mxu0 %v599
        %815 = vmatmul.mubr.bf16.gmra.mxu0 %v598
        %v816 = vpop.f32.mrf.mxu0
        %v817 = vadd.f32 %v492, %v816
        %v818 = vpop.f32.mrf.mxu0
        %v819 = vpop.f32.mrf.mxu0
        %v820 = vadd.f32 %v492, %v819
        %v821 = vpop.f32.mrf.mxu0
        %822 = vmatprep.mubr.bf16.mxu0 %v601
        %823 = vmatmul.mubr.bf16.gmra.mxu0 %v600
        %v824 = vpop.f32.mrf.mxu0
        %v825 = vadd.f32 %v492, %v824
        %v826 = vpop.f32.mrf.mxu0
        %v827 = vpop.f32.mrf.mxu0
        %v828 = vadd.f32 %v492, %v827
        %v829 = vpop.f32.mrf.mxu0
        %830 = vmatprep.mubr.bf16.mxu0 %v603
        %831 = vmatmul.mubr.bf16.gmra.mxu0 %v602
        %v832 = vpop.f32.mrf.mxu0
        %v833 = vadd.f32 %v492, %v832
        %v834 = vpop.f32.mrf.mxu0
        %v835 = vpop.f32.mrf.mxu0
        %v836 = vadd.f32 %v492, %v835
        %v837 = vpop.f32.mrf.mxu0
        %838 = vmatprep.mubr.bf16.mxu0 %v605
        %839 = vmatmul.mubr.bf16.gmra.mxu0 %v604
        %v840 = vpop.f32.mrf.mxu0
        %v841 = vadd.f32 %v492, %v840
        %v842 = vpop.f32.mrf.mxu0
        %v843 = vpop.f32.mrf.mxu0
        %v844 = vadd.f32 %v492, %v843
        %v845 = vpop.f32.mrf.mxu0
        %846 = vmatprep.mubr.bf16.mxu0 %v607
        %847 = vmatmul.mubr.bf16.gmra.mxu0 %v606
        %v848 = vpop.f32.mrf.mxu0
        %v849 = vadd.f32 %v492, %v848
        %v850 = vpop.f32.mrf.mxu0
        %v851 = vpop.f32.mrf.mxu0
        %v852 = vadd.f32 %v492, %v851
        %v853 = vpop.f32.mrf.mxu0
        %854 = vmatprep.mubr.bf16.mxu0 %v609
        %855 = vmatmul.mubr.bf16.gmra.mxu0 %v608
        %v856 = vpop.f32.mrf.mxu0
        %v857 = vadd.f32 %v492, %v856
        %v858 = vpop.f32.mrf.mxu0
        %v859 = vpop.f32.mrf.mxu0
        %v860 = vadd.f32 %v492, %v859
        %v861 = vpop.f32.mrf.mxu0
        %862 = vmatprep.mubr.bf16.mxu0 %v611
        %863 = vmatmul.mubr.bf16.gmra.mxu0 %v610
        %v864 = vpop.f32.mrf.mxu0
        %v865 = vadd.f32 %v492, %v864
        %v866 = vpop.f32.mrf.mxu0
        %v867 = vpop.f32.mrf.mxu0
        %v868 = vadd.f32 %v492, %v867
        %v869 = vpop.f32.mrf.mxu0
        %870 = vmatprep.mubr.bf16.mxu0 %v613
        %871 = vmatmul.mubr.bf16.gmra.mxu0 %v612
        %v872 = vpop.f32.mrf.mxu0
        %v873 = vadd.f32 %v492, %v872
        %v874 = vpop.f32.mrf.mxu0
        %v875 = vpop.f32.mrf.mxu0
        %v876 = vadd.f32 %v492, %v875
        %v877 = vpop.f32.mrf.mxu0
        %878 = vmatprep.mubr.bf16.mxu0 %v615
        %879 = vmatmul.mubr.bf16.gmra.mxu0 %v614
        %v880 = vpop.f32.mrf.mxu0
        %v881 = vadd.f32 %v492, %v880
        %v882 = vpop.f32.mrf.mxu0
        %v883 = vpop.f32.mrf.mxu0
        %v884 = vadd.f32 %v492, %v883
        %v885 = vpop.f32.mrf.mxu0
        %886 = vmatprep.mubr.bf16.mxu0 %v617
        %887 = vmatmul.mubr.bf16.gmra.mxu0 %v616
        %v888 = vpop.f32.mrf.mxu0
        %v889 = vadd.f32 %v492, %v888
        %v890 = vpop.f32.mrf.mxu0
        %v891 = vpop.f32.mrf.mxu0
        %v892 = vadd.f32 %v492, %v891
        %v893 = vpop.f32.mrf.mxu0
        %894 = vmatprep.mubr.bf16.mxu0 %v619
        %895 = vmatmul.mubr.bf16.gmra.mxu0 %v618
        %v896 = vpop.f32.mrf.mxu0
        %v897 = vadd.f32 %v492, %v896
        %v898 = vpop.f32.mrf.mxu0
        %v899 = vpop.f32.mrf.mxu0
        %v900 = vadd.f32 %v492, %v899
        %v901 = vpop.f32.mrf.mxu0
        %902 = vmatprep.mubr.bf16.mxu0 %v621
        %903 = vmatmul.mubr.bf16.gmra.mxu0 %v620
        %v904 = vpop.f32.mrf.mxu0
        %v905 = vadd.f32 %v492, %v904
        %v906 = vpop.f32.mrf.mxu0
        %v907 = vpop.f32.mrf.mxu0
        %v908 = vadd.f32 %v492, %v907
        %v909 = vpop.f32.mrf.mxu0
        %910 = vdwg.mxu0
        %vm911 = vcmp.ge.f32.partialorder %v785, 1.0
        %vm912 = vcmp.ge.f32.partialorder %v788, 1.0
        %vm913 = vcmp.ge.f32.partialorder %v793, 1.0
        %vm914 = vcmp.ge.f32.partialorder %v796, 1.0
        %vm915 = vcmp.ge.f32.partialorder %v801, 1.0
        %vm916 = vcmp.ge.f32.partialorder %v804, 1.0
        %vm917 = vcmp.ge.f32.partialorder %v809, 1.0
        %vm918 = vcmp.ge.f32.partialorder %v812, 1.0
        %vm919 = vcmp.ge.f32.partialorder %v817, 1.0
        %vm920 = vcmp.ge.f32.partialorder %v820, 1.0
        %vm921 = vcmp.ge.f32.partialorder %v825, 1.0
        %vm922 = vcmp.ge.f32.partialorder %v828, 1.0
        %vm923 = vcmp.ge.f32.partialorder %v833, 1.0
        %vm924 = vcmp.ge.f32.partialorder %v836, 1.0
        %vm925 = vcmp.ge.f32.partialorder %v841, 1.0
        %vm926 = vcmp.ge.f32.partialorder %v844, 1.0
        %vm927 = vcmp.ge.f32.partialorder %v849, 1.0
        %vm928 = vcmp.ge.f32.partialorder %v852, 1.0
        %vm929 = vcmp.ge.f32.partialorder %v857, 1.0
        %vm930 = vcmp.ge.f32.partialorder %v860, 1.0
        %vm931 = vcmp.ge.f32.partialorder %v865, 1.0
        %vm932 = vcmp.ge.f32.partialorder %v868, 1.0
        %vm933 = vcmp.ge.f32.partialorder %v873, 1.0
        %vm934 = vcmp.ge.f32.partialorder %v876, 1.0
        %vm935 = vcmp.ge.f32.partialorder %v881, 1.0
        %vm936 = vcmp.ge.f32.partialorder %v884, 1.0
        %vm937 = vcmp.ge.f32.partialorder %v889, 1.0
        %vm938 = vcmp.ge.f32.partialorder %v892, 1.0
        %vm939 = vcmp.ge.f32.partialorder %v897, 1.0
        %vm940 = vcmp.ge.f32.partialorder %v900, 1.0
        %vm941 = vcmp.ge.f32.partialorder %v905, 1.0
        %vm942 = vcmp.ge.f32.partialorder %v908, 1.0
        %v943 = vsel %vm911, 1.0, 0.0
        %v944 = vsel %vm912, 1.0, 0.0
        %v945 = vsel %vm913, 1.0, 0.0
        %v946 = vsel %vm914, 1.0, 0.0
        %v947 = vsel %vm915, 1.0, 0.0
        %v948 = vsel %vm916, 1.0, 0.0
        %v949 = vsel %vm917, 1.0, 0.0
        %v950 = vsel %vm918, 1.0, 0.0
        %v951 = vsel %vm919, 1.0, 0.0
        %v952 = vsel %vm920, 1.0, 0.0
        %v953 = vsel %vm921, 1.0, 0.0
        %v954 = vsel %vm922, 1.0, 0.0
        %v955 = vsel %vm923, 1.0, 0.0
        %v956 = vsel %vm924, 1.0, 0.0
        %v957 = vsel %vm925, 1.0, 0.0
        %v958 = vsel %vm926, 1.0, 0.0
        %v959 = vsel %vm927, 1.0, 0.0
        %v960 = vsel %vm928, 1.0, 0.0
        %v961 = vsel %vm929, 1.0, 0.0
        %v962 = vsel %vm930, 1.0, 0.0
        %v963 = vsel %vm931, 1.0, 0.0
        %v964 = vsel %vm932, 1.0, 0.0
        %v965 = vsel %vm933, 1.0, 0.0
        %v966 = vsel %vm934, 1.0, 0.0
        %v967 = vsel %vm935, 1.0, 0.0
        %v968 = vsel %vm936, 1.0, 0.0
        %v969 = vsel %vm937, 1.0, 0.0
        %v970 = vsel %vm938, 1.0, 0.0
        %v971 = vsel %vm939, 1.0, 0.0
        %v972 = vsel %vm940, 1.0, 0.0
        %v973 = vsel %vm941, 1.0, 0.0
        %v974 = vsel %vm942, 1.0, 0.0
        %v975 = vpack.c.bf16 %v944, %v943
        %v976 = vpack.c.bf16 %v946, %v945
        %v977 = vpack.c.bf16 %v948, %v947
        %v978 = vpack.c.bf16 %v950, %v949
        %v979 = vpack.c.bf16 %v952, %v951
        %v980 = vpack.c.bf16 %v954, %v953
        %v981 = vpack.c.bf16 %v956, %v955
        %v982 = vpack.c.bf16 %v958, %v957
        %v983 = vpack.c.bf16 %v960, %v959
        %v984 = vpack.c.bf16 %v962, %v961
        %v985 = vpack.c.bf16 %v964, %v963
        %v986 = vpack.c.bf16 %v966, %v965
        %v987 = vpack.c.bf16 %v968, %v967
        %v988 = vpack.c.bf16 %v970, %v969
        %v989 = vpack.c.bf16 %v972, %v971
        %v990 = vpack.c.bf16 %v974, %v973
        %v1007 = vunpack.c.l.b16 %v975
        %v1008 = vunpack.c.h.b16 %v975
        %v1009 = vunpack.c.l.b16 %v976
        %v1010 = vunpack.c.h.b16 %v976
        %v1011 = vunpack.c.l.b16 %v977
        %v1012 = vunpack.c.h.b16 %v977
        %v1013 = vunpack.c.l.b16 %v978
        %v1014 = vunpack.c.h.b16 %v978
        %v1015 = vunpack.c.l.b16 %v979
        %v1016 = vunpack.c.h.b16 %v979
        %v1017 = vunpack.c.l.b16 %v980
        %v1018 = vunpack.c.h.b16 %v980
        %v1019 = vunpack.c.l.b16 %v981
        %v1020 = vunpack.c.h.b16 %v981
        %v1021 = vunpack.c.l.b16 %v982
        %v1022 = vunpack.c.h.b16 %v982
        %v1023 = vunpack.c.l.b16 %v983
        %v1024 = vunpack.c.h.b16 %v983
        %v1025 = vunpack.c.l.b16 %v984
        %v1026 = vunpack.c.h.b16 %v984
        %v1027 = vunpack.c.l.b16 %v985
        %v1028 = vunpack.c.h.b16 %v985
        %v1029 = vunpack.c.l.b16 %v986
        %v1030 = vunpack.c.h.b16 %v986
        %v1031 = vunpack.c.l.b16 %v987
        %v1032 = vunpack.c.h.b16 %v987
        %v1033 = vunpack.c.l.b16 %v988
        %v1034 = vunpack.c.h.b16 %v988
        %v1035 = vunpack.c.l.b16 %v989
        %v1036 = vunpack.c.h.b16 %v989
        %v1037 = vunpack.c.l.b16 %v990
        %v1038 = vunpack.c.h.b16 %v990
        %v1039 = vpack.c.b16 %v1007, %v1007
        %v1040 = vpack.c.b16 %v1008, %v1008
        %v1041 = vpack.c.b16 %v1009, %v1009
        %v1042 = vpack.c.b16 %v1010, %v1010
        %v1043 = vpack.c.b16 %v1011, %v1011
        %v1044 = vpack.c.b16 %v1012, %v1012
        %v1045 = vpack.c.b16 %v1013, %v1013
        %v1046 = vpack.c.b16 %v1014, %v1014
        %v1047 = vpack.c.b16 %v1015, %v1015
        %v1048 = vpack.c.b16 %v1016, %v1016
        %v1049 = vpack.c.b16 %v1017, %v1017
        %v1050 = vpack.c.b16 %v1018, %v1018
        %v1051 = vpack.c.b16 %v1019, %v1019
        %v1052 = vpack.c.b16 %v1020, %v1020
        %v1053 = vpack.c.b16 %v1021, %v1021
        %v1054 = vpack.c.b16 %v1022, %v1022
        %v1055 = vpack.c.b16 %v1023, %v1023
        %v1056 = vpack.c.b16 %v1024, %v1024
        %v1057 = vpack.c.b16 %v1025, %v1025
        %v1058 = vpack.c.b16 %v1026, %v1026
        %v1059 = vpack.c.b16 %v1027, %v1027
        %v1060 = vpack.c.b16 %v1028, %v1028
        %v1061 = vpack.c.b16 %v1029, %v1029
        %v1062 = vpack.c.b16 %v1030, %v1030
        %v1063 = vpack.c.b16 %v1031, %v1031
        %v1064 = vpack.c.b16 %v1032, %v1032
        %v1065 = vpack.c.b16 %v1033, %v1033
        %v1066 = vpack.c.b16 %v1034, %v1034
        %v1067 = vpack.c.b16 %v1035, %v1035
        %v1068 = vpack.c.b16 %v1036, %v1036
        %v1069 = vpack.c.b16 %v1037, %v1037
        %v1070 = vpack.c.b16 %v1038, %v1038
        %1103 = vst [vmem:[#allocation2] sm:$0xf] 0
        %1104 = vst [vmem:[#allocation2 + $0x4] sm:$0xf] %v1039
        %1105 = vst [vmem:[#allocation2 + $0x8] sm:$0xf] %v1040
        %1106 = vst [vmem:[#allocation2 + $0xc] sm:$0xf] %v1041
        %1107 = vst [vmem:[#allocation2 + $0x10] sm:$0xf] %v1042
        %1108 = vst [vmem:[#allocation2 + $0x14] sm:$0xf] %v1043
        %1109 = vst [vmem:[#allocation2 + $0x18] sm:$0xf] %v1044
        %1110 = vst [vmem:[#allocation2 + $0x1c] sm:$0xf] %v1045
        %1111 = vst [vmem:[#allocation2 + $0x20] sm:$0xf] %v1046
        %1112 = vst [vmem:[#allocation2 + $0x24] sm:$0xf] %v1047
        %1113 = vst [vmem:[#allocation2 + $0x28] sm:$0xf] %v1048
        %1114 = vst [vmem:[#allocation2 + $0x2c] sm:$0xf] %v1049
        %1115 = vst [vmem:[#allocation2 + $0x30] sm:$0xf] %v1050
        %1116 = vst [vmem:[#allocation2 + $0x34] sm:$0xf] %v1051
        %1117 = vst [vmem:[#allocation2 + $0x38] sm:$0xf] %v1052
        %1118 = vst [vmem:[#allocation2 + $0x3c] sm:$0xf] %v1053
        %1119 = vst [vmem:[#allocation2 + $0x40] sm:$0xf] %v1054
        %1120 = vst [vmem:[#allocation2 + $0x44] sm:$0xf] %v1055
        %1121 = vst [vmem:[#allocation2 + $0x48] sm:$0xf] %v1056
        %1122 = vst [vmem:[#allocation2 + $0x4c] sm:$0xf] %v1057
        %1123 = vst [vmem:[#allocation2 + $0x50] sm:$0xf] %v1058
        %1124 = vst [vmem:[#allocation2 + $0x54] sm:$0xf] %v1059
        %1125 = vst [vmem:[#allocation2 + $0x58] sm:$0xf] %v1060
        %1126 = vst [vmem:[#allocation2 + $0x5c] sm:$0xf] %v1061
        %1127 = vst [vmem:[#allocation2 + $0x60] sm:$0xf] %v1062
        %1128 = vst [vmem:[#allocation2 + $0x64] sm:$0xf] %v1063
        %1129 = vst [vmem:[#allocation2 + $0x68] sm:$0xf] %v1064
        %1130 = vst [vmem:[#allocation2 + $0x6c] sm:$0xf] %v1065
        %1131 = vst [vmem:[#allocation2 + $0x70] sm:$0xf] %v1066
        %1132 = vst [vmem:[#allocation2 + $0x74] sm:$0xf] %v1067
        %1133 = vst [vmem:[#allocation2 + $0x78] sm:$0xf] %v1068
        %1134 = vst [vmem:[#allocation2 + $0x7c] sm:$0xf] %v1069
        %1135 = vst [vmem:[#allocation2 + $0x80] sm:$0xf] %v1070
        %1136 = vst [vmem:[#allocation2 + $0x84] sm:$0xf] 0
        %v1137 = vld [vmem:[#allocation2] sm:$0xf]
        %v1138 = vld [vmem:[#allocation2 + $0x8] sm:$0xf]
        %v1139 = vld [vmem:[#allocation2 + $0x10] sm:$0xf]
        %v1140 = vld [vmem:[#allocation2 + $0x18] sm:$0xf]
        %v1141 = vld [vmem:[#allocation2 + $0x20] sm:$0xf]
        %v1142 = vld [vmem:[#allocation2 + $0x28] sm:$0xf]
        %v1143 = vld [vmem:[#allocation2 + $0x30] sm:$0xf]
        %v1144 = vld [vmem:[#allocation2 + $0x38] sm:$0xf]
        %v1145 = vld [vmem:[#allocation2 + $0x40] sm:$0xf]
        %v1146 = vld [vmem:[#allocation2 + $0x48] sm:$0xf]
        %v1147 = vld [vmem:[#allocation2 + $0x50] sm:$0xf]
        %v1148 = vld [vmem:[#allocation2 + $0x58] sm:$0xf]
        %v1149 = vld [vmem:[#allocation2 + $0x60] sm:$0xf]
        %v1150 = vld [vmem:[#allocation2 + $0x68] sm:$0xf]
        %v1151 = vld [vmem:[#allocation2 + $0x70] sm:$0xf]
        %v1152 = vld [vmem:[#allocation2 + $0x78] sm:$0xf]
        %s1153 = scalar_lea.vmem [#allocation2], 4
        %v1154 = vld [vmem:[%s1153] sm:$0xf]
        %v1155 = vld [vmem:[%s1153 + $0x8] sm:$0xf]
        %v1156 = vld [vmem:[%s1153 + $0x10] sm:$0xf]
        %v1157 = vld [vmem:[%s1153 + $0x18] sm:$0xf]
        %v1158 = vld [vmem:[%s1153 + $0x20] sm:$0xf]
        %v1159 = vld [vmem:[%s1153 + $0x28] sm:$0xf]
        %v1160 = vld [vmem:[%s1153 + $0x30] sm:$0xf]
        %v1161 = vld [vmem:[%s1153 + $0x38] sm:$0xf]
        %v1162 = vld [vmem:[%s1153 + $0x40] sm:$0xf]
        %v1163 = vld [vmem:[%s1153 + $0x48] sm:$0xf]
        %v1164 = vld [vmem:[%s1153 + $0x50] sm:$0xf]
        %v1165 = vld [vmem:[%s1153 + $0x58] sm:$0xf]
        %v1166 = vld [vmem:[%s1153 + $0x60] sm:$0xf]
        %v1167 = vld [vmem:[%s1153 + $0x68] sm:$0xf]
        %v1168 = vld [vmem:[%s1153 + $0x70] sm:$0xf]
        %v1169 = vld [vmem:[%s1153 + $0x78] sm:$0xf]
        %s1170 = scalar_lea.vmem [#allocation2], 8
        %v1171 = vld [vmem:[%s1170] sm:$0xf]
        %v1172 = vld [vmem:[%s1170 + $0x8] sm:$0xf]
        %v1173 = vld [vmem:[%s1170 + $0x10] sm:$0xf]
        %v1174 = vld [vmem:[%s1170 + $0x18] sm:$0xf]
        %v1175 = vld [vmem:[%s1170 + $0x20] sm:$0xf]
        %v1176 = vld [vmem:[%s1170 + $0x28] sm:$0xf]
        %v1177 = vld [vmem:[%s1170 + $0x30] sm:$0xf]
        %v1178 = vld [vmem:[%s1170 + $0x38] sm:$0xf]
        %v1179 = vld [vmem:[%s1170 + $0x40] sm:$0xf]
        %v1180 = vld [vmem:[%s1170 + $0x48] sm:$0xf]
        %v1181 = vld [vmem:[%s1170 + $0x50] sm:$0xf]
        %v1182 = vld [vmem:[%s1170 + $0x58] sm:$0xf]
        %v1183 = vld [vmem:[%s1170 + $0x60] sm:$0xf]
        %v1184 = vld [vmem:[%s1170 + $0x68] sm:$0xf]
        %v1185 = vld [vmem:[%s1170 + $0x70] sm:$0xf]
        %v1186 = vld [vmem:[%s1170 + $0x78] sm:$0xf]
        %v1235 = vunpack.c.l.b16 %v1137
        %v1236 = vunpack.c.l.b16 %v1154
        %v1237 = vunpack.c.l.b16 %v1171
        %v1238 = vunpack.c.l.b16 %v1138
        %v1239 = vunpack.c.l.b16 %v1155
        %v1240 = vunpack.c.l.b16 %v1172
        %v1241 = vunpack.c.l.b16 %v1139
        %v1242 = vunpack.c.l.b16 %v1156
        %v1243 = vunpack.c.l.b16 %v1173
        %v1244 = vunpack.c.l.b16 %v1140
        %v1245 = vunpack.c.l.b16 %v1157
        %v1246 = vunpack.c.l.b16 %v1174
        %v1247 = vunpack.c.l.b16 %v1141
        %v1248 = vunpack.c.l.b16 %v1158
        %v1249 = vunpack.c.l.b16 %v1175
        %v1250 = vunpack.c.l.b16 %v1142
        %v1251 = vunpack.c.l.b16 %v1159
        %v1252 = vunpack.c.l.b16 %v1176
        %v1253 = vunpack.c.l.b16 %v1143
        %v1254 = vunpack.c.l.b16 %v1160
        %v1255 = vunpack.c.l.b16 %v1177
        %v1256 = vunpack.c.l.b16 %v1144
        %v1257 = vunpack.c.l.b16 %v1161
        %v1258 = vunpack.c.l.b16 %v1178
        %v1259 = vunpack.c.l.b16 %v1145
        %v1260 = vunpack.c.l.b16 %v1162
        %v1261 = vunpack.c.l.b16 %v1179
        %v1262 = vunpack.c.l.b16 %v1146
        %v1263 = vunpack.c.l.b16 %v1163
        %v1264 = vunpack.c.l.b16 %v1180
        %v1265 = vunpack.c.l.b16 %v1147
        %v1266 = vunpack.c.l.b16 %v1164
        %v1267 = vunpack.c.l.b16 %v1181
        %v1268 = vunpack.c.l.b16 %v1148
        %v1269 = vunpack.c.l.b16 %v1165
        %v1270 = vunpack.c.l.b16 %v1182
        %v1271 = vunpack.c.l.b16 %v1149
        %v1272 = vunpack.c.l.b16 %v1166
        %v1273 = vunpack.c.l.b16 %v1183
        %v1274 = vunpack.c.l.b16 %v1150
        %v1275 = vunpack.c.l.b16 %v1167
        %v1276 = vunpack.c.l.b16 %v1184
        %v1277 = vunpack.c.l.b16 %v1151
        %v1278 = vunpack.c.l.b16 %v1168
        %v1279 = vunpack.c.l.b16 %v1185
        %v1280 = vunpack.c.l.b16 %v1152
        %v1281 = vunpack.c.l.b16 %v1169
        %v1282 = vunpack.c.l.b16 %v1186
        %v1283 = vld [vmem:[#allocation8] sm:$0xf]
        %v1284 = vld [vmem:[#allocation8 + $0x4] sm:$0xf]
        %v1285 = vld [vmem:[#allocation8 + $0x8] sm:$0xf]
        %v1286 = vld [vmem:[#allocation8 + $0xc] sm:$0xf]
        %v1287 = vld [vmem:[#allocation8 + $0x10] sm:$0xf]
        %v1288 = vld [vmem:[#allocation8 + $0x14] sm:$0xf]
        %v1289 = vld [vmem:[#allocation8 + $0x18] sm:$0xf]
        %v1290 = vld [vmem:[#allocation8 + $0x1c] sm:$0xf]
        %v1291 = vld [vmem:[#allocation8 + $0x20] sm:$0xf]
        %v1292 = vld [vmem:[#allocation8 + $0x24] sm:$0xf]
        %v1293 = vld [vmem:[#allocation8 + $0x28] sm:$0xf]
        %v1294 = vld [vmem:[#allocation8 + $0x2c] sm:$0xf]
        %v1295 = vld [vmem:[#allocation8 + $0x30] sm:$0xf]
        %v1296 = vld [vmem:[#allocation8 + $0x34] sm:$0xf]
        %v1297 = vld [vmem:[#allocation8 + $0x38] sm:$0xf]
        %v1298 = vld [vmem:[#allocation8 + $0x3c] sm:$0xf]
        %v1299 = vld [vmem:[#allocation8 + $0x40] sm:$0xf]
        %v1300 = vld [vmem:[#allocation8 + $0x44] sm:$0xf]
        %v1301 = vld [vmem:[#allocation8 + $0x48] sm:$0xf]
        %v1302 = vld [vmem:[#allocation8 + $0x4c] sm:$0xf]
        %v1303 = vld [vmem:[#allocation8 + $0x50] sm:$0xf]
        %v1304 = vld [vmem:[#allocation8 + $0x54] sm:$0xf]
        %v1305 = vld [vmem:[#allocation8 + $0x58] sm:$0xf]
        %v1306 = vld [vmem:[#allocation8 + $0x5c] sm:$0xf]
        %v1307 = vld [vmem:[#allocation8 + $0x60] sm:$0xf]
        %v1308 = vld [vmem:[#allocation8 + $0x64] sm:$0xf]
        %v1309 = vld [vmem:[#allocation8 + $0x68] sm:$0xf]
        %v1310 = vld [vmem:[#allocation8 + $0x6c] sm:$0xf]
        %v1311 = vld [vmem:[#allocation8 + $0x70] sm:$0xf]
        %v1312 = vld [vmem:[#allocation8 + $0x74] sm:$0xf]
        %v1313 = vld [vmem:[#allocation8 + $0x78] sm:$0xf]
        %v1314 = vld [vmem:[#allocation8 + $0x7c] sm:$0xf]
        %v1315 = vld [vmem:[#allocation8 + $0x80] sm:$0xf]
        %v1316 = vld [vmem:[#allocation8 + $0x84] sm:$0xf]
        %v1317 = vld [vmem:[#allocation8 + $0x88] sm:$0xf]
        %v1318 = vld [vmem:[#allocation8 + $0x8c] sm:$0xf]
        %v1319 = vld [vmem:[#allocation8 + $0x90] sm:$0xf]
        %v1320 = vld [vmem:[#allocation8 + $0x94] sm:$0xf]
        %v1321 = vld [vmem:[#allocation8 + $0x98] sm:$0xf]
        %v1322 = vld [vmem:[#allocation8 + $0x9c] sm:$0xf]
        %v1323 = vld [vmem:[#allocation8 + $0xa0] sm:$0xf]
        %v1324 = vld [vmem:[#allocation8 + $0xa4] sm:$0xf]
        %v1325 = vld [vmem:[#allocation8 + $0xa8] sm:$0xf]
        %v1326 = vld [vmem:[#allocation8 + $0xac] sm:$0xf]
        %v1327 = vld [vmem:[#allocation8 + $0xb0] sm:$0xf]
        %v1328 = vld [vmem:[#allocation8 + $0xb4] sm:$0xf]
        %v1329 = vld [vmem:[#allocation8 + $0xb8] sm:$0xf]
        %v1330 = vld [vmem:[#allocation8 + $0xbc] sm:$0xf]
        %v1331 = vld [vmem:[#allocation9] sm:$0x1]
        %v1333 = vlaneseq
        %v1334 = vshrl.u32 %v1333, 7
        %v1335 = vsub.s32 0, %v1334
        %v1336 = vrot.slane %v1331, %v1335
        %v1338 = vpack.c.b16 %v1238, %v1235
        %v1339 = vpack.c.b16 %v1239, %v1236
        %v1340 = vpack.c.b16 %v1240, %v1237
        %v1341 = vpack.c.b16 %v1244, %v1241
        %v1342 = vpack.c.b16 %v1245, %v1242
        %v1343 = vpack.c.b16 %v1246, %v1243
        %v1344 = vpack.c.b16 %v1250, %v1247
        %v1345 = vpack.c.b16 %v1251, %v1248
        %v1346 = vpack.c.b16 %v1252, %v1249
        %v1347 = vpack.c.b16 %v1256, %v1253
        %v1348 = vpack.c.b16 %v1257, %v1254
        %v1349 = vpack.c.b16 %v1258, %v1255
        %v1350 = vpack.c.b16 %v1262, %v1259
        %v1351 = vpack.c.b16 %v1263, %v1260
        %v1352 = vpack.c.b16 %v1264, %v1261
        %v1353 = vpack.c.b16 %v1268, %v1265
        %v1354 = vpack.c.b16 %v1269, %v1266
        %v1355 = vpack.c.b16 %v1270, %v1267
        %v1356 = vpack.c.b16 %v1274, %v1271
        %v1357 = vpack.c.b16 %v1275, %v1272
        %v1358 = vpack.c.b16 %v1276, %v1273
        %v1359 = vpack.c.b16 %v1280, %v1277
        %v1360 = vpack.c.b16 %v1281, %v1278
        %v1361 = vpack.c.b16 %v1282, %v1279
        %v1434 = vunpack.c.l.b16 %v1283
        %v1435 = vunpack.c.l.b16 %v1284
        %v1436 = vunpack.c.l.b16 %v1285
        %v1437 = vunpack.c.l.b16 %v1286
        %v1438 = vunpack.c.l.b16 %v1287
        %v1439 = vunpack.c.l.b16 %v1288
        %v1440 = vunpack.c.l.b16 %v1289
        %v1441 = vunpack.c.l.b16 %v1290
        %v1442 = vunpack.c.l.b16 %v1291
        %v1443 = vunpack.c.l.b16 %v1292
        %v1444 = vunpack.c.l.b16 %v1293
        %v1445 = vunpack.c.l.b16 %v1294
        %v1446 = vunpack.c.l.b16 %v1295
        %v1447 = vunpack.c.l.b16 %v1296
        %v1448 = vunpack.c.l.b16 %v1297
        %v1449 = vunpack.c.l.b16 %v1298
        %v1450 = vunpack.c.l.b16 %v1299
        %v1451 = vunpack.c.l.b16 %v1300
        %v1452 = vunpack.c.l.b16 %v1301
        %v1453 = vunpack.c.l.b16 %v1302
        %v1454 = vunpack.c.l.b16 %v1303
        %v1455 = vunpack.c.l.b16 %v1304
        %v1456 = vunpack.c.l.b16 %v1305
        %v1457 = vunpack.c.l.b16 %v1306
        %v1458 = vunpack.c.l.b16 %v1307
        %v1459 = vunpack.c.l.b16 %v1308
        %v1460 = vunpack.c.l.b16 %v1309
        %v1461 = vunpack.c.l.b16 %v1310
        %v1462 = vunpack.c.l.b16 %v1311
        %v1463 = vunpack.c.l.b16 %v1312
        %v1464 = vunpack.c.l.b16 %v1313
        %v1465 = vunpack.c.l.b16 %v1314
        %v1466 = vunpack.c.l.b16 %v1315
        %v1467 = vunpack.c.l.b16 %v1316
        %v1468 = vunpack.c.l.b16 %v1317
        %v1469 = vunpack.c.l.b16 %v1318
        %v1470 = vunpack.c.l.b16 %v1319
        %v1471 = vunpack.c.l.b16 %v1320
        %v1472 = vunpack.c.l.b16 %v1321
        %v1473 = vunpack.c.l.b16 %v1322
        %v1474 = vunpack.c.l.b16 %v1323
        %v1475 = vunpack.c.l.b16 %v1324
        %v1476 = vunpack.c.l.b16 %v1325
        %v1477 = vunpack.c.l.b16 %v1326
        %v1478 = vunpack.c.l.b16 %v1327
        %v1479 = vunpack.c.l.b16 %v1328
        %v1480 = vunpack.c.l.b16 %v1329
        %v1481 = vunpack.c.l.b16 %v1330
        %v1482 = vpack.c.b16 %v1435, %v1434
        %v1483 = vpack.c.b16 %v1437, %v1436
        %v1484 = vpack.c.b16 %v1439, %v1438
        %v1485 = vpack.c.b16 %v1441, %v1440
        %v1486 = vpack.c.b16 %v1443, %v1442
        %v1487 = vpack.c.b16 %v1445, %v1444
        %v1488 = vpack.c.b16 %v1447, %v1446
        %v1489 = vpack.c.b16 %v1449, %v1448
        %v1490 = vpack.c.b16 %v1451, %v1450
        %v1491 = vpack.c.b16 %v1453, %v1452
        %v1492 = vpack.c.b16 %v1455, %v1454
        %v1493 = vpack.c.b16 %v1457, %v1456
        %v1494 = vpack.c.b16 %v1459, %v1458
        %v1495 = vpack.c.b16 %v1461, %v1460
        %v1496 = vpack.c.b16 %v1463, %v1462
        %v1497 = vpack.c.b16 %v1465, %v1464
        %v1498 = vpack.c.b16 %v1467, %v1466
        %v1499 = vpack.c.b16 %v1469, %v1468
        %v1500 = vpack.c.b16 %v1471, %v1470
        %v1501 = vpack.c.b16 %v1473, %v1472
        %v1502 = vpack.c.b16 %v1475, %v1474
        %v1503 = vpack.c.b16 %v1477, %v1476
        %v1504 = vpack.c.b16 %v1479, %v1478
        %v1505 = vpack.c.b16 %v1481, %v1480
        %1530 = vmatprep.subr.bf16.mxu0 0
        %1531 = vmatpush1.bf16.msra.mxu0 %v1489
        %1532 = vmatprep.subr.bf16.mxu0 0
        %1533 = vmatpush1.bf16.msra.mxu0 %v1488
        %1534 = vmatprep.subr.bf16.mxu0 0
        %1535 = vmatpush1.bf16.msra.mxu0 %v1487
        %1536 = vmatprep.subr.bf16.mxu0 0
        %1537 = vmatpush1.bf16.msra.mxu0 %v1486
        %1538 = vmatprep.subr.bf16.mxu0 0
        %1539 = vmatpush1.bf16.msra.mxu0 %v1485
        %1540 = vmatprep.subr.bf16.mxu0 0
        %1541 = vmatpush1.bf16.msra.mxu0 %v1484
        %1542 = vmatprep.subr.bf16.mxu0 0
        %1543 = vmatpush1.bf16.msra.mxu0 %v1483
        %1544 = vmatprep.subr.bf16.mxu0 0
        %1545 = vmatpush1.bf16.msra.mxu0 %v1482
        %1546 = vmatprep.subr.bf16.mxu0 0
        %1547 = vmatpush2.bf16.msra.mxu0 %v1497
        %1548 = vmatprep.subr.bf16.mxu0 0
        %1549 = vmatpush2.bf16.msra.mxu0 %v1496
        %1550 = vmatprep.subr.bf16.mxu0 0
        %1551 = vmatpush2.bf16.msra.mxu0 %v1495
        %1552 = vmatprep.subr.bf16.mxu0 0
        %1553 = vmatpush2.bf16.msra.mxu0 %v1494
        %1554 = vmatprep.subr.bf16.mxu0 0
        %1555 = vmatpush2.bf16.msra.mxu0 %v1493
        %1556 = vmatprep.subr.bf16.mxu0 0
        %1557 = vmatpush2.bf16.msra.mxu0 %v1492
        %1558 = vmatprep.subr.bf16.mxu0 0
        %1559 = vmatpush2.bf16.msra.mxu0 %v1491
        %1560 = vmatprep.subr.bf16.mxu0 0
        %1561 = vmatpush2.bf16.msra.mxu0 %v1490
        %1562 = vmatprep.mubr.bf16.mxu0 %v1339
        %1563 = vmatmul.mubr.bf16.gmra.mxu0 %v1338
        %v1564 = vpop.f32.mrf.mxu0
        %v1565 = vadd.f32 %v1336, %v1564
        %v1566 = vpop.f32.mrf.mxu0
        %v1567 = vpop.f32.mrf.mxu0
        %v1568 = vadd.f32 %v1336, %v1567
        %v1569 = vpop.f32.mrf.mxu0
        %1570 = vmatprep.mubr.bf16.mxu0 %v1342
        %1571 = vmatmul.mubr.bf16.gmra.mxu0 %v1341
        %v1572 = vpop.f32.mrf.mxu0
        %v1573 = vadd.f32 %v1336, %v1572
        %v1574 = vpop.f32.mrf.mxu0
        %v1575 = vpop.f32.mrf.mxu0
        %v1576 = vadd.f32 %v1336, %v1575
        %v1577 = vpop.f32.mrf.mxu0
        %1578 = vmatprep.mubr.bf16.mxu0 %v1345
        %1579 = vmatmul.mubr.bf16.gmra.mxu0 %v1344
        %v1580 = vpop.f32.mrf.mxu0
        %v1581 = vadd.f32 %v1336, %v1580
        %v1582 = vpop.f32.mrf.mxu0
        %v1583 = vpop.f32.mrf.mxu0
        %v1584 = vadd.f32 %v1336, %v1583
        %v1585 = vpop.f32.mrf.mxu0
        %1586 = vmatprep.mubr.bf16.mxu0 %v1348
        %1587 = vmatmul.mubr.bf16.gmra.mxu0 %v1347
        %v1588 = vpop.f32.mrf.mxu0
        %v1589 = vadd.f32 %v1336, %v1588
        %v1590 = vpop.f32.mrf.mxu0
        %v1591 = vpop.f32.mrf.mxu0
        %v1592 = vadd.f32 %v1336, %v1591
        %v1593 = vpop.f32.mrf.mxu0
        %1594 = vmatprep.mubr.bf16.mxu0 %v1351
        %1595 = vmatmul.mubr.bf16.gmra.mxu0 %v1350
        %v1596 = vpop.f32.mrf.mxu0
        %v1597 = vadd.f32 %v1336, %v1596
        %v1598 = vpop.f32.mrf.mxu0
        %v1599 = vpop.f32.mrf.mxu0
        %v1600 = vadd.f32 %v1336, %v1599
        %v1601 = vpop.f32.mrf.mxu0
        %1602 = vmatprep.mubr.bf16.mxu0 %v1354
        %1603 = vmatmul.mubr.bf16.gmra.mxu0 %v1353
        %v1604 = vpop.f32.mrf.mxu0
        %v1605 = vadd.f32 %v1336, %v1604
        %v1606 = vpop.f32.mrf.mxu0
        %v1607 = vpop.f32.mrf.mxu0
        %v1608 = vadd.f32 %v1336, %v1607
        %v1609 = vpop.f32.mrf.mxu0
        %1610 = vmatprep.mubr.bf16.mxu0 %v1357
        %1611 = vmatmul.mubr.bf16.gmra.mxu0 %v1356
        %v1612 = vpop.f32.mrf.mxu0
        %v1613 = vadd.f32 %v1336, %v1612
        %v1614 = vpop.f32.mrf.mxu0
        %v1615 = vpop.f32.mrf.mxu0
        %v1616 = vadd.f32 %v1336, %v1615
        %v1617 = vpop.f32.mrf.mxu0
        %1618 = vmatprep.mubr.bf16.mxu0 %v1360
        %1619 = vmatmul.mubr.bf16.gmra.mxu0 %v1359
        %v1620 = vpop.f32.mrf.mxu0
        %v1621 = vadd.f32 %v1336, %v1620
        %v1622 = vpop.f32.mrf.mxu0
        %v1623 = vpop.f32.mrf.mxu0
        %v1624 = vadd.f32 %v1336, %v1623
        %v1625 = vpop.f32.mrf.mxu0
        %1626 = vdwg.mxu0
        %1627 = vmatprep.subr.bf16.mxu0 0
        %1628 = vmatpush1.bf16.msra.mxu0 %v1505
        %1629 = vmatprep.subr.bf16.mxu0 0
        %1630 = vmatpush1.bf16.msra.mxu0 %v1504
        %1631 = vmatprep.subr.bf16.mxu0 0
        %1632 = vmatpush1.bf16.msra.mxu0 %v1503
        %1633 = vmatprep.subr.bf16.mxu0 0
        %1634 = vmatpush1.bf16.msra.mxu0 %v1502
        %1635 = vmatprep.subr.bf16.mxu0 0
        %1636 = vmatpush1.bf16.msra.mxu0 %v1501
        %1637 = vmatprep.subr.bf16.mxu0 0
        %1638 = vmatpush1.bf16.msra.mxu0 %v1500
        %1639 = vmatprep.subr.bf16.mxu0 0
        %1640 = vmatpush1.bf16.msra.mxu0 %v1499
        %1641 = vmatprep.subr.bf16.mxu0 0
        %1642 = vmatpush1.bf16.msra.mxu0 %v1498
        %1643 = vmatprep.subr.bf16.mxu0 0
        %1644 = vmatpush2.bf16.msra.mxu0 0
        %1645 = vmatprep.subr.bf16.mxu0 0
        %1646 = vmatpush2.bf16.msra.mxu0 0
        %1647 = vmatprep.subr.bf16.mxu0 0
        %1648 = vmatpush2.bf16.msra.mxu0 0
        %1649 = vmatprep.subr.bf16.mxu0 0
        %1650 = vmatpush2.bf16.msra.mxu0 0
        %1651 = vmatprep.subr.bf16.mxu0 0
        %1652 = vmatpush2.bf16.msra.mxu0 0
        %1653 = vmatprep.subr.bf16.mxu0 0
        %1654 = vmatpush2.bf16.msra.mxu0 0
        %1655 = vmatprep.subr.bf16.mxu0 0
        %1656 = vmatpush2.bf16.msra.mxu0 0
        %1657 = vmatprep.subr.bf16.mxu0 0
        %1658 = vmatpush2.bf16.msra.mxu0 0
        %1659 = vmatprep.mubr.bf16.mxu0 0
        %1660 = vmatmul.mubr.bf16.gmra.mxu0 %v1340
        %v1661 = vpop.f32.mrf.mxu0
        %v1662 = vadd.f32 %v1565, %v1661
        %v1663 = vpop.f32.mrf.mxu0
        %v1664 = vpop.f32.mrf.mxu0
        %v1665 = vadd.f32 %v1568, %v1664
        %v1666 = vpop.f32.mrf.mxu0
        %1667 = vmatprep.mubr.bf16.mxu0 0
        %1668 = vmatmul.mubr.bf16.gmra.mxu0 %v1343
        %v1669 = vpop.f32.mrf.mxu0
        %v1670 = vadd.f32 %v1573, %v1669
        %v1671 = vpop.f32.mrf.mxu0
        %v1672 = vpop.f32.mrf.mxu0
        %v1673 = vadd.f32 %v1576, %v1672
        %v1674 = vpop.f32.mrf.mxu0
        %1675 = vmatprep.mubr.bf16.mxu0 0
        %1676 = vmatmul.mubr.bf16.gmra.mxu0 %v1346
        %v1677 = vpop.f32.mrf.mxu0
        %v1678 = vadd.f32 %v1581, %v1677
        %v1679 = vpop.f32.mrf.mxu0
        %v1680 = vpop.f32.mrf.mxu0
        %v1681 = vadd.f32 %v1584, %v1680
        %v1682 = vpop.f32.mrf.mxu0
        %1683 = vmatprep.mubr.bf16.mxu0 0
        %1684 = vmatmul.mubr.bf16.gmra.mxu0 %v1349
        %v1685 = vpop.f32.mrf.mxu0
        %v1686 = vadd.f32 %v1589, %v1685
        %v1687 = vpop.f32.mrf.mxu0
        %v1688 = vpop.f32.mrf.mxu0
        %v1689 = vadd.f32 %v1592, %v1688
        %v1690 = vpop.f32.mrf.mxu0
        %1691 = vmatprep.mubr.bf16.mxu0 0
        %1692 = vmatmul.mubr.bf16.gmra.mxu0 %v1352
        %v1693 = vpop.f32.mrf.mxu0
        %v1694 = vadd.f32 %v1597, %v1693
        %v1695 = vpop.f32.mrf.mxu0
        %v1696 = vpop.f32.mrf.mxu0
        %v1697 = vadd.f32 %v1600, %v1696
        %v1698 = vpop.f32.mrf.mxu0
        %1699 = vmatprep.mubr.bf16.mxu0 0
        %1700 = vmatmul.mubr.bf16.gmra.mxu0 %v1355
        %v1701 = vpop.f32.mrf.mxu0
        %v1702 = vadd.f32 %v1605, %v1701
        %v1703 = vpop.f32.mrf.mxu0
        %v1704 = vpop.f32.mrf.mxu0
        %v1705 = vadd.f32 %v1608, %v1704
        %v1706 = vpop.f32.mrf.mxu0
        %1707 = vmatprep.mubr.bf16.mxu0 0
        %1708 = vmatmul.mubr.bf16.gmra.mxu0 %v1358
        %v1709 = vpop.f32.mrf.mxu0
        %v1710 = vadd.f32 %v1613, %v1709
        %v1711 = vpop.f32.mrf.mxu0
        %v1712 = vpop.f32.mrf.mxu0
        %v1713 = vadd.f32 %v1616, %v1712
        %v1714 = vpop.f32.mrf.mxu0
        %1715 = vmatprep.mubr.bf16.mxu0 0
        %1716 = vmatmul.mubr.bf16.gmra.mxu0 %v1361
        %v1717 = vpop.f32.mrf.mxu0
        %v1718 = vadd.f32 %v1621, %v1717
        %v1719 = vpop.f32.mrf.mxu0
        %v1720 = vpop.f32.mrf.mxu0
        %v1721 = vadd.f32 %v1624, %v1720
        %v1722 = vpop.f32.mrf.mxu0
        %1723 = vdwg.mxu0
        %vm1724 = vcmp.ge.f32.partialorder %v1662, 1.0
        %vm1725 = vcmp.ge.f32.partialorder %v1665, 1.0
        %vm1726 = vcmp.ge.f32.partialorder %v1670, 1.0
        %vm1727 = vcmp.ge.f32.partialorder %v1673, 1.0
        %vm1728 = vcmp.ge.f32.partialorder %v1678, 1.0
        %vm1729 = vcmp.ge.f32.partialorder %v1681, 1.0
        %vm1730 = vcmp.ge.f32.partialorder %v1686, 1.0
        %vm1731 = vcmp.ge.f32.partialorder %v1689, 1.0
        %vm1732 = vcmp.ge.f32.partialorder %v1694, 1.0
        %vm1733 = vcmp.ge.f32.partialorder %v1697, 1.0
        %vm1734 = vcmp.ge.f32.partialorder %v1702, 1.0
        %vm1735 = vcmp.ge.f32.partialorder %v1705, 1.0
        %vm1736 = vcmp.ge.f32.partialorder %v1710, 1.0
        %vm1737 = vcmp.ge.f32.partialorder %v1713, 1.0
        %vm1738 = vcmp.ge.f32.partialorder %v1718, 1.0
        %vm1739 = vcmp.ge.f32.partialorder %v1721, 1.0
        %v1740 = vsel %vm1724, 1.0, 0.0
        %v1741 = vsel %vm1725, 1.0, 0.0
        %v1742 = vsel %vm1726, 1.0, 0.0
        %v1743 = vsel %vm1727, 1.0, 0.0
        %v1744 = vsel %vm1728, 1.0, 0.0
        %v1745 = vsel %vm1729, 1.0, 0.0
        %v1746 = vsel %vm1730, 1.0, 0.0
        %v1747 = vsel %vm1731, 1.0, 0.0
        %v1748 = vsel %vm1732, 1.0, 0.0
        %v1749 = vsel %vm1733, 1.0, 0.0
        %v1750 = vsel %vm1734, 1.0, 0.0
        %v1751 = vsel %vm1735, 1.0, 0.0
        %v1752 = vsel %vm1736, 1.0, 0.0
        %v1753 = vsel %vm1737, 1.0, 0.0
        %v1754 = vsel %vm1738, 1.0, 0.0
        %v1755 = vsel %vm1739, 1.0, 0.0
        %v1756 = vpack.c.bf16 %v1741, %v1740
        %v1757 = vpack.c.bf16 %v1743, %v1742
        %v1758 = vpack.c.bf16 %v1745, %v1744
        %v1759 = vpack.c.bf16 %v1747, %v1746
        %v1760 = vpack.c.bf16 %v1749, %v1748
        %v1761 = vpack.c.bf16 %v1751, %v1750
        %v1762 = vpack.c.bf16 %v1753, %v1752
        %v1763 = vpack.c.bf16 %v1755, %v1754
        %v1764 = vld [vmem:[#allocation11] sm:$0xff]
        %v1765 = vld [vmem:[#allocation11 + $0x8] sm:$0xff]
        %v1766 = vld [vmem:[#allocation11 + $0x10] sm:$0xff]
        %v1767 = vld [vmem:[#allocation11 + $0x18] sm:$0xff]
        %v1768 = vld [vmem:[#allocation11 + $0x20] sm:$0xff]
        %v1769 = vld [vmem:[#allocation11 + $0x28] sm:$0xff]
        %v1770 = vld [vmem:[#allocation11 + $0x30] sm:$0xff]
        %v1771 = vld [vmem:[#allocation11 + $0x38] sm:$0xff]
        %v1772 = vld [vmem:[#allocation11 + $0x40] sm:$0xff]
        %v1773 = vld [vmem:[#allocation11 + $0x48] sm:$0xff]
        %v1774 = vld [vmem:[#allocation11 + $0x50] sm:$0xff]
        %v1775 = vld [vmem:[#allocation11 + $0x58] sm:$0xff]
        %v1776 = vld [vmem:[#allocation11 + $0x60] sm:$0xff]
        %v1777 = vld [vmem:[#allocation11 + $0x68] sm:$0xff]
        %v1778 = vld [vmem:[#allocation11 + $0x70] sm:$0xff]
        %v1779 = vld [vmem:[#allocation11 + $0x78] sm:$0xff]
        %v1780 = vld [vmem:[#allocation11 + $0x80] sm:$0xff]
        %v1781 = vld [vmem:[#allocation11 + $0x88] sm:$0xff]
        %v1782 = vld [vmem:[#allocation11 + $0x90] sm:$0xff]
        %v1783 = vld [vmem:[#allocation11 + $0x98] sm:$0xff]
        %v1784 = vld [vmem:[#allocation11 + $0xa0] sm:$0xff]
        %v1785 = vld [vmem:[#allocation11 + $0xa8] sm:$0xff]
        %v1786 = vld [vmem:[#allocation11 + $0xb0] sm:$0xff]
        %v1787 = vld [vmem:[#allocation11 + $0xb8] sm:$0xff]
        %v1788 = vld [vmem:[#allocation11 + $0xc0] sm:$0xff]
        %v1789 = vld [vmem:[#allocation11 + $0xc8] sm:$0xff]
        %v1790 = vld [vmem:[#allocation11 + $0xd0] sm:$0xff]
        %v1791 = vld [vmem:[#allocation11 + $0xd8] sm:$0xff]
        %v1792 = vld [vmem:[#allocation11 + $0xe0] sm:$0xff]
        %v1793 = vld [vmem:[#allocation11 + $0xe8] sm:$0xff]
        %v1794 = vld [vmem:[#allocation11 + $0xf0] sm:$0xff]
        %v1795 = vld [vmem:[#allocation11 + $0xf8] sm:$0xff]
        %v1796 = vld [vmem:[%s6] sm:$0xf]
        %v1798 = vlaneseq
        %v1799 = vshrl.u32 %v1798, 7
        %v1800 = vsub.s32 0, %v1799
        %v1801 = vrot.slane %v1796, %v1800
        %v1802 = vlaneseq
        %v1803 = vshrl.u32 %v1802, 7
        %v1804 = vsub.s32 1, %v1803
        %v1805 = vrot.slane %v1796, %v1804
        %v1806 = vlaneseq
        %v1807 = vshrl.u32 %v1806, 7
        %v1808 = vsub.s32 2, %v1807
        %v1809 = vrot.slane %v1796, %v1808
        %v1810 = vlaneseq
        %v1811 = vshrl.u32 %v1810, 7
        %v1812 = vsub.s32 3, %v1811
        %v1813 = vrot.slane %v1796, %v1812
        %v1850 = vunpack.c.l.b16 %v1764
        %v1851 = vunpack.c.h.b16 %v1764
        %v1852 = vunpack.c.l.b16 %v1765
        %v1853 = vunpack.c.h.b16 %v1765
        %v1854 = vunpack.c.l.b16 %v1766
        %v1855 = vunpack.c.h.b16 %v1766
        %v1856 = vunpack.c.l.b16 %v1767
        %v1857 = vunpack.c.h.b16 %v1767
        %v1858 = vunpack.c.l.b16 %v1768
        %v1859 = vunpack.c.h.b16 %v1768
        %v1860 = vunpack.c.l.b16 %v1769
        %v1861 = vunpack.c.h.b16 %v1769
        %v1862 = vunpack.c.l.b16 %v1770
        %v1863 = vunpack.c.h.b16 %v1770
        %v1864 = vunpack.c.l.b16 %v1771
        %v1865 = vunpack.c.h.b16 %v1771
        %v1866 = vunpack.c.l.b16 %v1772
        %v1867 = vunpack.c.h.b16 %v1772
        %v1868 = vunpack.c.l.b16 %v1773
        %v1869 = vunpack.c.h.b16 %v1773
        %v1870 = vunpack.c.l.b16 %v1774
        %v1871 = vunpack.c.h.b16 %v1774
        %v1872 = vunpack.c.l.b16 %v1775
        %v1873 = vunpack.c.h.b16 %v1775
        %v1874 = vunpack.c.l.b16 %v1776
        %v1875 = vunpack.c.h.b16 %v1776
        %v1876 = vunpack.c.l.b16 %v1777
        %v1877 = vunpack.c.h.b16 %v1777
        %v1878 = vunpack.c.l.b16 %v1778
        %v1879 = vunpack.c.h.b16 %v1778
        %v1880 = vunpack.c.l.b16 %v1779
        %v1881 = vunpack.c.h.b16 %v1779
        %v1882 = vunpack.c.l.b16 %v1780
        %v1883 = vunpack.c.h.b16 %v1780
        %v1884 = vunpack.c.l.b16 %v1781
        %v1885 = vunpack.c.h.b16 %v1781
        %v1886 = vunpack.c.l.b16 %v1782
        %v1887 = vunpack.c.h.b16 %v1782
        %v1888 = vunpack.c.l.b16 %v1783
        %v1889 = vunpack.c.h.b16 %v1783
        %v1890 = vunpack.c.l.b16 %v1784
        %v1891 = vunpack.c.h.b16 %v1784
        %v1892 = vunpack.c.l.b16 %v1785
        %v1893 = vunpack.c.h.b16 %v1785
        %v1894 = vunpack.c.l.b16 %v1786
        %v1895 = vunpack.c.h.b16 %v1786
        %v1896 = vunpack.c.l.b16 %v1787
        %v1897 = vunpack.c.h.b16 %v1787
        %v1898 = vunpack.c.l.b16 %v1788
        %v1899 = vunpack.c.h.b16 %v1788
        %v1900 = vunpack.c.l.b16 %v1789
        %v1901 = vunpack.c.h.b16 %v1789
        %v1902 = vunpack.c.l.b16 %v1790
        %v1903 = vunpack.c.h.b16 %v1790
        %v1904 = vunpack.c.l.b16 %v1791
        %v1905 = vunpack.c.h.b16 %v1791
        %v1906 = vunpack.c.l.b16 %v1792
        %v1907 = vunpack.c.h.b16 %v1792
        %v1908 = vunpack.c.l.b16 %v1793
        %v1909 = vunpack.c.h.b16 %v1793
        %v1910 = vunpack.c.l.b16 %v1794
        %v1911 = vunpack.c.h.b16 %v1794
        %v1912 = vunpack.c.l.b16 %v1795
        %v1913 = vunpack.c.h.b16 %v1795
        %v1914 = vpack.c.b16 %v1854, %v1850
        %v1915 = vpack.c.b16 %v1855, %v1851
        %v1916 = vpack.c.b16 %v1856, %v1852
        %v1917 = vpack.c.b16 %v1857, %v1853
        %v1918 = vpack.c.b16 %v1862, %v1858
        %v1919 = vpack.c.b16 %v1863, %v1859
        %v1920 = vpack.c.b16 %v1864, %v1860
        %v1921 = vpack.c.b16 %v1865, %v1861
        %v1922 = vpack.c.b16 %v1870, %v1866
        %v1923 = vpack.c.b16 %v1871, %v1867
        %v1924 = vpack.c.b16 %v1872, %v1868
        %v1925 = vpack.c.b16 %v1873, %v1869
        %v1926 = vpack.c.b16 %v1878, %v1874
        %v1927 = vpack.c.b16 %v1879, %v1875
        %v1928 = vpack.c.b16 %v1880, %v1876
        %v1929 = vpack.c.b16 %v1881, %v1877
        %v1930 = vpack.c.b16 %v1886, %v1882
        %v1931 = vpack.c.b16 %v1887, %v1883
        %v1932 = vpack.c.b16 %v1888, %v1884
        %v1933 = vpack.c.b16 %v1889, %v1885
        %v1934 = vpack.c.b16 %v1894, %v1890
        %v1935 = vpack.c.b16 %v1895, %v1891
        %v1936 = vpack.c.b16 %v1896, %v1892
        %v1937 = vpack.c.b16 %v1897, %v1893
        %v1938 = vpack.c.b16 %v1902, %v1898
        %v1939 = vpack.c.b16 %v1903, %v1899
        %v1940 = vpack.c.b16 %v1904, %v1900
        %v1941 = vpack.c.b16 %v1905, %v1901
        %v1942 = vpack.c.b16 %v1910, %v1906
        %v1943 = vpack.c.b16 %v1911, %v1907
        %v1944 = vpack.c.b16 %v1912, %v1908
        %v1945 = vpack.c.b16 %v1913, %v1909
        %1978 = vmatprep.subr.bf16.mxu0 %v1943
        %1979 = vmatpush1.bf16.msra.mxu0 %v1942
        %1980 = vmatprep.subr.bf16.mxu0 %v1939
        %1981 = vmatpush1.bf16.msra.mxu0 %v1938
        %1982 = vmatprep.subr.bf16.mxu0 %v1935
        %1983 = vmatpush1.bf16.msra.mxu0 %v1934
        %1984 = vmatprep.subr.bf16.mxu0 %v1931
        %1985 = vmatpush1.bf16.msra.mxu0 %v1930
        %1986 = vmatprep.subr.bf16.mxu0 %v1927
        %1987 = vmatpush1.bf16.msra.mxu0 %v1926
        %1988 = vmatprep.subr.bf16.mxu0 %v1923
        %1989 = vmatpush1.bf16.msra.mxu0 %v1922
        %1990 = vmatprep.subr.bf16.mxu0 %v1919
        %1991 = vmatpush1.bf16.msra.mxu0 %v1918
        %1992 = vmatprep.subr.bf16.mxu0 %v1915
        %1993 = vmatpush1.bf16.msra.mxu0 %v1914
        %1994 = vmatprep.subr.bf16.mxu0 0
        %1995 = vmatpush2.bf16.msra.mxu0 0
        %1996 = vmatprep.subr.bf16.mxu0 0
        %1997 = vmatpush2.bf16.msra.mxu0 0
        %1998 = vmatprep.subr.bf16.mxu0 0
        %1999 = vmatpush2.bf16.msra.mxu0 0
        %2000 = vmatprep.subr.bf16.mxu0 0
        %2001 = vmatpush2.bf16.msra.mxu0 0
        %2002 = vmatprep.subr.bf16.mxu0 0
        %2003 = vmatpush2.bf16.msra.mxu0 0
        %2004 = vmatprep.subr.bf16.mxu0 0
        %2005 = vmatpush2.bf16.msra.mxu0 0
        %2006 = vmatprep.subr.bf16.mxu0 0
        %2007 = vmatpush2.bf16.msra.mxu0 0
        %2008 = vmatprep.subr.bf16.mxu0 0
        %2009 = vmatpush2.bf16.msra.mxu0 0
        %2010 = vmatprep.mubr.bf16.mxu0 0
        %2011 = vmatmul.mubr.bf16.gmra.mxu0 %v1756
        %v2012 = vpop.f32.mrf.mxu0
        %v2013 = vadd.f32 %v1801, %v2012
        %v2014 = vpop.f32.mrf.mxu0
        %v2015 = vadd.f32 %v1805, %v2014
        %v2016 = vpop.f32.mrf.mxu0
        %v2017 = vadd.f32 %v1801, %v2016
        %v2018 = vpop.f32.mrf.mxu0
        %v2019 = vadd.f32 %v1805, %v2018
        %2020 = vmatprep.mubr.bf16.mxu0 0
        %2021 = vmatmul.mubr.bf16.gmra.mxu0 %v1757
        %v2022 = vpop.f32.mrf.mxu0
        %v2023 = vadd.f32 %v1801, %v2022
        %v2024 = vpop.f32.mrf.mxu0
        %v2025 = vadd.f32 %v1805, %v2024
        %v2026 = vpop.f32.mrf.mxu0
        %v2027 = vadd.f32 %v1801, %v2026
        %v2028 = vpop.f32.mrf.mxu0
        %v2029 = vadd.f32 %v1805, %v2028
        %2030 = vmatprep.mubr.bf16.mxu0 0
        %2031 = vmatmul.mubr.bf16.gmra.mxu0 %v1758
        %v2032 = vpop.f32.mrf.mxu0
        %v2033 = vadd.f32 %v1801, %v2032
        %v2034 = vpop.f32.mrf.mxu0
        %v2035 = vadd.f32 %v1805, %v2034
        %v2036 = vpop.f32.mrf.mxu0
        %v2037 = vadd.f32 %v1801, %v2036
        %v2038 = vpop.f32.mrf.mxu0
        %v2039 = vadd.f32 %v1805, %v2038
        %2040 = vmatprep.mubr.bf16.mxu0 0
        %2041 = vmatmul.mubr.bf16.gmra.mxu0 %v1759
        %v2042 = vpop.f32.mrf.mxu0
        %v2043 = vadd.f32 %v1801, %v2042
        %v2044 = vpop.f32.mrf.mxu0
        %v2045 = vadd.f32 %v1805, %v2044
        %v2046 = vpop.f32.mrf.mxu0
        %v2047 = vadd.f32 %v1801, %v2046
        %v2048 = vpop.f32.mrf.mxu0
        %v2049 = vadd.f32 %v1805, %v2048
        %2050 = vmatprep.mubr.bf16.mxu0 0
        %2051 = vmatmul.mubr.bf16.gmra.mxu0 %v1760
        %v2052 = vpop.f32.mrf.mxu0
        %v2053 = vadd.f32 %v1801, %v2052
        %v2054 = vpop.f32.mrf.mxu0
        %v2055 = vadd.f32 %v1805, %v2054
        %v2056 = vpop.f32.mrf.mxu0
        %v2057 = vadd.f32 %v1801, %v2056
        %v2058 = vpop.f32.mrf.mxu0
        %v2059 = vadd.f32 %v1805, %v2058
        %2060 = vmatprep.mubr.bf16.mxu0 0
        %2061 = vmatmul.mubr.bf16.gmra.mxu0 %v1761
        %v2062 = vpop.f32.mrf.mxu0
        %v2063 = vadd.f32 %v1801, %v2062
        %v2064 = vpop.f32.mrf.mxu0
        %v2065 = vadd.f32 %v1805, %v2064
        %v2066 = vpop.f32.mrf.mxu0
        %v2067 = vadd.f32 %v1801, %v2066
        %v2068 = vpop.f32.mrf.mxu0
        %v2069 = vadd.f32 %v1805, %v2068
        %2070 = vmatprep.mubr.bf16.mxu0 0
        %2071 = vmatmul.mubr.bf16.gmra.mxu0 %v1762
        %v2072 = vpop.f32.mrf.mxu0
        %v2073 = vadd.f32 %v1801, %v2072
        %v2074 = vpop.f32.mrf.mxu0
        %v2075 = vadd.f32 %v1805, %v2074
        %v2076 = vpop.f32.mrf.mxu0
        %v2077 = vadd.f32 %v1801, %v2076
        %v2078 = vpop.f32.mrf.mxu0
        %v2079 = vadd.f32 %v1805, %v2078
        %2080 = vmatprep.mubr.bf16.mxu0 0
        %2081 = vmatmul.mubr.bf16.gmra.mxu0 %v1763
        %v2082 = vpop.f32.mrf.mxu0
        %v2083 = vadd.f32 %v1801, %v2082
        %v2084 = vpop.f32.mrf.mxu0
        %v2085 = vadd.f32 %v1805, %v2084
        %v2086 = vpop.f32.mrf.mxu0
        %v2087 = vadd.f32 %v1801, %v2086
        %v2088 = vpop.f32.mrf.mxu0
        %v2089 = vadd.f32 %v1805, %v2088
        %2090 = vdwg.mxu0
        %2091 = vmatprep.subr.bf16.mxu0 %v1945
        %2092 = vmatpush1.bf16.msra.mxu0 %v1944
        %2093 = vmatprep.subr.bf16.mxu0 %v1941
        %2094 = vmatpush1.bf16.msra.mxu0 %v1940
        %2095 = vmatprep.subr.bf16.mxu0 %v1937
        %2096 = vmatpush1.bf16.msra.mxu0 %v1936
        %2097 = vmatprep.subr.bf16.mxu0 %v1933
        %2098 = vmatpush1.bf16.msra.mxu0 %v1932
        %2099 = vmatprep.subr.bf16.mxu0 %v1929
        %2100 = vmatpush1.bf16.msra.mxu0 %v1928
        %2101 = vmatprep.subr.bf16.mxu0 %v1925
        %2102 = vmatpush1.bf16.msra.mxu0 %v1924
        %2103 = vmatprep.subr.bf16.mxu0 %v1921
        %2104 = vmatpush1.bf16.msra.mxu0 %v1920
        %2105 = vmatprep.subr.bf16.mxu0 %v1917
        %2106 = vmatpush1.bf16.msra.mxu0 %v1916
        %2107 = vmatprep.subr.bf16.mxu0 0
        %2108 = vmatpush2.bf16.msra.mxu0 0
        %2109 = vmatprep.subr.bf16.mxu0 0
        %2110 = vmatpush2.bf16.msra.mxu0 0
        %2111 = vmatprep.subr.bf16.mxu0 0
        %2112 = vmatpush2.bf16.msra.mxu0 0
        %2113 = vmatprep.subr.bf16.mxu0 0
        %2114 = vmatpush2.bf16.msra.mxu0 0
        %2115 = vmatprep.subr.bf16.mxu0 0
        %2116 = vmatpush2.bf16.msra.mxu0 0
        %2117 = vmatprep.subr.bf16.mxu0 0
        %2118 = vmatpush2.bf16.msra.mxu0 0
        %2119 = vmatprep.subr.bf16.mxu0 0
        %2120 = vmatpush2.bf16.msra.mxu0 0
        %2121 = vmatprep.subr.bf16.mxu0 0
        %2122 = vmatpush2.bf16.msra.mxu0 0
        %2123 = vmatprep.mubr.bf16.mxu0 0
        %2124 = vmatmul.mubr.bf16.gmra.mxu0 %v1756
        %v2125 = vpop.f32.mrf.mxu0
        %v2126 = vadd.f32 %v1809, %v2125
        %v2127 = vpop.f32.mrf.mxu0
        %v2128 = vadd.f32 %v1813, %v2127
        %v2129 = vpop.f32.mrf.mxu0
        %v2130 = vadd.f32 %v1809, %v2129
        %v2131 = vpop.f32.mrf.mxu0
        %v2132 = vadd.f32 %v1813, %v2131
        %2133 = vmatprep.mubr.bf16.mxu0 0
        %2134 = vmatmul.mubr.bf16.gmra.mxu0 %v1757
        %v2135 = vpop.f32.mrf.mxu0
        %v2136 = vadd.f32 %v1809, %v2135
        %v2137 = vpop.f32.mrf.mxu0
        %v2138 = vadd.f32 %v1813, %v2137
        %v2139 = vpop.f32.mrf.mxu0
        %v2140 = vadd.f32 %v1809, %v2139
        %v2141 = vpop.f32.mrf.mxu0
        %v2142 = vadd.f32 %v1813, %v2141
        %2143 = vmatprep.mubr.bf16.mxu0 0
        %2144 = vmatmul.mubr.bf16.gmra.mxu0 %v1758
        %v2145 = vpop.f32.mrf.mxu0
        %v2146 = vadd.f32 %v1809, %v2145
        %v2147 = vpop.f32.mrf.mxu0
        %v2148 = vadd.f32 %v1813, %v2147
        %v2149 = vpop.f32.mrf.mxu0
        %v2150 = vadd.f32 %v1809, %v2149
        %v2151 = vpop.f32.mrf.mxu0
        %v2152 = vadd.f32 %v1813, %v2151
        %2153 = vmatprep.mubr.bf16.mxu0 0
        %2154 = vmatmul.mubr.bf16.gmra.mxu0 %v1759
        %v2155 = vpop.f32.mrf.mxu0
        %v2156 = vadd.f32 %v1809, %v2155
        %v2157 = vpop.f32.mrf.mxu0
        %v2158 = vadd.f32 %v1813, %v2157
        %v2159 = vpop.f32.mrf.mxu0
        %v2160 = vadd.f32 %v1809, %v2159
        %v2161 = vpop.f32.mrf.mxu0
        %v2162 = vadd.f32 %v1813, %v2161
        %2163 = vmatprep.mubr.bf16.mxu0 0
        %2164 = vmatmul.mubr.bf16.gmra.mxu0 %v1760
        %v2165 = vpop.f32.mrf.mxu0
        %v2166 = vadd.f32 %v1809, %v2165
        %v2167 = vpop.f32.mrf.mxu0
        %v2168 = vadd.f32 %v1813, %v2167
        %v2169 = vpop.f32.mrf.mxu0
        %v2170 = vadd.f32 %v1809, %v2169
        %v2171 = vpop.f32.mrf.mxu0
        %v2172 = vadd.f32 %v1813, %v2171
        %2173 = vmatprep.mubr.bf16.mxu0 0
        %2174 = vmatmul.mubr.bf16.gmra.mxu0 %v1761
        %v2175 = vpop.f32.mrf.mxu0
        %v2176 = vadd.f32 %v1809, %v2175
        %v2177 = vpop.f32.mrf.mxu0
        %v2178 = vadd.f32 %v1813, %v2177
        %v2179 = vpop.f32.mrf.mxu0
        %v2180 = vadd.f32 %v1809, %v2179
        %v2181 = vpop.f32.mrf.mxu0
        %v2182 = vadd.f32 %v1813, %v2181
        %2183 = vmatprep.mubr.bf16.mxu0 0
        %2184 = vmatmul.mubr.bf16.gmra.mxu0 %v1762
        %v2185 = vpop.f32.mrf.mxu0
        %v2186 = vadd.f32 %v1809, %v2185
        %v2187 = vpop.f32.mrf.mxu0
        %v2188 = vadd.f32 %v1813, %v2187
        %v2189 = vpop.f32.mrf.mxu0
        %v2190 = vadd.f32 %v1809, %v2189
        %v2191 = vpop.f32.mrf.mxu0
        %v2192 = vadd.f32 %v1813, %v2191
        %2193 = vmatprep.mubr.bf16.mxu0 0
        %2194 = vmatmul.mubr.bf16.gmra.mxu0 %v1763
        %v2195 = vpop.f32.mrf.mxu0
        %v2196 = vadd.f32 %v1809, %v2195
        %v2197 = vpop.f32.mrf.mxu0
        %v2198 = vadd.f32 %v1813, %v2197
        %v2199 = vpop.f32.mrf.mxu0
        %v2200 = vadd.f32 %v1809, %v2199
        %v2201 = vpop.f32.mrf.mxu0
        %v2202 = vadd.f32 %v1813, %v2201
        %2203 = vdwg.mxu0
        %vm2204 = vcmp.ge.f32.partialorder %v2013, 1.0
        %vm2205 = vcmp.ge.f32.partialorder %v2015, 1.0
        %vm2206 = vcmp.ge.f32.partialorder %v2126, 1.0
        %vm2207 = vcmp.ge.f32.partialorder %v2128, 1.0
        %vm2208 = vcmp.ge.f32.partialorder %v2017, 1.0
        %vm2209 = vcmp.ge.f32.partialorder %v2019, 1.0
        %vm2210 = vcmp.ge.f32.partialorder %v2130, 1.0
        %vm2211 = vcmp.ge.f32.partialorder %v2132, 1.0
        %vm2212 = vcmp.ge.f32.partialorder %v2023, 1.0
        %vm2213 = vcmp.ge.f32.partialorder %v2025, 1.0
        %vm2214 = vcmp.ge.f32.partialorder %v2136, 1.0
        %vm2215 = vcmp.ge.f32.partialorder %v2138, 1.0
        %vm2216 = vcmp.ge.f32.partialorder %v2027, 1.0
        %vm2217 = vcmp.ge.f32.partialorder %v2029, 1.0
        %vm2218 = vcmp.ge.f32.partialorder %v2140, 1.0
        %vm2219 = vcmp.ge.f32.partialorder %v2142, 1.0
        %vm2220 = vcmp.ge.f32.partialorder %v2033, 1.0
        %vm2221 = vcmp.ge.f32.partialorder %v2035, 1.0
        %vm2222 = vcmp.ge.f32.partialorder %v2146, 1.0
        %vm2223 = vcmp.ge.f32.partialorder %v2148, 1.0
        %vm2224 = vcmp.ge.f32.partialorder %v2037, 1.0
        %vm2225 = vcmp.ge.f32.partialorder %v2039, 1.0
        %vm2226 = vcmp.ge.f32.partialorder %v2150, 1.0
        %vm2227 = vcmp.ge.f32.partialorder %v2152, 1.0
        %vm2228 = vcmp.ge.f32.partialorder %v2043, 1.0
        %vm2229 = vcmp.ge.f32.partialorder %v2045, 1.0
        %vm2230 = vcmp.ge.f32.partialorder %v2156, 1.0
        %vm2231 = vcmp.ge.f32.partialorder %v2158, 1.0
        %vm2232 = vcmp.ge.f32.partialorder %v2047, 1.0
        %vm2233 = vcmp.ge.f32.partialorder %v2049, 1.0
        %vm2234 = vcmp.ge.f32.partialorder %v2160, 1.0
        %vm2235 = vcmp.ge.f32.partialorder %v2162, 1.0
        %vm2236 = vcmp.ge.f32.partialorder %v2053, 1.0
        %vm2237 = vcmp.ge.f32.partialorder %v2055, 1.0
        %vm2238 = vcmp.ge.f32.partialorder %v2166, 1.0
        %vm2239 = vcmp.ge.f32.partialorder %v2168, 1.0
        %vm2240 = vcmp.ge.f32.partialorder %v2057, 1.0
        %vm2241 = vcmp.ge.f32.partialorder %v2059, 1.0
        %vm2242 = vcmp.ge.f32.partialorder %v2170, 1.0
        %vm2243 = vcmp.ge.f32.partialorder %v2172, 1.0
        %vm2244 = vcmp.ge.f32.partialorder %v2063, 1.0
        %vm2245 = vcmp.ge.f32.partialorder %v2065, 1.0
        %vm2246 = vcmp.ge.f32.partialorder %v2176, 1.0
        %vm2247 = vcmp.ge.f32.partialorder %v2178, 1.0
        %vm2248 = vcmp.ge.f32.partialorder %v2067, 1.0
        %vm2249 = vcmp.ge.f32.partialorder %v2069, 1.0
        %vm2250 = vcmp.ge.f32.partialorder %v2180, 1.0
        %vm2251 = vcmp.ge.f32.partialorder %v2182, 1.0
        %vm2252 = vcmp.ge.f32.partialorder %v2073, 1.0
        %vm2253 = vcmp.ge.f32.partialorder %v2075, 1.0
        %vm2254 = vcmp.ge.f32.partialorder %v2186, 1.0
        %vm2255 = vcmp.ge.f32.partialorder %v2188, 1.0
        %vm2256 = vcmp.ge.f32.partialorder %v2077, 1.0
        %vm2257 = vcmp.ge.f32.partialorder %v2079, 1.0
        %vm2258 = vcmp.ge.f32.partialorder %v2190, 1.0
        %vm2259 = vcmp.ge.f32.partialorder %v2192, 1.0
        %vm2260 = vcmp.ge.f32.partialorder %v2083, 1.0
        %vm2261 = vcmp.ge.f32.partialorder %v2085, 1.0
        %vm2262 = vcmp.ge.f32.partialorder %v2196, 1.0
        %vm2263 = vcmp.ge.f32.partialorder %v2198, 1.0
        %vm2264 = vcmp.ge.f32.partialorder %v2087, 1.0
        %vm2265 = vcmp.ge.f32.partialorder %v2089, 1.0
        %vm2266 = vcmp.ge.f32.partialorder %v2200, 1.0
        %vm2267 = vcmp.ge.f32.partialorder %v2202, 1.0
        %v2268 = vsel %vm2204, 1.0, 0.0
        %v2269 = vsel %vm2205, 1.0, 0.0
        %v2270 = vsel %vm2206, 1.0, 0.0
        %v2271 = vsel %vm2207, 1.0, 0.0
        %v2272 = vsel %vm2208, 1.0, 0.0
        %v2273 = vsel %vm2209, 1.0, 0.0
        %v2274 = vsel %vm2210, 1.0, 0.0
        %v2275 = vsel %vm2211, 1.0, 0.0
        %v2276 = vsel %vm2212, 1.0, 0.0
        %v2277 = vsel %vm2213, 1.0, 0.0
        %v2278 = vsel %vm2214, 1.0, 0.0
        %v2279 = vsel %vm2215, 1.0, 0.0
        %v2280 = vsel %vm2216, 1.0, 0.0
        %v2281 = vsel %vm2217, 1.0, 0.0
        %v2282 = vsel %vm2218, 1.0, 0.0
        %v2283 = vsel %vm2219, 1.0, 0.0
        %v2284 = vsel %vm2220, 1.0, 0.0
        %v2285 = vsel %vm2221, 1.0, 0.0
        %v2286 = vsel %vm2222, 1.0, 0.0
        %v2287 = vsel %vm2223, 1.0, 0.0
        %v2288 = vsel %vm2224, 1.0, 0.0
        %v2289 = vsel %vm2225, 1.0, 0.0
        %v2290 = vsel %vm2226, 1.0, 0.0
        %v2291 = vsel %vm2227, 1.0, 0.0
        %v2292 = vsel %vm2228, 1.0, 0.0
        %v2293 = vsel %vm2229, 1.0, 0.0
        %v2294 = vsel %vm2230, 1.0, 0.0
        %v2295 = vsel %vm2231, 1.0, 0.0
        %v2296 = vsel %vm2232, 1.0, 0.0
        %v2297 = vsel %vm2233, 1.0, 0.0
        %v2298 = vsel %vm2234, 1.0, 0.0
        %v2299 = vsel %vm2235, 1.0, 0.0
        %v2300 = vsel %vm2236, 1.0, 0.0
        %v2301 = vsel %vm2237, 1.0, 0.0
        %v2302 = vsel %vm2238, 1.0, 0.0
        %v2303 = vsel %vm2239, 1.0, 0.0
        %v2304 = vsel %vm2240, 1.0, 0.0
        %v2305 = vsel %vm2241, 1.0, 0.0
        %v2306 = vsel %vm2242, 1.0, 0.0
        %v2307 = vsel %vm2243, 1.0, 0.0
        %v2308 = vsel %vm2244, 1.0, 0.0
        %v2309 = vsel %vm2245, 1.0, 0.0
        %v2310 = vsel %vm2246, 1.0, 0.0
        %v2311 = vsel %vm2247, 1.0, 0.0
        %v2312 = vsel %vm2248, 1.0, 0.0
        %v2313 = vsel %vm2249, 1.0, 0.0
        %v2314 = vsel %vm2250, 1.0, 0.0
        %v2315 = vsel %vm2251, 1.0, 0.0
        %v2316 = vsel %vm2252, 1.0, 0.0
        %v2317 = vsel %vm2253, 1.0, 0.0
        %v2318 = vsel %vm2254, 1.0, 0.0
        %v2319 = vsel %vm2255, 1.0, 0.0
        %v2320 = vsel %vm2256, 1.0, 0.0
        %v2321 = vsel %vm2257, 1.0, 0.0
        %v2322 = vsel %vm2258, 1.0, 0.0
        %v2323 = vsel %vm2259, 1.0, 0.0
        %v2324 = vsel %vm2260, 1.0, 0.0
        %v2325 = vsel %vm2261, 1.0, 0.0
        %v2326 = vsel %vm2262, 1.0, 0.0
        %v2327 = vsel %vm2263, 1.0, 0.0
        %v2328 = vsel %vm2264, 1.0, 0.0
        %v2329 = vsel %vm2265, 1.0, 0.0
        %v2330 = vsel %vm2266, 1.0, 0.0
        %v2331 = vsel %vm2267, 1.0, 0.0
        %v2332 = vld [vmem:[#allocation12] sm:$0xff]
        %v2333 = vld [vmem:[#allocation12 + $0x8] sm:$0xff]
        %v2334 = vld [vmem:[#allocation12 + $0x10] sm:$0xff]
        %v2335 = vld [vmem:[#allocation12 + $0x18] sm:$0xff]
        %v2336 = vld [vmem:[#allocation12 + $0x20] sm:$0xff]
        %v2337 = vld [vmem:[#allocation12 + $0x28] sm:$0xff]
        %v2338 = vld [vmem:[#allocation12 + $0x30] sm:$0xff]
        %v2339 = vld [vmem:[#allocation12 + $0x38] sm:$0xff]
        %v2340 = vld [vmem:[#allocation12 + $0x40] sm:$0xff]
        %v2341 = vld [vmem:[#allocation12 + $0x48] sm:$0xff]
        %v2342 = vld [vmem:[#allocation12 + $0x50] sm:$0xff]
        %v2343 = vld [vmem:[#allocation12 + $0x58] sm:$0xff]
        %v2344 = vld [vmem:[#allocation12 + $0x60] sm:$0xff]
        %v2345 = vld [vmem:[#allocation12 + $0x68] sm:$0xff]
        %v2346 = vld [vmem:[#allocation12 + $0x70] sm:$0xff]
        %v2347 = vld [vmem:[#allocation12 + $0x78] sm:$0xff]
        %v2348 = vld [vmem:[#allocation12 + $0x80] sm:$0xff]
        %v2349 = vld [vmem:[#allocation12 + $0x88] sm:$0xff]
        %v2350 = vld [vmem:[#allocation12 + $0x90] sm:$0xff]
        %v2351 = vld [vmem:[#allocation12 + $0x98] sm:$0xff]
        %v2352 = vld [vmem:[#allocation12 + $0xa0] sm:$0xff]
        %v2353 = vld [vmem:[#allocation12 + $0xa8] sm:$0xff]
        %v2354 = vld [vmem:[#allocation12 + $0xb0] sm:$0xff]
        %v2355 = vld [vmem:[#allocation12 + $0xb8] sm:$0xff]
        %v2356 = vld [vmem:[#allocation12 + $0xc0] sm:$0xff]
        %v2357 = vld [vmem:[#allocation12 + $0xc8] sm:$0xff]
        %v2358 = vld [vmem:[#allocation12 + $0xd0] sm:$0xff]
        %v2359 = vld [vmem:[#allocation12 + $0xd8] sm:$0xff]
        %v2360 = vld [vmem:[#allocation12 + $0xe0] sm:$0xff]
        %v2361 = vld [vmem:[#allocation12 + $0xe8] sm:$0xff]
        %v2362 = vld [vmem:[#allocation12 + $0xf0] sm:$0xff]
        %v2363 = vld [vmem:[#allocation12 + $0xf8] sm:$0xff]
        %v2364 = vld [vmem:[#allocation12 + $0x100] sm:$0xff]
        %v2365 = vld [vmem:[#allocation12 + $0x108] sm:$0xff]
        %v2366 = vld [vmem:[#allocation12 + $0x110] sm:$0xff]
        %v2367 = vld [vmem:[#allocation12 + $0x118] sm:$0xff]
        %v2368 = vld [vmem:[#allocation12 + $0x120] sm:$0xff]
        %v2369 = vld [vmem:[#allocation12 + $0x128] sm:$0xff]
        %v2370 = vld [vmem:[#allocation12 + $0x130] sm:$0xff]
        %v2371 = vld [vmem:[#allocation12 + $0x138] sm:$0xff]
        %v2372 = vld [vmem:[#allocation12 + $0x140] sm:$0xff]
        %v2373 = vld [vmem:[#allocation12 + $0x148] sm:$0xff]
        %v2374 = vld [vmem:[#allocation12 + $0x150] sm:$0xff]
        %v2375 = vld [vmem:[#allocation12 + $0x158] sm:$0xff]
        %v2376 = vld [vmem:[#allocation12 + $0x160] sm:$0xff]
        %v2377 = vld [vmem:[#allocation12 + $0x168] sm:$0xff]
        %v2378 = vld [vmem:[#allocation12 + $0x170] sm:$0xff]
        %v2379 = vld [vmem:[#allocation12 + $0x178] sm:$0xff]
        %v2380 = vld [vmem:[#allocation12 + $0x180] sm:$0xff]
        %v2381 = vld [vmem:[#allocation12 + $0x188] sm:$0xff]
        %v2382 = vld [vmem:[#allocation12 + $0x190] sm:$0xff]
        %v2383 = vld [vmem:[#allocation12 + $0x198] sm:$0xff]
        %v2384 = vld [vmem:[#allocation12 + $0x1a0] sm:$0xff]
        %v2385 = vld [vmem:[#allocation12 + $0x1a8] sm:$0xff]
        %v2386 = vld [vmem:[#allocation12 + $0x1b0] sm:$0xff]
        %v2387 = vld [vmem:[#allocation12 + $0x1b8] sm:$0xff]
        %v2388 = vld [vmem:[#allocation12 + $0x1c0] sm:$0xff]
        %v2389 = vld [vmem:[#allocation12 + $0x1c8] sm:$0xff]
        %v2390 = vld [vmem:[#allocation12 + $0x1d0] sm:$0xff]
        %v2391 = vld [vmem:[#allocation12 + $0x1d8] sm:$0xff]
        %v2392 = vld [vmem:[#allocation12 + $0x1e0] sm:$0xff]
        %v2393 = vld [vmem:[#allocation12 + $0x1e8] sm:$0xff]
        %v2394 = vld [vmem:[#allocation12 + $0x1f0] sm:$0xff]
        %v2395 = vld [vmem:[#allocation12 + $0x1f8] sm:$0xff]
        %v2396 = vld [vmem:[%s8] sm:$0xf]
        %v2398 = vlaneseq
        %v2399 = vshrl.u32 %v2398, 7
        %v2400 = vsub.s32 0, %v2399
        %v2401 = vrot.slane %v2396, %v2400
        %v2402 = vlaneseq
        %v2403 = vshrl.u32 %v2402, 7
        %v2404 = vsub.s32 1, %v2403
        %v2405 = vrot.slane %v2396, %v2404
        %v2406 = vlaneseq
        %v2407 = vshrl.u32 %v2406, 7
        %v2408 = vsub.s32 2, %v2407
        %v2409 = vrot.slane %v2396, %v2408
        %v2410 = vlaneseq
        %v2411 = vshrl.u32 %v2410, 7
        %v2412 = vsub.s32 3, %v2411
        %v2413 = vrot.slane %v2396, %v2412
        %v2418 = vpack.c.b16 %v530, %v526
        %v2419 = vpack.c.b16 %v531, %v527
        %v2420 = vpack.c.b16 %v538, %v534
        %v2421 = vpack.c.b16 %v539, %v535
        %v2422 = vpack.c.b16 %v546, %v542
        %v2423 = vpack.c.b16 %v547, %v543
        %v2424 = vpack.c.b16 %v554, %v550
        %v2425 = vpack.c.b16 %v555, %v551
        %v2426 = vpack.c.b16 %v562, %v558
        %v2427 = vpack.c.b16 %v563, %v559
        %v2428 = vpack.c.b16 %v570, %v566
        %v2429 = vpack.c.b16 %v571, %v567
        %v2430 = vpack.c.b16 %v578, %v574
        %v2431 = vpack.c.b16 %v579, %v575
        %v2432 = vpack.c.b16 %v586, %v582
        %v2433 = vpack.c.b16 %v587, %v583
        %v2514 = vunpack.c.l.b16 %v2332
        %v2515 = vunpack.c.h.b16 %v2332
        %v2516 = vunpack.c.l.b16 %v2333
        %v2517 = vunpack.c.h.b16 %v2333
        %v2518 = vunpack.c.l.b16 %v2334
        %v2519 = vunpack.c.h.b16 %v2334
        %v2520 = vunpack.c.l.b16 %v2335
        %v2521 = vunpack.c.h.b16 %v2335
        %v2522 = vunpack.c.l.b16 %v2336
        %v2523 = vunpack.c.h.b16 %v2336
        %v2524 = vunpack.c.l.b16 %v2337
        %v2525 = vunpack.c.h.b16 %v2337
        %v2526 = vunpack.c.l.b16 %v2338
        %v2527 = vunpack.c.h.b16 %v2338
        %v2528 = vunpack.c.l.b16 %v2339
        %v2529 = vunpack.c.h.b16 %v2339
        %v2530 = vunpack.c.l.b16 %v2340
        %v2531 = vunpack.c.h.b16 %v2340
        %v2532 = vunpack.c.l.b16 %v2341
        %v2533 = vunpack.c.h.b16 %v2341
        %v2534 = vunpack.c.l.b16 %v2342
        %v2535 = vunpack.c.h.b16 %v2342
        %v2536 = vunpack.c.l.b16 %v2343
        %v2537 = vunpack.c.h.b16 %v2343
        %v2538 = vunpack.c.l.b16 %v2344
        %v2539 = vunpack.c.h.b16 %v2344
        %v2540 = vunpack.c.l.b16 %v2345
        %v2541 = vunpack.c.h.b16 %v2345
        %v2542 = vunpack.c.l.b16 %v2346
        %v2543 = vunpack.c.h.b16 %v2346
        %v2544 = vunpack.c.l.b16 %v2347
        %v2545 = vunpack.c.h.b16 %v2347
        %v2546 = vunpack.c.l.b16 %v2348
        %v2547 = vunpack.c.h.b16 %v2348
        %v2548 = vunpack.c.l.b16 %v2349
        %v2549 = vunpack.c.h.b16 %v2349
        %v2550 = vunpack.c.l.b16 %v2350
        %v2551 = vunpack.c.h.b16 %v2350
        %v2552 = vunpack.c.l.b16 %v2351
        %v2553 = vunpack.c.h.b16 %v2351
        %v2554 = vunpack.c.l.b16 %v2352
        %v2555 = vunpack.c.h.b16 %v2352
        %v2556 = vunpack.c.l.b16 %v2353
        %v2557 = vunpack.c.h.b16 %v2353
        %v2558 = vunpack.c.l.b16 %v2354
        %v2559 = vunpack.c.h.b16 %v2354
        %v2560 = vunpack.c.l.b16 %v2355
        %v2561 = vunpack.c.h.b16 %v2355
        %v2562 = vunpack.c.l.b16 %v2356
        %v2563 = vunpack.c.h.b16 %v2356
        %v2564 = vunpack.c.l.b16 %v2357
        %v2565 = vunpack.c.h.b16 %v2357
        %v2566 = vunpack.c.l.b16 %v2358
        %v2567 = vunpack.c.h.b16 %v2358
        %v2568 = vunpack.c.l.b16 %v2359
        %v2569 = vunpack.c.h.b16 %v2359
        %v2570 = vunpack.c.l.b16 %v2360
        %v2571 = vunpack.c.h.b16 %v2360
        %v2572 = vunpack.c.l.b16 %v2361
        %v2573 = vunpack.c.h.b16 %v2361
        %v2574 = vunpack.c.l.b16 %v2362
        %v2575 = vunpack.c.h.b16 %v2362
        %v2576 = vunpack.c.l.b16 %v2363
        %v2577 = vunpack.c.h.b16 %v2363
        %v2578 = vunpack.c.l.b16 %v2364
        %v2579 = vunpack.c.h.b16 %v2364
        %v2580 = vunpack.c.l.b16 %v2365
        %v2581 = vunpack.c.h.b16 %v2365
        %v2582 = vunpack.c.l.b16 %v2366
        %v2583 = vunpack.c.h.b16 %v2366
        %v2584 = vunpack.c.l.b16 %v2367
        %v2585 = vunpack.c.h.b16 %v2367
        %v2586 = vunpack.c.l.b16 %v2368
        %v2587 = vunpack.c.h.b16 %v2368
        %v2588 = vunpack.c.l.b16 %v2369
        %v2589 = vunpack.c.h.b16 %v2369
        %v2590 = vunpack.c.l.b16 %v2370
        %v2591 = vunpack.c.h.b16 %v2370
        %v2592 = vunpack.c.l.b16 %v2371
        %v2593 = vunpack.c.h.b16 %v2371
        %v2594 = vunpack.c.l.b16 %v2372
        %v2595 = vunpack.c.h.b16 %v2372
        %v2596 = vunpack.c.l.b16 %v2373
        %v2597 = vunpack.c.h.b16 %v2373
        %v2598 = vunpack.c.l.b16 %v2374
        %v2599 = vunpack.c.h.b16 %v2374
        %v2600 = vunpack.c.l.b16 %v2375
        %v2601 = vunpack.c.h.b16 %v2375
        %v2602 = vunpack.c.l.b16 %v2376
        %v2603 = vunpack.c.h.b16 %v2376
        %v2604 = vunpack.c.l.b16 %v2377
        %v2605 = vunpack.c.h.b16 %v2377
        %v2606 = vunpack.c.l.b16 %v2378
        %v2607 = vunpack.c.h.b16 %v2378
        %v2608 = vunpack.c.l.b16 %v2379
        %v2609 = vunpack.c.h.b16 %v2379
        %v2610 = vunpack.c.l.b16 %v2380
        %v2611 = vunpack.c.h.b16 %v2380
        %v2612 = vunpack.c.l.b16 %v2381
        %v2613 = vunpack.c.h.b16 %v2381
        %v2614 = vunpack.c.l.b16 %v2382
        %v2615 = vunpack.c.h.b16 %v2382
        %v2616 = vunpack.c.l.b16 %v2383
        %v2617 = vunpack.c.h.b16 %v2383
        %v2618 = vunpack.c.l.b16 %v2384
        %v2619 = vunpack.c.h.b16 %v2384
        %v2620 = vunpack.c.l.b16 %v2385
        %v2621 = vunpack.c.h.b16 %v2385
        %v2622 = vunpack.c.l.b16 %v2386
        %v2623 = vunpack.c.h.b16 %v2386
        %v2624 = vunpack.c.l.b16 %v2387
        %v2625 = vunpack.c.h.b16 %v2387
        %v2626 = vunpack.c.l.b16 %v2388
        %v2627 = vunpack.c.h.b16 %v2388
        %v2628 = vunpack.c.l.b16 %v2389
        %v2629 = vunpack.c.h.b16 %v2389
        %v2630 = vunpack.c.l.b16 %v2390
        %v2631 = vunpack.c.h.b16 %v2390
        %v2632 = vunpack.c.l.b16 %v2391
        %v2633 = vunpack.c.h.b16 %v2391
        %v2634 = vunpack.c.l.b16 %v2392
        %v2635 = vunpack.c.h.b16 %v2392
        %v2636 = vunpack.c.l.b16 %v2393
        %v2637 = vunpack.c.h.b16 %v2393
        %v2638 = vunpack.c.l.b16 %v2394
        %v2639 = vunpack.c.h.b16 %v2394
        %v2640 = vunpack.c.l.b16 %v2395
        %v2641 = vunpack.c.h.b16 %v2395
        %v2642 = vpack.c.b16 %v2518, %v2514
        %v2643 = vpack.c.b16 %v2519, %v2515
        %v2644 = vpack.c.b16 %v2520, %v2516
        %v2645 = vpack.c.b16 %v2521, %v2517
        %v2646 = vpack.c.b16 %v2526, %v2522
        %v2647 = vpack.c.b16 %v2527, %v2523
        %v2648 = vpack.c.b16 %v2528, %v2524
        %v2649 = vpack.c.b16 %v2529, %v2525
        %v2650 = vpack.c.b16 %v2534, %v2530
        %v2651 = vpack.c.b16 %v2535, %v2531
        %v2652 = vpack.c.b16 %v2536, %v2532
        %v2653 = vpack.c.b16 %v2537, %v2533
        %v2654 = vpack.c.b16 %v2542, %v2538
        %v2655 = vpack.c.b16 %v2543, %v2539
        %v2656 = vpack.c.b16 %v2544, %v2540
        %v2657 = vpack.c.b16 %v2545, %v2541
        %v2658 = vpack.c.b16 %v2550, %v2546
        %v2659 = vpack.c.b16 %v2551, %v2547
        %v2660 = vpack.c.b16 %v2552, %v2548
        %v2661 = vpack.c.b16 %v2553, %v2549
        %v2662 = vpack.c.b16 %v2558, %v2554
        %v2663 = vpack.c.b16 %v2559, %v2555
        %v2664 = vpack.c.b16 %v2560, %v2556
        %v2665 = vpack.c.b16 %v2561, %v2557
        %v2666 = vpack.c.b16 %v2566, %v2562
        %v2667 = vpack.c.b16 %v2567, %v2563
        %v2668 = vpack.c.b16 %v2568, %v2564
        %v2669 = vpack.c.b16 %v2569, %v2565
        %v2670 = vpack.c.b16 %v2574, %v2570
        %v2671 = vpack.c.b16 %v2575, %v2571
        %v2672 = vpack.c.b16 %v2576, %v2572
        %v2673 = vpack.c.b16 %v2577, %v2573
        %v2674 = vpack.c.b16 %v2582, %v2578
        %v2675 = vpack.c.b16 %v2583, %v2579
        %v2676 = vpack.c.b16 %v2584, %v2580
        %v2677 = vpack.c.b16 %v2585, %v2581
        %v2678 = vpack.c.b16 %v2590, %v2586
        %v2679 = vpack.c.b16 %v2591, %v2587
        %v2680 = vpack.c.b16 %v2592, %v2588
        %v2681 = vpack.c.b16 %v2593, %v2589
        %v2682 = vpack.c.b16 %v2598, %v2594
        %v2683 = vpack.c.b16 %v2599, %v2595
        %v2684 = vpack.c.b16 %v2600, %v2596
        %v2685 = vpack.c.b16 %v2601, %v2597
        %v2686 = vpack.c.b16 %v2606, %v2602
        %v2687 = vpack.c.b16 %v2607, %v2603
        %v2688 = vpack.c.b16 %v2608, %v2604
        %v2689 = vpack.c.b16 %v2609, %v2605
        %v2690 = vpack.c.b16 %v2614, %v2610
        %v2691 = vpack.c.b16 %v2615, %v2611
        %v2692 = vpack.c.b16 %v2616, %v2612
        %v2693 = vpack.c.b16 %v2617, %v2613
        %v2694 = vpack.c.b16 %v2622, %v2618
        %v2695 = vpack.c.b16 %v2623, %v2619
        %v2696 = vpack.c.b16 %v2624, %v2620
        %v2697 = vpack.c.b16 %v2625, %v2621
        %v2698 = vpack.c.b16 %v2630, %v2626
        %v2699 = vpack.c.b16 %v2631, %v2627
        %v2700 = vpack.c.b16 %v2632, %v2628
        %v2701 = vpack.c.b16 %v2633, %v2629
        %v2702 = vpack.c.b16 %v2638, %v2634
        %v2703 = vpack.c.b16 %v2639, %v2635
        %v2704 = vpack.c.b16 %v2640, %v2636
        %v2705 = vpack.c.b16 %v2641, %v2637
        %2770 = vmatprep.subr.bf16.mxu0 %v2671
        %2771 = vmatpush1.bf16.msra.mxu0 %v2670
        %2772 = vmatprep.subr.bf16.mxu0 %v2667
        %2773 = vmatpush1.bf16.msra.mxu0 %v2666
        %2774 = vmatprep.subr.bf16.mxu0 %v2663
        %2775 = vmatpush1.bf16.msra.mxu0 %v2662
        %2776 = vmatprep.subr.bf16.mxu0 %v2659
        %2777 = vmatpush1.bf16.msra.mxu0 %v2658
        %2778 = vmatprep.subr.bf16.mxu0 %v2655
        %2779 = vmatpush1.bf16.msra.mxu0 %v2654
        %2780 = vmatprep.subr.bf16.mxu0 %v2651
        %2781 = vmatpush1.bf16.msra.mxu0 %v2650
        %2782 = vmatprep.subr.bf16.mxu0 %v2647
        %2783 = vmatpush1.bf16.msra.mxu0 %v2646
        %2784 = vmatprep.subr.bf16.mxu0 %v2643
        %2785 = vmatpush1.bf16.msra.mxu0 %v2642
        %2786 = vmatprep.subr.bf16.mxu0 %v2703
        %2787 = vmatpush2.bf16.msra.mxu0 %v2702
        %2788 = vmatprep.subr.bf16.mxu0 %v2699
        %2789 = vmatpush2.bf16.msra.mxu0 %v2698
        %2790 = vmatprep.subr.bf16.mxu0 %v2695
        %2791 = vmatpush2.bf16.msra.mxu0 %v2694
        %2792 = vmatprep.subr.bf16.mxu0 %v2691
        %2793 = vmatpush2.bf16.msra.mxu0 %v2690
        %2794 = vmatprep.subr.bf16.mxu0 %v2687
        %2795 = vmatpush2.bf16.msra.mxu0 %v2686
        %2796 = vmatprep.subr.bf16.mxu0 %v2683
        %2797 = vmatpush2.bf16.msra.mxu0 %v2682
        %2798 = vmatprep.subr.bf16.mxu0 %v2679
        %2799 = vmatpush2.bf16.msra.mxu0 %v2678
        %2800 = vmatprep.subr.bf16.mxu0 %v2675
        %2801 = vmatpush2.bf16.msra.mxu0 %v2674
        %2802 = vmatprep.mubr.bf16.mxu0 %v2419
        %2803 = vmatmul.mubr.bf16.gmra.mxu0 %v2418
        %v2804 = vpop.f32.mrf.mxu0
        %v2805 = vadd.f32 %v2401, %v2804
        %v2806 = vpop.f32.mrf.mxu0
        %v2807 = vadd.f32 %v2405, %v2806
        %v2808 = vpop.f32.mrf.mxu0
        %v2809 = vadd.f32 %v2401, %v2808
        %v2810 = vpop.f32.mrf.mxu0
        %v2811 = vadd.f32 %v2405, %v2810
        %2812 = vmatprep.mubr.bf16.mxu0 %v2421
        %2813 = vmatmul.mubr.bf16.gmra.mxu0 %v2420
        %v2814 = vpop.f32.mrf.mxu0
        %v2815 = vadd.f32 %v2401, %v2814
        %v2816 = vpop.f32.mrf.mxu0
        %v2817 = vadd.f32 %v2405, %v2816
        %v2818 = vpop.f32.mrf.mxu0
        %v2819 = vadd.f32 %v2401, %v2818
        %v2820 = vpop.f32.mrf.mxu0
        %v2821 = vadd.f32 %v2405, %v2820
        %2822 = vmatprep.mubr.bf16.mxu0 %v2423
        %2823 = vmatmul.mubr.bf16.gmra.mxu0 %v2422
        %v2824 = vpop.f32.mrf.mxu0
        %v2825 = vadd.f32 %v2401, %v2824
        %v2826 = vpop.f32.mrf.mxu0
        %v2827 = vadd.f32 %v2405, %v2826
        %v2828 = vpop.f32.mrf.mxu0
        %v2829 = vadd.f32 %v2401, %v2828
        %v2830 = vpop.f32.mrf.mxu0
        %v2831 = vadd.f32 %v2405, %v2830
        %2832 = vmatprep.mubr.bf16.mxu0 %v2425
        %2833 = vmatmul.mubr.bf16.gmra.mxu0 %v2424
        %v2834 = vpop.f32.mrf.mxu0
        %v2835 = vadd.f32 %v2401, %v2834
        %v2836 = vpop.f32.mrf.mxu0
        %v2837 = vadd.f32 %v2405, %v2836
        %v2838 = vpop.f32.mrf.mxu0
        %v2839 = vadd.f32 %v2401, %v2838
        %v2840 = vpop.f32.mrf.mxu0
        %v2841 = vadd.f32 %v2405, %v2840
        %2842 = vmatprep.mubr.bf16.mxu0 %v2427
        %2843 = vmatmul.mubr.bf16.gmra.mxu0 %v2426
        %v2844 = vpop.f32.mrf.mxu0
        %v2845 = vadd.f32 %v2401, %v2844
        %v2846 = vpop.f32.mrf.mxu0
        %v2847 = vadd.f32 %v2405, %v2846
        %v2848 = vpop.f32.mrf.mxu0
        %v2849 = vadd.f32 %v2401, %v2848
        %v2850 = vpop.f32.mrf.mxu0
        %v2851 = vadd.f32 %v2405, %v2850
        %2852 = vmatprep.mubr.bf16.mxu0 %v2429
        %2853 = vmatmul.mubr.bf16.gmra.mxu0 %v2428
        %v2854 = vpop.f32.mrf.mxu0
        %v2855 = vadd.f32 %v2401, %v2854
        %v2856 = vpop.f32.mrf.mxu0
        %v2857 = vadd.f32 %v2405, %v2856
        %v2858 = vpop.f32.mrf.mxu0
        %v2859 = vadd.f32 %v2401, %v2858
        %v2860 = vpop.f32.mrf.mxu0
        %v2861 = vadd.f32 %v2405, %v2860
        %2862 = vmatprep.mubr.bf16.mxu0 %v2431
        %2863 = vmatmul.mubr.bf16.gmra.mxu0 %v2430
        %v2864 = vpop.f32.mrf.mxu0
        %v2865 = vadd.f32 %v2401, %v2864
        %v2866 = vpop.f32.mrf.mxu0
        %v2867 = vadd.f32 %v2405, %v2866
        %v2868 = vpop.f32.mrf.mxu0
        %v2869 = vadd.f32 %v2401, %v2868
        %v2870 = vpop.f32.mrf.mxu0
        %v2871 = vadd.f32 %v2405, %v2870
        %2872 = vmatprep.mubr.bf16.mxu0 %v2433
        %2873 = vmatmul.mubr.bf16.gmra.mxu0 %v2432
        %v2874 = vpop.f32.mrf.mxu0
        %v2875 = vadd.f32 %v2401, %v2874
        %v2876 = vpop.f32.mrf.mxu0
        %v2877 = vadd.f32 %v2405, %v2876
        %v2878 = vpop.f32.mrf.mxu0
        %v2879 = vadd.f32 %v2401, %v2878
        %v2880 = vpop.f32.mrf.mxu0
        %v2881 = vadd.f32 %v2405, %v2880
        %2882 = vdwg.mxu0
        %2883 = vmatprep.subr.bf16.mxu0 %v2673
        %2884 = vmatpush1.bf16.msra.mxu0 %v2672
        %2885 = vmatprep.subr.bf16.mxu0 %v2669
        %2886 = vmatpush1.bf16.msra.mxu0 %v2668
        %2887 = vmatprep.subr.bf16.mxu0 %v2665
        %2888 = vmatpush1.bf16.msra.mxu0 %v2664
        %2889 = vmatprep.subr.bf16.mxu0 %v2661
        %2890 = vmatpush1.bf16.msra.mxu0 %v2660
        %2891 = vmatprep.subr.bf16.mxu0 %v2657
        %2892 = vmatpush1.bf16.msra.mxu0 %v2656
        %2893 = vmatprep.subr.bf16.mxu0 %v2653
        %2894 = vmatpush1.bf16.msra.mxu0 %v2652
        %2895 = vmatprep.subr.bf16.mxu0 %v2649
        %2896 = vmatpush1.bf16.msra.mxu0 %v2648
        %2897 = vmatprep.subr.bf16.mxu0 %v2645
        %2898 = vmatpush1.bf16.msra.mxu0 %v2644
        %2899 = vmatprep.subr.bf16.mxu0 %v2705
        %2900 = vmatpush2.bf16.msra.mxu0 %v2704
        %2901 = vmatprep.subr.bf16.mxu0 %v2701
        %2902 = vmatpush2.bf16.msra.mxu0 %v2700
        %2903 = vmatprep.subr.bf16.mxu0 %v2697
        %2904 = vmatpush2.bf16.msra.mxu0 %v2696
        %2905 = vmatprep.subr.bf16.mxu0 %v2693
        %2906 = vmatpush2.bf16.msra.mxu0 %v2692
        %2907 = vmatprep.subr.bf16.mxu0 %v2689
        %2908 = vmatpush2.bf16.msra.mxu0 %v2688
        %2909 = vmatprep.subr.bf16.mxu0 %v2685
        %2910 = vmatpush2.bf16.msra.mxu0 %v2684
        %2911 = vmatprep.subr.bf16.mxu0 %v2681
        %2912 = vmatpush2.bf16.msra.mxu0 %v2680
        %2913 = vmatprep.subr.bf16.mxu0 %v2677
        %2914 = vmatpush2.bf16.msra.mxu0 %v2676
        %2915 = vmatprep.mubr.bf16.mxu0 %v2419
        %2916 = vmatmul.mubr.bf16.gmra.mxu0 %v2418
        %v2917 = vpop.f32.mrf.mxu0
        %v2918 = vadd.f32 %v2409, %v2917
        %v2919 = vpop.f32.mrf.mxu0
        %v2920 = vadd.f32 %v2413, %v2919
        %v2921 = vpop.f32.mrf.mxu0
        %v2922 = vadd.f32 %v2409, %v2921
        %v2923 = vpop.f32.mrf.mxu0
        %v2924 = vadd.f32 %v2413, %v2923
        %2925 = vmatprep.mubr.bf16.mxu0 %v2421
        %2926 = vmatmul.mubr.bf16.gmra.mxu0 %v2420
        %v2927 = vpop.f32.mrf.mxu0
        %v2928 = vadd.f32 %v2409, %v2927
        %v2929 = vpop.f32.mrf.mxu0
        %v2930 = vadd.f32 %v2413, %v2929
        %v2931 = vpop.f32.mrf.mxu0
        %v2932 = vadd.f32 %v2409, %v2931
        %v2933 = vpop.f32.mrf.mxu0
        %v2934 = vadd.f32 %v2413, %v2933
        %2935 = vmatprep.mubr.bf16.mxu0 %v2423
        %2936 = vmatmul.mubr.bf16.gmra.mxu0 %v2422
        %v2937 = vpop.f32.mrf.mxu0
        %v2938 = vadd.f32 %v2409, %v2937
        %v2939 = vpop.f32.mrf.mxu0
        %v2940 = vadd.f32 %v2413, %v2939
        %v2941 = vpop.f32.mrf.mxu0
        %v2942 = vadd.f32 %v2409, %v2941
        %v2943 = vpop.f32.mrf.mxu0
        %v2944 = vadd.f32 %v2413, %v2943
        %2945 = vmatprep.mubr.bf16.mxu0 %v2425
        %2946 = vmatmul.mubr.bf16.gmra.mxu0 %v2424
        %v2947 = vpop.f32.mrf.mxu0
        %v2948 = vadd.f32 %v2409, %v2947
        %v2949 = vpop.f32.mrf.mxu0
        %v2950 = vadd.f32 %v2413, %v2949
        %v2951 = vpop.f32.mrf.mxu0
        %v2952 = vadd.f32 %v2409, %v2951
        %v2953 = vpop.f32.mrf.mxu0
        %v2954 = vadd.f32 %v2413, %v2953
        %2955 = vmatprep.mubr.bf16.mxu0 %v2427
        %2956 = vmatmul.mubr.bf16.gmra.mxu0 %v2426
        %v2957 = vpop.f32.mrf.mxu0
        %v2958 = vadd.f32 %v2409, %v2957
        %v2959 = vpop.f32.mrf.mxu0
        %v2960 = vadd.f32 %v2413, %v2959
        %v2961 = vpop.f32.mrf.mxu0
        %v2962 = vadd.f32 %v2409, %v2961
        %v2963 = vpop.f32.mrf.mxu0
        %v2964 = vadd.f32 %v2413, %v2963
        %2965 = vmatprep.mubr.bf16.mxu0 %v2429
        %2966 = vmatmul.mubr.bf16.gmra.mxu0 %v2428
        %v2967 = vpop.f32.mrf.mxu0
        %v2968 = vadd.f32 %v2409, %v2967
        %v2969 = vpop.f32.mrf.mxu0
        %v2970 = vadd.f32 %v2413, %v2969
        %v2971 = vpop.f32.mrf.mxu0
        %v2972 = vadd.f32 %v2409, %v2971
        %v2973 = vpop.f32.mrf.mxu0
        %v2974 = vadd.f32 %v2413, %v2973
        %2975 = vmatprep.mubr.bf16.mxu0 %v2431
        %2976 = vmatmul.mubr.bf16.gmra.mxu0 %v2430
        %v2977 = vpop.f32.mrf.mxu0
        %v2978 = vadd.f32 %v2409, %v2977
        %v2979 = vpop.f32.mrf.mxu0
        %v2980 = vadd.f32 %v2413, %v2979
        %v2981 = vpop.f32.mrf.mxu0
        %v2982 = vadd.f32 %v2409, %v2981
        %v2983 = vpop.f32.mrf.mxu0
        %v2984 = vadd.f32 %v2413, %v2983
        %2985 = vmatprep.mubr.bf16.mxu0 %v2433
        %2986 = vmatmul.mubr.bf16.gmra.mxu0 %v2432
        %v2987 = vpop.f32.mrf.mxu0
        %v2988 = vadd.f32 %v2409, %v2987
        %v2989 = vpop.f32.mrf.mxu0
        %v2990 = vadd.f32 %v2413, %v2989
        %v2991 = vpop.f32.mrf.mxu0
        %v2992 = vadd.f32 %v2409, %v2991
        %v2993 = vpop.f32.mrf.mxu0
        %v2994 = vadd.f32 %v2413, %v2993
        %2995 = vdwg.mxu0
        %v2996 = vadd.f32 %v2268, %v2805
        %v2997 = vadd.f32 %v2269, %v2807
        %v2998 = vadd.f32 %v2270, %v2918
        %v2999 = vadd.f32 %v2271, %v2920
        %v3000 = vadd.f32 %v2272, %v2809
        %v3001 = vadd.f32 %v2273, %v2811
        %v3002 = vadd.f32 %v2274, %v2922
        %v3003 = vadd.f32 %v2275, %v2924
        %v3004 = vadd.f32 %v2276, %v2815
        %v3005 = vadd.f32 %v2277, %v2817
        %v3006 = vadd.f32 %v2278, %v2928
        %v3007 = vadd.f32 %v2279, %v2930
        %v3008 = vadd.f32 %v2280, %v2819
        %v3009 = vadd.f32 %v2281, %v2821
        %v3010 = vadd.f32 %v2282, %v2932
        %v3011 = vadd.f32 %v2283, %v2934
        %v3012 = vadd.f32 %v2284, %v2825
        %v3013 = vadd.f32 %v2285, %v2827
        %v3014 = vadd.f32 %v2286, %v2938
        %v3015 = vadd.f32 %v2287, %v2940
        %v3016 = vadd.f32 %v2288, %v2829
        %v3017 = vadd.f32 %v2289, %v2831
        %v3018 = vadd.f32 %v2290, %v2942
        %v3019 = vadd.f32 %v2291, %v2944
        %v3020 = vadd.f32 %v2292, %v2835
        %v3021 = vadd.f32 %v2293, %v2837
        %v3022 = vadd.f32 %v2294, %v2948
        %v3023 = vadd.f32 %v2295, %v2950
        %v3024 = vadd.f32 %v2296, %v2839
        %v3025 = vadd.f32 %v2297, %v2841
        %v3026 = vadd.f32 %v2298, %v2952
        %v3027 = vadd.f32 %v2299, %v2954
        %v3028 = vadd.f32 %v2300, %v2845
        %v3029 = vadd.f32 %v2301, %v2847
        %v3030 = vadd.f32 %v2302, %v2958
        %v3031 = vadd.f32 %v2303, %v2960
        %v3032 = vadd.f32 %v2304, %v2849
        %v3033 = vadd.f32 %v2305, %v2851
        %v3034 = vadd.f32 %v2306, %v2962
        %v3035 = vadd.f32 %v2307, %v2964
        %v3036 = vadd.f32 %v2308, %v2855
        %v3037 = vadd.f32 %v2309, %v2857
        %v3038 = vadd.f32 %v2310, %v2968
        %v3039 = vadd.f32 %v2311, %v2970
        %v3040 = vadd.f32 %v2312, %v2859
        %v3041 = vadd.f32 %v2313, %v2861
        %v3042 = vadd.f32 %v2314, %v2972
        %v3043 = vadd.f32 %v2315, %v2974
        %v3044 = vadd.f32 %v2316, %v2865
        %v3045 = vadd.f32 %v2317, %v2867
        %v3046 = vadd.f32 %v2318, %v2978
        %v3047 = vadd.f32 %v2319, %v2980
        %v3048 = vadd.f32 %v2320, %v2869
        %v3049 = vadd.f32 %v2321, %v2871
        %v3050 = vadd.f32 %v2322, %v2982
        %v3051 = vadd.f32 %v2323, %v2984
        %v3052 = vadd.f32 %v2324, %v2875
        %v3053 = vadd.f32 %v2325, %v2877
        %v3054 = vadd.f32 %v2326, %v2988
        %v3055 = vadd.f32 %v2327, %v2990
        %v3056 = vadd.f32 %v2328, %v2879
        %v3057 = vadd.f32 %v2329, %v2881
        %v3058 = vadd.f32 %v2330, %v2992
        %v3059 = vadd.f32 %v2331, %v2994
        %3060 = vst [vmem:[%s421] sm:$0xff] %v2996
        %3061 = vst [vmem:[%s421 + $0x8] sm:$0xff] %v2997
        %3062 = vst [vmem:[%s421 + $0x10] sm:$0xff] %v2998
        %3063 = vst [vmem:[%s421 + $0x18] sm:$0xff] %v2999
        %3064 = vst [vmem:[%s421 + $0x20] sm:$0xff] %v3000
        %3065 = vst [vmem:[%s421 + $0x28] sm:$0xff] %v3001
        %3066 = vst [vmem:[%s421 + $0x30] sm:$0xff] %v3002
        %3067 = vst [vmem:[%s421 + $0x38] sm:$0xff] %v3003
        %3068 = vst [vmem:[%s421 + $0x40] sm:$0xff] %v3004
        %3069 = vst [vmem:[%s421 + $0x48] sm:$0xff] %v3005
        %3070 = vst [vmem:[%s421 + $0x50] sm:$0xff] %v3006
        %3071 = vst [vmem:[%s421 + $0x58] sm:$0xff] %v3007
        %3072 = vst [vmem:[%s421 + $0x60] sm:$0xff] %v3008
        %3073 = vst [vmem:[%s421 + $0x68] sm:$0xff] %v3009
        %3074 = vst [vmem:[%s421 + $0x70] sm:$0xff] %v3010
        %3075 = vst [vmem:[%s421 + $0x78] sm:$0xff] %v3011
        %3076 = vst [vmem:[%s421 + $0x80] sm:$0xff] %v3012
        %3077 = vst [vmem:[%s421 + $0x88] sm:$0xff] %v3013
        %3078 = vst [vmem:[%s421 + $0x90] sm:$0xff] %v3014
        %3079 = vst [vmem:[%s421 + $0x98] sm:$0xff] %v3015
        %3080 = vst [vmem:[%s421 + $0xa0] sm:$0xff] %v3016
        %3081 = vst [vmem:[%s421 + $0xa8] sm:$0xff] %v3017
        %3082 = vst [vmem:[%s421 + $0xb0] sm:$0xff] %v3018
        %3083 = vst [vmem:[%s421 + $0xb8] sm:$0xff] %v3019
        %3084 = vst [vmem:[%s421 + $0xc0] sm:$0xff] %v3020
        %3085 = vst [vmem:[%s421 + $0xc8] sm:$0xff] %v3021
        %3086 = vst [vmem:[%s421 + $0xd0] sm:$0xff] %v3022
        %3087 = vst [vmem:[%s421 + $0xd8] sm:$0xff] %v3023
        %3088 = vst [vmem:[%s421 + $0xe0] sm:$0xff] %v3024
        %3089 = vst [vmem:[%s421 + $0xe8] sm:$0xff] %v3025
        %3090 = vst [vmem:[%s421 + $0xf0] sm:$0xff] %v3026
        %3091 = vst [vmem:[%s421 + $0xf8] sm:$0xff] %v3027
        %3092 = vst [vmem:[%s421 + $0x100] sm:$0xff] %v3028
        %3093 = vst [vmem:[%s421 + $0x108] sm:$0xff] %v3029
        %3094 = vst [vmem:[%s421 + $0x110] sm:$0xff] %v3030
        %3095 = vst [vmem:[%s421 + $0x118] sm:$0xff] %v3031
        %3096 = vst [vmem:[%s421 + $0x120] sm:$0xff] %v3032
        %3097 = vst [vmem:[%s421 + $0x128] sm:$0xff] %v3033
        %3098 = vst [vmem:[%s421 + $0x130] sm:$0xff] %v3034
        %3099 = vst [vmem:[%s421 + $0x138] sm:$0xff] %v3035
        %3100 = vst [vmem:[%s421 + $0x140] sm:$0xff] %v3036
        %3101 = vst [vmem:[%s421 + $0x148] sm:$0xff] %v3037
        %3102 = vst [vmem:[%s421 + $0x150] sm:$0xff] %v3038
        %3103 = vst [vmem:[%s421 + $0x158] sm:$0xff] %v3039
        %3104 = vst [vmem:[%s421 + $0x160] sm:$0xff] %v3040
        %3105 = vst [vmem:[%s421 + $0x168] sm:$0xff] %v3041
        %3106 = vst [vmem:[%s421 + $0x170] sm:$0xff] %v3042
        %3107 = vst [vmem:[%s421 + $0x178] sm:$0xff] %v3043
        %3108 = vst [vmem:[%s421 + $0x180] sm:$0xff] %v3044
        %3109 = vst [vmem:[%s421 + $0x188] sm:$0xff] %v3045
        %3110 = vst [vmem:[%s421 + $0x190] sm:$0xff] %v3046
        %3111 = vst [vmem:[%s421 + $0x198] sm:$0xff] %v3047
        %3112 = vst [vmem:[%s421 + $0x1a0] sm:$0xff] %v3048
        %3113 = vst [vmem:[%s421 + $0x1a8] sm:$0xff] %v3049
        %3114 = vst [vmem:[%s421 + $0x1b0] sm:$0xff] %v3050
        %3115 = vst [vmem:[%s421 + $0x1b8] sm:$0xff] %v3051
        %3116 = vst [vmem:[%s421 + $0x1c0] sm:$0xff] %v3052
        %3117 = vst [vmem:[%s421 + $0x1c8] sm:$0xff] %v3053
        %3118 = vst [vmem:[%s421 + $0x1d0] sm:$0xff] %v3054
        %3119 = vst [vmem:[%s421 + $0x1d8] sm:$0xff] %v3055
        %3120 = vst [vmem:[%s421 + $0x1e0] sm:$0xff] %v3056
        %3121 = vst [vmem:[%s421 + $0x1e8] sm:$0xff] %v3057
        %3122 = vst [vmem:[%s421 + $0x1f0] sm:$0xff] %v3058
        %3123 = vst [vmem:[%s421 + $0x1f8] sm:$0xff] %v3059
        %s3124 = sand.u32 %s231, 1
        %s3125 = scalar_lea.sflag [#allocation5], %s3124
        %s3126 = sand.u32 %s231, 1
        %s3127 = smul.addr %s3126, 512
        %s3128 = scalar_lea.vmem [#allocation14], %s3127
        // Predicated region
        $region81: #{tpu_custom_call.1} parent=55 // pred_check
          %p3129 = pneg %p241
        $region82: #{tpu_custom_call.1} parent=55 // pred_check_branch
          %3131 = sbr.rel (%p3129) target = $region84
        $region83: #{tpu_custom_call.1} parent=55 // pred_region
          %s3133 = ssub.s32 8192, 8192
          %3134 = vsyncadd %s3125, %s3133
          %s3135 = smul.addr %s29, 4
          %s3136 = smul.addr %s3135, 128
          %s3137 = scalar_lea.hbm %s9, %s3136
          %s3138 = sshll.u32 %s3128, 4
          %s3139 = int_to_ptr.vmem [resolvable:$true] %s3138
          %3144 = dma.vmem_to_hbm [thread:$0]  %s3139, 8192, %s3137, %s3125, 512, 1024, 32
        $region84: #{tpu_custom_call.1} parent=55 // pred_fallthru
          _
      $region56: #{tpu_custom_call.1} parent=5 // pred_fallthru
        _
      %p3145 = scmp.le.s32.totalorder 2, %s24
      // Predicated region
      $region85: #{tpu_custom_call.1} parent=5 // pred_check
        %p3146 = pneg %p3145
      $region86: #{tpu_custom_call.1} parent=5 // pred_check_branch
        %3148 = sbr.rel (%p3146) target = $region88
      $region87: #{tpu_custom_call.1} parent=5 // pred_region
        %s3149 = ssub.s32 %s24, 2
        // Predicated region
        $region89: #{tpu_custom_call.1} parent=87 // pred_check
          %p3150 = pneg %p247
        $region90: #{tpu_custom_call.1} parent=87 // pred_check_branch
          %3152 = sbr.rel (%p3150) target = $region92
        $region91: #{tpu_custom_call.1} parent=87 // pred_region
          %s3153 = sand.u32 %s232, 1
          %s3154 = scalar_lea.sflag [#allocation5], %s3153
          %s3155 = sand.u32 %s232, 1
          %s3156 = smul.addr %s3155, 512
          %s3157 = scalar_lea.vmem [#allocation14], %s3156
          %3158 = dma.done %s3154, 8192
        $region92: #{tpu_custom_call.1} parent=87 // pred_fallthru
          _
      $region88: #{tpu_custom_call.1} parent=5 // pred_fallthru
        _
    $region6: #{tpu_custom_call.1} parent=1 // loop_footer
      %s28 = sadd.s32 1, %s24
    $region7: #{tpu_custom_call.1} parent=1 // loop_footer_branch
      %23 = sbr.rel target = $region3
    $region8: #{tpu_custom_call.1} parent=1 // loop_exit
      _
    %3159 = vsyncpa [#allocation4], 1
    %s3160 = scalar_lea.sflag [#allocation4], 1
    %3161 = vsyncpa %s3160, 1
    %3162 = vsyncpa [#allocation7], 1
    %3163 = vsyncpa [#allocation10], 1
    %3164 = vsyncpa [#allocation13], 1
    %3165 = vsyncpa [#allocation5], 1
    %s3166 = scalar_lea.sflag [#allocation5], 1
    %3167 = vsyncpa %s3166, 1

</llo_original>
